<compile_context>
chip_gen: v7x
topology: tpu7x:2x2x1
jax: 0.10.0
libtpu: 0.0.40
codegen_flags: <defaults>
</compile_context>

<pallas_src>
import jax
import jax.numpy as jnp
from jax import lax
from jax.experimental import pallas as pl
from jax.experimental.pallas import tpu as pltpu


def feature_enc_dec_kernel(rep_hbm, w_enc_hbm, w_dec_hbm, wo_hbm,
                           b_e_ref, b_d_ref, bo_ref,
                           out_ref,
                           w_dec_ref, wo_ref, oh_ref):
    """One grid step = one chunk of Tc decoder time steps.

    rep_hbm   : (S, Bp, Fp) f32, HBM (ANY)  — gathered features, encoder only
    w_enc_hbm : (Fp+Hp, Hp) bf16, HBM (ANY) — fused encoder [W_ih; W_hh]
    w_dec_hbm : (Vp+Hp, Hp) bf16, HBM (ANY) — fused decoder [W_ih; W_hh]
    wo_hbm    : (Hp, Vp)    bf16, HBM (ANY) — R2o weight
    b_e/b_d   : (1, Hp) f32 — pre-added (b_ih + b_hh) biases
    bo        : (1, Vp) f32 — R2o bias, pad lanes = -1e30 (exp underflows to 0)
    out_ref   : (Tc, Bp, Vp) f32 — this chunk's softmax outputs
    w_dec_ref / wo_ref : persistent VMEM scratch (single-buffered weights)
    oh_ref    : (Bp, Vp+Hp) f32 persistent scratch — decoder state [o | h]
    """
    Tc, Bp, Vp = out_ref.shape
    Hp = b_d_ref.shape[1]
    S, _, Fp = rep_hbm.shape

    # ---- chunk 0: stage constant weights once, run encoder, init state ------
    @pl.when(pl.program_id(0) == 0)
    def _init():
        pltpu.sync_copy(w_dec_hbm, w_dec_ref)
        pltpu.sync_copy(wo_hbm, wo_ref)

        def encoder(rep_buf, w_enc_ref, xh_ref):
            # encoder-only VMEM, released when this scope ends
            pltpu.sync_copy(rep_hbm, rep_buf)
            pltpu.sync_copy(w_enc_hbm, w_enc_ref)
            xh_ref[...] = jnp.zeros_like(xh_ref)           # [x | h], h0 = 0
            b_e = jnp.broadcast_to(b_e_ref[...], (Bp, Hp))  # hoisted broadcast

            def enc_step(t, carry):
                xh_ref[:, :Fp] = rep_buf[t]                 # (Bp, Fp)
                h = jnp.tanh(
                    jnp.dot(xh_ref[...].astype(jnp.bfloat16), w_enc_ref[...],
                            preferred_element_type=jnp.float32) + b_e)
                xh_ref[:, Fp:] = h
                return carry

            lax.fori_loop(0, S, enc_step, 0,
                          unroll=True if S <= 16 else 8)

            # decoder state: o = 0, h = encoder final hidden
            oh_ref[:, :Vp] = jnp.zeros((Bp, Vp), jnp.float32)
            oh_ref[:, Vp:] = xh_ref[:, Fp:]

        pl.run_scoped(encoder,
                      pltpu.VMEM((S, Bp, Fp), jnp.float32),
                      pltpu.VMEM((Fp + Hp, Hp), jnp.bfloat16),
                      pltpu.VMEM((Bp, Fp + Hp), jnp.float32))

    # ---- decoder: Tc free-running RNNCell -> Linear -> softmax steps --------
    b_d = jnp.broadcast_to(b_d_ref[...], (Bp, Hp))          # 1 vreg, hoisted
    bo = jnp.broadcast_to(bo_ref[...], (Bp, Vp))            # hoisted

    def dec_step(t, carry):
        oh = oh_ref[...].astype(jnp.bfloat16)                # [o | h]
        h = jnp.tanh(jnp.dot(oh, w_dec_ref[...],             # ONE fused matmul
                             preferred_element_type=jnp.float32) + b_d)
        logits = jnp.dot(h.astype(jnp.bfloat16), wo_ref[...],
                         preferred_element_type=jnp.float32) + bo
        m = jnp.max(logits, axis=-1, keepdims=True)
        e = jnp.exp(logits - m)
        p = e * pl.reciprocal(jnp.sum(e, axis=-1, keepdims=True), approx=True)
        oh_ref[:, :Vp] = p                                    # feed back
        oh_ref[:, Vp:] = h
        out_ref[t] = p.astype(out_ref.dtype)                  # lane-dense store
        return carry

    lax.fori_loop(0, Tc, dec_step, 0, unroll=8 if Tc >= 8 else True)


def feature_encoder_decoder_forward(batch_ids, features,
                                    wih_e, whh_e, bih_e, bhh_e,
                                    wih_d, whh_d, bih_d, bhh_d,
                                    wo, bo, *, t_chunk=128):
    """Forward of Feature_encoder_decoder (num_layers == 1).

    batch_ids: (B, S) int32 token ids.  features: (V, F) float32 feature table.
    Weights are stored (in_dim, out_dim), i.e. transposed vs. the PyTorch
    parameters.  Returns (B, B*S, V) float32 softmax outputs.
    """
    B, S = batch_ids.shape
    V, F = features.shape
    H = whh_e.shape[0]
    T = B * S

    SUB, LANE = 8, 128
    Bp = -(-B // SUB) * SUB
    Fp = -(-F // LANE) * LANE
    Hp = -(-H // LANE) * LANE
    Vp = -(-V // LANE) * LANE

    Tc = min(int(t_chunk), T)
    nT = -(-T // Tc)
    Tp = nT * Tc                     # extra trailing steps are thrown away

    # glue: feature lookup + time-major transpose + tile padding
    rep = jnp.transpose(features[batch_ids], (1, 0, 2)).astype(jnp.float32)
    rep_p = jnp.zeros((S, Bp, Fp), jnp.float32).at[:, :B, :F].set(rep)

    # fused [input | hidden] weights, cast to bf16 for the MXU
    w_enc = jnp.zeros((Fp + Hp, Hp), jnp.float32)
    w_enc = w_enc.at[:F, :H].set(wih_e).at[Fp:Fp + H, :H].set(whh_e)
    w_dec = jnp.zeros((Vp + Hp, Hp), jnp.float32)
    w_dec = w_dec.at[:V, :H].set(wih_d).at[Vp:Vp + H, :H].set(whh_d)
    wo_p = jnp.zeros((Hp, Vp), jnp.float32).at[:H, :V].set(wo)
    w_enc = w_enc.astype(jnp.bfloat16)
    w_dec = w_dec.astype(jnp.bfloat16)
    wo_p = wo_p.astype(jnp.bfloat16)

    # biases pre-added; padded vocab lanes get -1e30 so softmax ignores them
    b_e = jnp.zeros((1, Hp), jnp.float32).at[0, :H].set(bih_e + bhh_e)
    b_d = jnp.zeros((1, Hp), jnp.float32).at[0, :H].set(bih_d + bhh_d)
    bo_p = jnp.full((1, Vp), -1e30, jnp.float32).at[0, :V].set(bo)

    # explicit VMEM budget (v5e scoped default is 16 MiB, v7x physical 64 MiB)
    est = (2 * Tc * Bp * Vp * 4               # double-buffered output chunk
           + S * Bp * Fp * 4                  # scoped encoder features
           + (Fp + Hp) * Hp * 2               # scoped encoder weight
           + Bp * (Fp + Hp) * 4               # scoped encoder [x|h]
           + (Vp + Hp) * Hp * 2               # resident decoder weight
           + Hp * Vp * 2                      # resident R2o weight
           + Bp * (Vp + Hp) * 4               # resident decoder [o|h]
           + 4 * (2 * Hp + Vp) * 4)           # double-buffered biases
    vmem_limit = int(min(48 << 20, max(16 << 20, 2 * est)))

    out_p = pl.pallas_call(
        feature_enc_dec_kernel,
        out_shape=jax.ShapeDtypeStruct((Tp, Bp, Vp), jnp.float32),
        grid=(nT,),
        in_specs=[
            pl.BlockSpec(memory_space=pl.ANY),            # rep (HBM, copied once)
            pl.BlockSpec(memory_space=pl.ANY),            # encoder fused weight
            pl.BlockSpec(memory_space=pl.ANY),            # decoder fused weight
            pl.BlockSpec(memory_space=pl.ANY),            # R2o weight
            pl.BlockSpec((1, Hp), lambda i: (0, 0)),      # encoder bias
            pl.BlockSpec((1, Hp), lambda i: (0, 0)),      # decoder bias
            pl.BlockSpec((1, Vp), lambda i: (0, 0)),      # R2o bias (+ pad mask)
        ],
        out_specs=pl.BlockSpec((Tc, Bp, Vp), lambda i: (i, 0, 0)),
        scratch_shapes=[
            pltpu.VMEM((Vp + Hp, Hp), jnp.bfloat16),      # decoder weight (1-buf)
            pltpu.VMEM((Hp, Vp), jnp.bfloat16),           # R2o weight (1-buf)
            pltpu.VMEM((Bp, Vp + Hp), jnp.float32),       # decoder state [o | h]
        ],
        compiler_params=pltpu.CompilerParams(
            dimension_semantics=("arbitrary",),           # chunks are sequential
            vmem_limit_bytes=vmem_limit),
    )(rep_p, w_enc, w_dec, wo_p, b_e, b_d, bo_p)

    return jnp.transpose(out_p[:T, :B, :V], (1, 0, 2))       # (B, T, V)


def reference_forward(batch_ids, features, wih_e, whh_e, bih_e, bhh_e,
                      wih_d, whh_d, bih_d, bhh_d, wo, bo):
    """Pure-JAX f32 reference matching the PyTorch forward (num_layers == 1)."""
    B, S = batch_ids.shape
    H = whh_e.shape[0]
    V = wo.shape[1]
    rep = features[batch_ids]                                 # (B, S, F)
    h = jnp.zeros((B, H), jnp.float32)
    for t in range(S):
        h = jnp.tanh(rep[:, t] @ wih_e + bih_e + h @ whh_e + bhh_e)
    o = jnp.zeros((B, V), jnp.float32)
    outs = []
    for _ in range(B * S):
        h = jnp.tanh(o @ wih_d + bih_d + h @ whh_d + bhh_d)
        o = jax.nn.softmax(h @ wo + bo, axis=1)
        outs.append(o)
    return jnp.transpose(jnp.stack(outs, axis=0), (1, 0, 2))  # (B, B*S, V)


if __name__ == "__main__":
    # params = {'inv_size': 16, 'd_feats': 20, 'num_layers': 1, 'd_hid': 32, ...}
    B, S = 2, 8
    V, F, H = 16, 20, 32

    key = jax.random.PRNGKey(0)
    ks = jax.random.split(key, 12)
    features = 0.1 * jax.random.normal(ks[0], (V, F), jnp.float32)
    wih_e = 0.1 * jax.random.normal(ks[1], (F, H), jnp.float32)
    whh_e = 0.1 * jax.random.normal(ks[2], (H, H), jnp.float32)
    bih_e = 0.1 * jax.random.normal(ks[3], (H,), jnp.float32)
    bhh_e = 0.1 * jax.random.normal(ks[4], (H,), jnp.float32)
    wih_d = 0.1 * jax.random.normal(ks[5], (V, H), jnp.float32)
    whh_d = 0.1 * jax.random.normal(ks[6], (H, H), jnp.float32)
    bih_d = 0.1 * jax.random.normal(ks[7], (H,), jnp.float32)
    bhh_d = 0.1 * jax.random.normal(ks[8], (H,), jnp.float32)
    wo = 0.1 * jax.random.normal(ks[9], (H, V), jnp.float32)
    bo = 0.1 * jax.random.normal(ks[10], (V,), jnp.float32)
    batch_ids = jax.random.randint(ks[11], (B, S), 0, V, jnp.int32)

    # t_chunk=8 -> grid=(2,), exercising the chunked-output / persistent-state path
    probs = feature_encoder_decoder_forward(
        batch_ids, features, wih_e, whh_e, bih_e, bhh_e,
        wih_d, whh_d, bih_d, bhh_d, wo, bo, t_chunk=8)
    probs = jax.block_until_ready(probs)

    ref = reference_forward(batch_ids, features, wih_e, whh_e, bih_e, bhh_e,
                            wih_d, whh_d, bih_d, bhh_d, wo, bo)

    assert probs.shape == (B, B * S, V), probs.shape
    # tolerance covers bf16 MXU weights/operands and the approximate (EUP)
    # reciprocal in the softmax vs. the f32 reference
    assert jnp.allclose(probs, ref, rtol=0, atol=1e-2), \
        float(jnp.max(jnp.abs(probs - ref)))
    assert jnp.allclose(jnp.sum(probs, axis=2), 1.0, atol=5e-3)

    print("KERNEL_OK")
</pallas_src>

<mosaic_0001>
module attributes {stable_mosaic.version = 11 : i64} {
  func.func @feature_enc_dec_kernel(%arg0: i32, %arg1: memref<8x8x128xf32, #tpu.memory_space<any>>, %arg2: memref<256x128xbf16, #tpu.memory_space<any>>, %arg3: memref<256x128xbf16, #tpu.memory_space<any>>, %arg4: memref<128x128xbf16, #tpu.memory_space<any>>, %arg5: memref<1x128xf32, #tpu.memory_space<vmem>>, %arg6: memref<1x128xf32, #tpu.memory_space<vmem>>, %arg7: memref<1x128xf32, #tpu.memory_space<vmem>>, %arg8: memref<8x8x128xf32, #tpu.memory_space<vmem>>, %arg9: memref<256x128xbf16, #tpu.memory_space<vmem>>, %arg10: memref<128x128xbf16, #tpu.memory_space<vmem>>, %arg11: memref<8x256xf32, #tpu.memory_space<vmem>>) attributes {dimension_semantics = [#tpu.dimension_semantics<arbitrary>], iteration_bounds = array<i64: 2>, scalar_prefetch = 0 : i64, scratch_operands = 3 : i64, tpu.core_type = #tpu.core_type<tc>, window_params = [{}, {}, {}, {}, {pipeline_mode = #tpu.pipeline_mode<synchronous>, transform_indices = @transform_4, window_bounds = array<i64: 1, 128>}, {pipeline_mode = #tpu.pipeline_mode<synchronous>, transform_indices = @transform_5, window_bounds = array<i64: 1, 128>}, {pipeline_mode = #tpu.pipeline_mode<synchronous>, transform_indices = @transform_6, window_bounds = array<i64: 1, 128>}, {transform_indices = @transform_7, window_bounds = array<i64: 8, 8, 128>}]} {
    %c0_i32 = arith.constant 0 : i32
    %0 = arith.cmpi eq, %arg0, %c0_i32 : i32
    %1 = arith.extui %0 : i1 to i32
    %c0_i32_0 = arith.constant 0 : i32
    %2 = arith.cmpi ne, %1, %c0_i32_0 : i32
    scf.if %2 {
      "tpu.region"() ({
        %217 = tpu.sem_alloc : memref<!tpu.dma_semaphore, #tpu.memory_space<semaphore_mem>>
        tpu.enqueue_dma source(%arg3 : memref<256x128xbf16, #tpu.memory_space<any>>) target(%arg9 : memref<256x128xbf16, #tpu.memory_space<vmem>>) target_semaphore(%217 : memref<!tpu.dma_semaphore, #tpu.memory_space<semaphore_mem>>)
        tpu.wait_dma2 semaphore(%217 : memref<!tpu.dma_semaphore, #tpu.memory_space<semaphore_mem>>) src(%arg3 : memref<256x128xbf16, #tpu.memory_space<any>>) dst(%arg9 : memref<256x128xbf16, #tpu.memory_space<vmem>>)
        tpu.yield
      }) : () -> ()
      "tpu.region"() ({
        %217 = tpu.sem_alloc : memref<!tpu.dma_semaphore, #tpu.memory_space<semaphore_mem>>
        tpu.enqueue_dma source(%arg4 : memref<128x128xbf16, #tpu.memory_space<any>>) target(%arg10 : memref<128x128xbf16, #tpu.memory_space<vmem>>) target_semaphore(%217 : memref<!tpu.dma_semaphore, #tpu.memory_space<semaphore_mem>>)
        tpu.wait_dma2 semaphore(%217 : memref<!tpu.dma_semaphore, #tpu.memory_space<semaphore_mem>>) src(%arg4 : memref<128x128xbf16, #tpu.memory_space<any>>) dst(%arg10 : memref<128x128xbf16, #tpu.memory_space<vmem>>)
        tpu.yield
      }) : () -> ()
      "tpu.region"() ({
        %alloca = memref.alloca() : memref<8x8x128xf32, #tpu.memory_space<vmem>>
        %alloca_131 = memref.alloca() : memref<256x128xbf16, #tpu.memory_space<vmem>>
        %alloca_132 = memref.alloca() : memref<8x256xf32, #tpu.memory_space<vmem>>
        "tpu.region"() ({
          %314 = tpu.sem_alloc : memref<!tpu.dma_semaphore, #tpu.memory_space<semaphore_mem>>
          tpu.enqueue_dma source(%arg1 : memref<8x8x128xf32, #tpu.memory_space<any>>) target(%alloca : memref<8x8x128xf32, #tpu.memory_space<vmem>>) target_semaphore(%314 : memref<!tpu.dma_semaphore, #tpu.memory_space<semaphore_mem>>)
          tpu.wait_dma2 semaphore(%314 : memref<!tpu.dma_semaphore, #tpu.memory_space<semaphore_mem>>) src(%arg1 : memref<8x8x128xf32, #tpu.memory_space<any>>) dst(%alloca : memref<8x8x128xf32, #tpu.memory_space<vmem>>)
          tpu.yield
        }) : () -> ()
        "tpu.region"() ({
          %314 = tpu.sem_alloc : memref<!tpu.dma_semaphore, #tpu.memory_space<semaphore_mem>>
          tpu.enqueue_dma source(%arg2 : memref<256x128xbf16, #tpu.memory_space<any>>) target(%alloca_131 : memref<256x128xbf16, #tpu.memory_space<vmem>>) target_semaphore(%314 : memref<!tpu.dma_semaphore, #tpu.memory_space<semaphore_mem>>)
          tpu.wait_dma2 semaphore(%314 : memref<!tpu.dma_semaphore, #tpu.memory_space<semaphore_mem>>) src(%arg2 : memref<256x128xbf16, #tpu.memory_space<any>>) dst(%alloca_131 : memref<256x128xbf16, #tpu.memory_space<vmem>>)
          tpu.yield
        }) : () -> ()
        %cst_133 = arith.constant 0.000000e+00 : f32
        %217 = vector.broadcast %cst_133 : f32 to vector<8x256xf32>
        %c0_134 = arith.constant 0 : index
        %c0_135 = arith.constant 0 : index
        %218 = vector.load %alloca_132[%c0_134, %c0_135] : memref<8x256xf32, #tpu.memory_space<vmem>>, vector<8x256xf32>
        tpu.vector_store %alloca_132[%c0_134, %c0_135], %217 {strides = array<i32>} : memref<8x256xf32, #tpu.memory_space<vmem>>, vector<8x256xf32>,
        %c0_136 = arith.constant 0 : index
        %c0_137 = arith.constant 0 : index
        %219 = vector.load %arg5[%c0_136, %c0_137] : memref<1x128xf32, #tpu.memory_space<vmem>>, vector<1x128xf32>
        %220 = vector.shape_cast %219 : vector<1x128xf32> to vector<1x128xf32>
        %221 = vector.broadcast %220 : vector<1x128xf32> to vector<8x128xf32>
        %c0_i32_138 = arith.constant 0 : i32
        %c0_i32_139 = arith.constant 0 : i32
        %222 = arith.index_cast %c0_i32_139 : i32 to index
        %c0_140 = arith.constant 0 : index
        %c0_141 = arith.constant 0 : index
        %223 = vector.load %alloca[%222, %c0_140, %c0_141] : memref<8x8x128xf32, #tpu.memory_space<vmem>>, vector<1x8x128xf32>
        %224 = vector.shape_cast %223 : vector<1x8x128xf32> to vector<8x128xf32>
        %c0_142 = arith.constant 0 : index
        %c0_143 = arith.constant 0 : index
        %225 = vector.load %alloca_132[%c0_142, %c0_143] : memref<8x256xf32, #tpu.memory_space<vmem>>, vector<8x128xf32>
        tpu.vector_store %alloca_132[%c0_142, %c0_143], %224 {strides = array<i32>} : memref<8x256xf32, #tpu.memory_space<vmem>>, vector<8x128xf32>,
        %c0_144 = arith.constant 0 : index
        %c0_145 = arith.constant 0 : index
        %226 = vector.load %alloca_132[%c0_144, %c0_145] : memref<8x256xf32, #tpu.memory_space<vmem>>, vector<8x256xf32>
        %227 = arith.truncf %226 : vector<8x256xf32> to vector<8x256xbf16>
        %c0_146 = arith.constant 0 : index
        %c0_147 = arith.constant 0 : index
        %228 = vector.load %alloca_131[%c0_146, %c0_147] : memref<256x128xbf16, #tpu.memory_space<vmem>>, vector<256x128xbf16>
        %cst_148 = arith.constant dense<0.000000e+00> : vector<8x128xf32>
        %229 = tpu.matmul %227, %228, %cst_148 {dimension_numbers = #tpu.dot_dimension_numbers<[1], [0], [0], [1], [0, 0, 1, 1], [], []>} : vector<8x256xbf16>, vector<256x128xbf16>, vector<8x128xf32> -> vector<8x128xf32>
        %230 = arith.addf %229, %221 : vector<8x128xf32>
        %231 = math.tanh %230 : vector<8x128xf32>
        %c0_149 = arith.constant 0 : index
        %c128_150 = arith.constant 128 : index
        %232 = vector.load %alloca_132[%c0_149, %c128_150] : memref<8x256xf32, #tpu.memory_space<vmem>>, vector<8x128xf32>
        tpu.vector_store %alloca_132[%c0_149, %c128_150], %231 {strides = array<i32>} : memref<8x256xf32, #tpu.memory_space<vmem>>, vector<8x128xf32>,
        %c1_i32_151 = arith.constant 1 : i32
        %233 = arith.index_cast %c1_i32_151 : i32 to index
        %c0_152 = arith.constant 0 : index
        %c0_153 = arith.constant 0 : index
        %234 = vector.load %alloca[%233, %c0_152, %c0_153] : memref<8x8x128xf32, #tpu.memory_space<vmem>>, vector<1x8x128xf32>
        %235 = vector.shape_cast %234 : vector<1x8x128xf32> to vector<8x128xf32>
        %c0_154 = arith.constant 0 : index
        %c0_155 = arith.constant 0 : index
        %236 = vector.load %alloca_132[%c0_154, %c0_155] : memref<8x256xf32, #tpu.memory_space<vmem>>, vector<8x128xf32>
        tpu.vector_store %alloca_132[%c0_154, %c0_155], %235 {strides = array<i32>} : memref<8x256xf32, #tpu.memory_space<vmem>>, vector<8x128xf32>,
        %c0_156 = arith.constant 0 : index
        %c0_157 = arith.constant 0 : index
        %237 = vector.load %alloca_132[%c0_156, %c0_157] : memref<8x256xf32, #tpu.memory_space<vmem>>, vector<8x256xf32>
        %238 = arith.truncf %237 : vector<8x256xf32> to vector<8x256xbf16>
        %c0_158 = arith.constant 0 : index
        %c0_159 = arith.constant 0 : index
        %239 = vector.load %alloca_131[%c0_158, %c0_159] : memref<256x128xbf16, #tpu.memory_space<vmem>>, vector<256x128xbf16>
        %cst_160 = arith.constant dense<0.000000e+00> : vector<8x128xf32>
        %240 = tpu.matmul %238, %239, %cst_160 {dimension_numbers = #tpu.dot_dimension_numbers<[1], [0], [0], [1], [0, 0, 1, 1], [], []>} : vector<8x256xbf16>, vector<256x128xbf16>, vector<8x128xf32> -> vector<8x128xf32>
        %241 = arith.addf %240, %221 : vector<8x128xf32>
        %242 = math.tanh %241 : vector<8x128xf32>
        %c0_161 = arith.constant 0 : index
        %c128_162 = arith.constant 128 : index
        %243 = vector.load %alloca_132[%c0_161, %c128_162] : memref<8x256xf32, #tpu.memory_space<vmem>>, vector<8x128xf32>
        tpu.vector_store %alloca_132[%c0_161, %c128_162], %242 {strides = array<i32>} : memref<8x256xf32, #tpu.memory_space<vmem>>, vector<8x128xf32>,
        %c2_i32_163 = arith.constant 2 : i32
        %244 = arith.index_cast %c2_i32_163 : i32 to index
        %c0_164 = arith.constant 0 : index
        %c0_165 = arith.constant 0 : index
        %245 = vector.load %alloca[%244, %c0_164, %c0_165] : memref<8x8x128xf32, #tpu.memory_space<vmem>>, vector<1x8x128xf32>
        %246 = vector.shape_cast %245 : vector<1x8x128xf32> to vector<8x128xf32>
        %c0_166 = arith.constant 0 : index
        %c0_167 = arith.constant 0 : index
        %247 = vector.load %alloca_132[%c0_166, %c0_167] : memref<8x256xf32, #tpu.memory_space<vmem>>, vector<8x128xf32>
        tpu.vector_store %alloca_132[%c0_166, %c0_167], %246 {strides = array<i32>} : memref<8x256xf32, #tpu.memory_space<vmem>>, vector<8x128xf32>,
        %c0_168 = arith.constant 0 : index
        %c0_169 = arith.constant 0 : index
        %248 = vector.load %alloca_132[%c0_168, %c0_169] : memref<8x256xf32, #tpu.memory_space<vmem>>, vector<8x256xf32>
        %249 = arith.truncf %248 : vector<8x256xf32> to vector<8x256xbf16>
        %c0_170 = arith.constant 0 : index
        %c0_171 = arith.constant 0 : index
        %250 = vector.load %alloca_131[%c0_170, %c0_171] : memref<256x128xbf16, #tpu.memory_space<vmem>>, vector<256x128xbf16>
        %cst_172 = arith.constant dense<0.000000e+00> : vector<8x128xf32>
        %251 = tpu.matmul %249, %250, %cst_172 {dimension_numbers = #tpu.dot_dimension_numbers<[1], [0], [0], [1], [0, 0, 1, 1], [], []>} : vector<8x256xbf16>, vector<256x128xbf16>, vector<8x128xf32> -> vector<8x128xf32>
        %252 = arith.addf %251, %221 : vector<8x128xf32>
        %253 = math.tanh %252 : vector<8x128xf32>
        %c0_173 = arith.constant 0 : index
        %c128_174 = arith.constant 128 : index
        %254 = vector.load %alloca_132[%c0_173, %c128_174] : memref<8x256xf32, #tpu.memory_space<vmem>>, vector<8x128xf32>
        tpu.vector_store %alloca_132[%c0_173, %c128_174], %253 {strides = array<i32>} : memref<8x256xf32, #tpu.memory_space<vmem>>, vector<8x128xf32>,
        %c3_i32_175 = arith.constant 3 : i32
        %255 = arith.index_cast %c3_i32_175 : i32 to index
        %c0_176 = arith.constant 0 : index
        %c0_177 = arith.constant 0 : index
        %256 = vector.load %alloca[%255, %c0_176, %c0_177] : memref<8x8x128xf32, #tpu.memory_space<vmem>>, vector<1x8x128xf32>
        %257 = vector.shape_cast %256 : vector<1x8x128xf32> to vector<8x128xf32>
        %c0_178 = arith.constant 0 : index
        %c0_179 = arith.constant 0 : index
        %258 = vector.load %alloca_132[%c0_178, %c0_179] : memref<8x256xf32, #tpu.memory_space<vmem>>, vector<8x128xf32>
        tpu.vector_store %alloca_132[%c0_178, %c0_179], %257 {strides = array<i32>} : memref<8x256xf32, #tpu.memory_space<vmem>>, vector<8x128xf32>,
        %c0_180 = arith.constant 0 : index
        %c0_181 = arith.constant 0 : index
        %259 = vector.load %alloca_132[%c0_180, %c0_181] : memref<8x256xf32, #tpu.memory_space<vmem>>, vector<8x256xf32>
        %260 = arith.truncf %259 : vector<8x256xf32> to vector<8x256xbf16>
        %c0_182 = arith.constant 0 : index
        %c0_183 = arith.constant 0 : index
        %261 = vector.load %alloca_131[%c0_182, %c0_183] : memref<256x128xbf16, #tpu.memory_space<vmem>>, vector<256x128xbf16>
        %cst_184 = arith.constant dense<0.000000e+00> : vector<8x128xf32>
        %262 = tpu.matmul %260, %261, %cst_184 {dimension_numbers = #tpu.dot_dimension_numbers<[1], [0], [0], [1], [0, 0, 1, 1], [], []>} : vector<8x256xbf16>, vector<256x128xbf16>, vector<8x128xf32> -> vector<8x128xf32>
        %263 = arith.addf %262, %221 : vector<8x128xf32>
        %264 = math.tanh %263 : vector<8x128xf32>
        %c0_185 = arith.constant 0 : index
        %c128_186 = arith.constant 128 : index
        %265 = vector.load %alloca_132[%c0_185, %c128_186] : memref<8x256xf32, #tpu.memory_space<vmem>>, vector<8x128xf32>
        tpu.vector_store %alloca_132[%c0_185, %c128_186], %264 {strides = array<i32>} : memref<8x256xf32, #tpu.memory_space<vmem>>, vector<8x128xf32>,
        %c4_i32_187 = arith.constant 4 : i32
        %266 = arith.index_cast %c4_i32_187 : i32 to index
        %c0_188 = arith.constant 0 : index
        %c0_189 = arith.constant 0 : index
        %267 = vector.load %alloca[%266, %c0_188, %c0_189] : memref<8x8x128xf32, #tpu.memory_space<vmem>>, vector<1x8x128xf32>
        %268 = vector.shape_cast %267 : vector<1x8x128xf32> to vector<8x128xf32>
        %c0_190 = arith.constant 0 : index
        %c0_191 = arith.constant 0 : index
        %269 = vector.load %alloca_132[%c0_190, %c0_191] : memref<8x256xf32, #tpu.memory_space<vmem>>, vector<8x128xf32>
        tpu.vector_store %alloca_132[%c0_190, %c0_191], %268 {strides = array<i32>} : memref<8x256xf32, #tpu.memory_space<vmem>>, vector<8x128xf32>,
        %c0_192 = arith.constant 0 : index
        %c0_193 = arith.constant 0 : index
        %270 = vector.load %alloca_132[%c0_192, %c0_193] : memref<8x256xf32, #tpu.memory_space<vmem>>, vector<8x256xf32>
        %271 = arith.truncf %270 : vector<8x256xf32> to vector<8x256xbf16>
        %c0_194 = arith.constant 0 : index
        %c0_195 = arith.constant 0 : index
        %272 = vector.load %alloca_131[%c0_194, %c0_195] : memref<256x128xbf16, #tpu.memory_space<vmem>>, vector<256x128xbf16>
        %cst_196 = arith.constant dense<0.000000e+00> : vector<8x128xf32>
        %273 = tpu.matmul %271, %272, %cst_196 {dimension_numbers = #tpu.dot_dimension_numbers<[1], [0], [0], [1], [0, 0, 1, 1], [], []>} : vector<8x256xbf16>, vector<256x128xbf16>, vector<8x128xf32> -> vector<8x128xf32>
        %274 = arith.addf %273, %221 : vector<8x128xf32>
        %275 = math.tanh %274 : vector<8x128xf32>
        %c0_197 = arith.constant 0 : index
        %c128_198 = arith.constant 128 : index
        %276 = vector.load %alloca_132[%c0_197, %c128_198] : memref<8x256xf32, #tpu.memory_space<vmem>>, vector<8x128xf32>
        tpu.vector_store %alloca_132[%c0_197, %c128_198], %275 {strides = array<i32>} : memref<8x256xf32, #tpu.memory_space<vmem>>, vector<8x128xf32>,
        %c5_i32_199 = arith.constant 5 : i32
        %277 = arith.index_cast %c5_i32_199 : i32 to index
        %c0_200 = arith.constant 0 : index
        %c0_201 = arith.constant 0 : index
        %278 = vector.load %alloca[%277, %c0_200, %c0_201] : memref<8x8x128xf32, #tpu.memory_space<vmem>>, vector<1x8x128xf32>
        %279 = vector.shape_cast %278 : vector<1x8x128xf32> to vector<8x128xf32>
        %c0_202 = arith.constant 0 : index
        %c0_203 = arith.constant 0 : index
        %280 = vector.load %alloca_132[%c0_202, %c0_203] : memref<8x256xf32, #tpu.memory_space<vmem>>, vector<8x128xf32>
        tpu.vector_store %alloca_132[%c0_202, %c0_203], %279 {strides = array<i32>} : memref<8x256xf32, #tpu.memory_space<vmem>>, vector<8x128xf32>,
        %c0_204 = arith.constant 0 : index
        %c0_205 = arith.constant 0 : index
        %281 = vector.load %alloca_132[%c0_204, %c0_205] : memref<8x256xf32, #tpu.memory_space<vmem>>, vector<8x256xf32>
        %282 = arith.truncf %281 : vector<8x256xf32> to vector<8x256xbf16>
        %c0_206 = arith.constant 0 : index
        %c0_207 = arith.constant 0 : index
        %283 = vector.load %alloca_131[%c0_206, %c0_207] : memref<256x128xbf16, #tpu.memory_space<vmem>>, vector<256x128xbf16>
        %cst_208 = arith.constant dense<0.000000e+00> : vector<8x128xf32>
        %284 = tpu.matmul %282, %283, %cst_208 {dimension_numbers = #tpu.dot_dimension_numbers<[1], [0], [0], [1], [0, 0, 1, 1], [], []>} : vector<8x256xbf16>, vector<256x128xbf16>, vector<8x128xf32> -> vector<8x128xf32>
        %285 = arith.addf %284, %221 : vector<8x128xf32>
        %286 = math.tanh %285 : vector<8x128xf32>
        %c0_209 = arith.constant 0 : index
        %c128_210 = arith.constant 128 : index
        %287 = vector.load %alloca_132[%c0_209, %c128_210] : memref<8x256xf32, #tpu.memory_space<vmem>>, vector<8x128xf32>
        tpu.vector_store %alloca_132[%c0_209, %c128_210], %286 {strides = array<i32>} : memref<8x256xf32, #tpu.memory_space<vmem>>, vector<8x128xf32>,
        %c6_i32_211 = arith.constant 6 : i32
        %288 = arith.index_cast %c6_i32_211 : i32 to index
        %c0_212 = arith.constant 0 : index
        %c0_213 = arith.constant 0 : index
        %289 = vector.load %alloca[%288, %c0_212, %c0_213] : memref<8x8x128xf32, #tpu.memory_space<vmem>>, vector<1x8x128xf32>
        %290 = vector.shape_cast %289 : vector<1x8x128xf32> to vector<8x128xf32>
        %c0_214 = arith.constant 0 : index
        %c0_215 = arith.constant 0 : index
        %291 = vector.load %alloca_132[%c0_214, %c0_215] : memref<8x256xf32, #tpu.memory_space<vmem>>, vector<8x128xf32>
        tpu.vector_store %alloca_132[%c0_214, %c0_215], %290 {strides = array<i32>} : memref<8x256xf32, #tpu.memory_space<vmem>>, vector<8x128xf32>,
        %c0_216 = arith.constant 0 : index
        %c0_217 = arith.constant 0 : index
        %292 = vector.load %alloca_132[%c0_216, %c0_217] : memref<8x256xf32, #tpu.memory_space<vmem>>, vector<8x256xf32>
        %293 = arith.truncf %292 : vector<8x256xf32> to vector<8x256xbf16>
        %c0_218 = arith.constant 0 : index
        %c0_219 = arith.constant 0 : index
        %294 = vector.load %alloca_131[%c0_218, %c0_219] : memref<256x128xbf16, #tpu.memory_space<vmem>>, vector<256x128xbf16>
        %cst_220 = arith.constant dense<0.000000e+00> : vector<8x128xf32>
        %295 = tpu.matmul %293, %294, %cst_220 {dimension_numbers = #tpu.dot_dimension_numbers<[1], [0], [0], [1], [0, 0, 1, 1], [], []>} : vector<8x256xbf16>, vector<256x128xbf16>, vector<8x128xf32> -> vector<8x128xf32>
        %296 = arith.addf %295, %221 : vector<8x128xf32>
        %297 = math.tanh %296 : vector<8x128xf32>
        %c0_221 = arith.constant 0 : index
        %c128_222 = arith.constant 128 : index
        %298 = vector.load %alloca_132[%c0_221, %c128_222] : memref<8x256xf32, #tpu.memory_space<vmem>>, vector<8x128xf32>
        tpu.vector_store %alloca_132[%c0_221, %c128_222], %297 {strides = array<i32>} : memref<8x256xf32, #tpu.memory_space<vmem>>, vector<8x128xf32>,
        %c7_i32_223 = arith.constant 7 : i32
        %299 = arith.index_cast %c7_i32_223 : i32 to index
        %c0_224 = arith.constant 0 : index
        %c0_225 = arith.constant 0 : index
        %300 = vector.load %alloca[%299, %c0_224, %c0_225] : memref<8x8x128xf32, #tpu.memory_space<vmem>>, vector<1x8x128xf32>
        %301 = vector.shape_cast %300 : vector<1x8x128xf32> to vector<8x128xf32>
        %c0_226 = arith.constant 0 : index
        %c0_227 = arith.constant 0 : index
        %302 = vector.load %alloca_132[%c0_226, %c0_227] : memref<8x256xf32, #tpu.memory_space<vmem>>, vector<8x128xf32>
        tpu.vector_store %alloca_132[%c0_226, %c0_227], %301 {strides = array<i32>} : memref<8x256xf32, #tpu.memory_space<vmem>>, vector<8x128xf32>,
        %c0_228 = arith.constant 0 : index
        %c0_229 = arith.constant 0 : index
        %303 = vector.load %alloca_132[%c0_228, %c0_229] : memref<8x256xf32, #tpu.memory_space<vmem>>, vector<8x256xf32>
        %304 = arith.truncf %303 : vector<8x256xf32> to vector<8x256xbf16>
        %c0_230 = arith.constant 0 : index
        %c0_231 = arith.constant 0 : index
        %305 = vector.load %alloca_131[%c0_230, %c0_231] : memref<256x128xbf16, #tpu.memory_space<vmem>>, vector<256x128xbf16>
        %cst_232 = arith.constant dense<0.000000e+00> : vector<8x128xf32>
        %306 = tpu.matmul %304, %305, %cst_232 {dimension_numbers = #tpu.dot_dimension_numbers<[1], [0], [0], [1], [0, 0, 1, 1], [], []>} : vector<8x256xbf16>, vector<256x128xbf16>, vector<8x128xf32> -> vector<8x128xf32>
        %307 = arith.addf %306, %221 : vector<8x128xf32>
        %308 = math.tanh %307 : vector<8x128xf32>
        %c0_233 = arith.constant 0 : index
        %c128_234 = arith.constant 128 : index
        %309 = vector.load %alloca_132[%c0_233, %c128_234] : memref<8x256xf32, #tpu.memory_space<vmem>>, vector<8x128xf32>
        tpu.vector_store %alloca_132[%c0_233, %c128_234], %308 {strides = array<i32>} : memref<8x256xf32, #tpu.memory_space<vmem>>, vector<8x128xf32>,
        %c8_i32_235 = arith.constant 8 : i32
        %cst_236 = arith.constant 0.000000e+00 : f32
        %310 = vector.broadcast %cst_236 : f32 to vector<8x128xf32>
        %c0_237 = arith.constant 0 : index
        %c0_238 = arith.constant 0 : index
        %311 = vector.load %arg11[%c0_237, %c0_238] : memref<8x256xf32, #tpu.memory_space<vmem>>, vector<8x128xf32>
        tpu.vector_store %arg11[%c0_237, %c0_238], %310 {strides = array<i32>} : memref<8x256xf32, #tpu.memory_space<vmem>>, vector<8x128xf32>,
        %c0_239 = arith.constant 0 : index
        %c128_240 = arith.constant 128 : index
        %312 = vector.load %alloca_132[%c0_239, %c128_240] : memref<8x256xf32, #tpu.memory_space<vmem>>, vector<8x128xf32>
        %c0_241 = arith.constant 0 : index
        %c128_242 = arith.constant 128 : index
        %313 = vector.load %arg11[%c0_241, %c128_242] : memref<8x256xf32, #tpu.memory_space<vmem>>, vector<8x128xf32>
        tpu.vector_store %arg11[%c0_241, %c128_242], %312 {strides = array<i32>} : memref<8x256xf32, #tpu.memory_space<vmem>>, vector<8x128xf32>,
        tpu.yield
      }) : () -> ()
    } else {
    }
    %c0 = arith.constant 0 : index
    %c0_1 = arith.constant 0 : index
    %3 = vector.load %arg6[%c0, %c0_1] : memref<1x128xf32, #tpu.memory_space<vmem>>, vector<1x128xf32>
    %4 = vector.shape_cast %3 : vector<1x128xf32> to vector<1x128xf32>
    %5 = vector.broadcast %4 : vector<1x128xf32> to vector<8x128xf32>
    %c0_2 = arith.constant 0 : index
    %c0_3 = arith.constant 0 : index
    %6 = vector.load %arg7[%c0_2, %c0_3] : memref<1x128xf32, #tpu.memory_space<vmem>>, vector<1x128xf32>
    %7 = vector.shape_cast %6 : vector<1x128xf32> to vector<1x128xf32>
    %8 = vector.broadcast %7 : vector<1x128xf32> to vector<8x128xf32>
    %c0_i32_4 = arith.constant 0 : i32
    %c0_5 = arith.constant 0 : index
    %c0_6 = arith.constant 0 : index
    %9 = vector.load %arg11[%c0_5, %c0_6] : memref<8x256xf32, #tpu.memory_space<vmem>>, vector<8x256xf32>
    %10 = arith.truncf %9 : vector<8x256xf32> to vector<8x256xbf16>
    %c0_7 = arith.constant 0 : index
    %c0_8 = arith.constant 0 : index
    %11 = vector.load %arg9[%c0_7, %c0_8] : memref<256x128xbf16, #tpu.memory_space<vmem>>, vector<256x128xbf16>
    %cst = arith.constant dense<0.000000e+00> : vector<8x128xf32>
    %12 = tpu.matmul %10, %11, %cst {dimension_numbers = #tpu.dot_dimension_numbers<[1], [0], [0], [1], [0, 0, 1, 1], [], []>} : vector<8x256xbf16>, vector<256x128xbf16>, vector<8x128xf32> -> vector<8x128xf32>
    %13 = arith.addf %12, %5 : vector<8x128xf32>
    %14 = math.tanh %13 : vector<8x128xf32>
    %15 = arith.truncf %14 : vector<8x128xf32> to vector<8x128xbf16>
    %c0_9 = arith.constant 0 : index
    %c0_10 = arith.constant 0 : index
    %16 = vector.load %arg10[%c0_9, %c0_10] : memref<128x128xbf16, #tpu.memory_space<vmem>>, vector<128x128xbf16>
    %cst_11 = arith.constant dense<0.000000e+00> : vector<8x128xf32>
    %17 = tpu.matmul %15, %16, %cst_11 {dimension_numbers = #tpu.dot_dimension_numbers<[1], [0], [0], [1], [0, 0, 1, 1], [], []>} : vector<8x128xbf16>, vector<128x128xbf16>, vector<8x128xf32> -> vector<8x128xf32>
    %18 = arith.addf %17, %8 : vector<8x128xf32>
    %cst_12 = arith.constant dense<0xFF800000> : vector<8xf32>
    %19 = vector.multi_reduction <maximumf>, %18, %cst_12 [1] : vector<8x128xf32> to vector<8xf32>
    %20 = vector.shape_cast %19 : vector<8xf32> to vector<8x1xf32>
    %21 = vector.broadcast %20 : vector<8x1xf32> to vector<8x128xf32>
    %22 = arith.subf %18, %21 : vector<8x128xf32>
    %23 = math.exp %22 : vector<8x128xf32>
    %cst_13 = arith.constant dense<0.000000e+00> : vector<8xf32>
    %24 = vector.multi_reduction <add>, %23, %cst_13 [1] : vector<8x128xf32> to vector<8xf32>
    %25 = vector.shape_cast %24 : vector<8xf32> to vector<8x1xf32>
    %26 = tpu.reciprocal %25 {approx = true} : vector<8x1xf32> -> vector<8x1xf32>
    %27 = vector.broadcast %26 : vector<8x1xf32> to vector<8x128xf32>
    %28 = arith.mulf %23, %27 : vector<8x128xf32>
    %c0_14 = arith.constant 0 : index
    %c0_15 = arith.constant 0 : index
    %29 = vector.load %arg11[%c0_14, %c0_15] : memref<8x256xf32, #tpu.memory_space<vmem>>, vector<8x128xf32>
    tpu.vector_store %arg11[%c0_14, %c0_15], %28 {strides = array<i32>} : memref<8x256xf32, #tpu.memory_space<vmem>>, vector<8x128xf32>,
    %c0_16 = arith.constant 0 : index
    %c128 = arith.constant 128 : index
    %30 = vector.load %arg11[%c0_16, %c128] : memref<8x256xf32, #tpu.memory_space<vmem>>, vector<8x128xf32>
    tpu.vector_store %arg11[%c0_16, %c128], %14 {strides = array<i32>} : memref<8x256xf32, #tpu.memory_space<vmem>>, vector<8x128xf32>,
    %31 = arith.index_cast %c0_i32_4 : i32 to index
    %c0_17 = arith.constant 0 : index
    %c0_18 = arith.constant 0 : index
    %32 = vector.load %arg8[%31, %c0_17, %c0_18] : memref<8x8x128xf32, #tpu.memory_space<vmem>>, vector<1x8x128xf32>
    %33 = vector.shape_cast %32 : vector<1x8x128xf32> to vector<8x128xf32>
    %34 = vector.shape_cast %28 : vector<8x128xf32> to vector<1x8x128xf32>
    tpu.vector_store %arg8[%31, %c0_17, %c0_18], %34 {strides = array<i32>} : memref<8x8x128xf32, #tpu.memory_space<vmem>>, vector<1x8x128xf32>,
    %c1_i32 = arith.constant 1 : i32
    %c0_19 = arith.constant 0 : index
    %c0_20 = arith.constant 0 : index
    %35 = vector.load %arg11[%c0_19, %c0_20] : memref<8x256xf32, #tpu.memory_space<vmem>>, vector<8x256xf32>
    %36 = arith.truncf %35 : vector<8x256xf32> to vector<8x256xbf16>
    %c0_21 = arith.constant 0 : index
    %c0_22 = arith.constant 0 : index
    %37 = vector.load %arg9[%c0_21, %c0_22] : memref<256x128xbf16, #tpu.memory_space<vmem>>, vector<256x128xbf16>
    %cst_23 = arith.constant dense<0.000000e+00> : vector<8x128xf32>
    %38 = tpu.matmul %36, %37, %cst_23 {dimension_numbers = #tpu.dot_dimension_numbers<[1], [0], [0], [1], [0, 0, 1, 1], [], []>} : vector<8x256xbf16>, vector<256x128xbf16>, vector<8x128xf32> -> vector<8x128xf32>
    %39 = arith.addf %38, %5 : vector<8x128xf32>
    %40 = math.tanh %39 : vector<8x128xf32>
    %41 = arith.truncf %40 : vector<8x128xf32> to vector<8x128xbf16>
    %c0_24 = arith.constant 0 : index
    %c0_25 = arith.constant 0 : index
    %42 = vector.load %arg10[%c0_24, %c0_25] : memref<128x128xbf16, #tpu.memory_space<vmem>>, vector<128x128xbf16>
    %cst_26 = arith.constant dense<0.000000e+00> : vector<8x128xf32>
    %43 = tpu.matmul %41, %42, %cst_26 {dimension_numbers = #tpu.dot_dimension_numbers<[1], [0], [0], [1], [0, 0, 1, 1], [], []>} : vector<8x128xbf16>, vector<128x128xbf16>, vector<8x128xf32> -> vector<8x128xf32>
    %44 = arith.addf %43, %8 : vector<8x128xf32>
    %cst_27 = arith.constant dense<0xFF800000> : vector<8xf32>
    %45 = vector.multi_reduction <maximumf>, %44, %cst_27 [1] : vector<8x128xf32> to vector<8xf32>
    %46 = vector.shape_cast %45 : vector<8xf32> to vector<8x1xf32>
    %47 = vector.broadcast %46 : vector<8x1xf32> to vector<8x128xf32>
    %48 = arith.subf %44, %47 : vector<8x128xf32>
    %49 = math.exp %48 : vector<8x128xf32>
    %cst_28 = arith.constant dense<0.000000e+00> : vector<8xf32>
    %50 = vector.multi_reduction <add>, %49, %cst_28 [1] : vector<8x128xf32> to vector<8xf32>
    %51 = vector.shape_cast %50 : vector<8xf32> to vector<8x1xf32>
    %52 = tpu.reciprocal %51 {approx = true} : vector<8x1xf32> -> vector<8x1xf32>
    %53 = vector.broadcast %52 : vector<8x1xf32> to vector<8x128xf32>
    %54 = arith.mulf %49, %53 : vector<8x128xf32>
    %c0_29 = arith.constant 0 : index
    %c0_30 = arith.constant 0 : index
    %55 = vector.load %arg11[%c0_29, %c0_30] : memref<8x256xf32, #tpu.memory_space<vmem>>, vector<8x128xf32>
    tpu.vector_store %arg11[%c0_29, %c0_30], %54 {strides = array<i32>} : memref<8x256xf32, #tpu.memory_space<vmem>>, vector<8x128xf32>,
    %c0_31 = arith.constant 0 : index
    %c128_32 = arith.constant 128 : index
    %56 = vector.load %arg11[%c0_31, %c128_32] : memref<8x256xf32, #tpu.memory_space<vmem>>, vector<8x128xf32>
    tpu.vector_store %arg11[%c0_31, %c128_32], %40 {strides = array<i32>} : memref<8x256xf32, #tpu.memory_space<vmem>>, vector<8x128xf32>,
    %57 = arith.index_cast %c1_i32 : i32 to index
    %c0_33 = arith.constant 0 : index
    %c0_34 = arith.constant 0 : index
    %58 = vector.load %arg8[%57, %c0_33, %c0_34] : memref<8x8x128xf32, #tpu.memory_space<vmem>>, vector<1x8x128xf32>
    %59 = vector.shape_cast %58 : vector<1x8x128xf32> to vector<8x128xf32>
    %60 = vector.shape_cast %54 : vector<8x128xf32> to vector<1x8x128xf32>
    tpu.vector_store %arg8[%57, %c0_33, %c0_34], %60 {strides = array<i32>} : memref<8x8x128xf32, #tpu.memory_space<vmem>>, vector<1x8x128xf32>,
    %c2_i32 = arith.constant 2 : i32
    %c0_35 = arith.constant 0 : index
    %c0_36 = arith.constant 0 : index
    %61 = vector.load %arg11[%c0_35, %c0_36] : memref<8x256xf32, #tpu.memory_space<vmem>>, vector<8x256xf32>
    %62 = arith.truncf %61 : vector<8x256xf32> to vector<8x256xbf16>
    %c0_37 = arith.constant 0 : index
    %c0_38 = arith.constant 0 : index
    %63 = vector.load %arg9[%c0_37, %c0_38] : memref<256x128xbf16, #tpu.memory_space<vmem>>, vector<256x128xbf16>
    %cst_39 = arith.constant dense<0.000000e+00> : vector<8x128xf32>
    %64 = tpu.matmul %62, %63, %cst_39 {dimension_numbers = #tpu.dot_dimension_numbers<[1], [0], [0], [1], [0, 0, 1, 1], [], []>} : vector<8x256xbf16>, vector<256x128xbf16>, vector<8x128xf32> -> vector<8x128xf32>
    %65 = arith.addf %64, %5 : vector<8x128xf32>
    %66 = math.tanh %65 : vector<8x128xf32>
    %67 = arith.truncf %66 : vector<8x128xf32> to vector<8x128xbf16>
    %c0_40 = arith.constant 0 : index
    %c0_41 = arith.constant 0 : index
    %68 = vector.load %arg10[%c0_40, %c0_41] : memref<128x128xbf16, #tpu.memory_space<vmem>>, vector<128x128xbf16>
    %cst_42 = arith.constant dense<0.000000e+00> : vector<8x128xf32>
    %69 = tpu.matmul %67, %68, %cst_42 {dimension_numbers = #tpu.dot_dimension_numbers<[1], [0], [0], [1], [0, 0, 1, 1], [], []>} : vector<8x128xbf16>, vector<128x128xbf16>, vector<8x128xf32> -> vector<8x128xf32>
    %70 = arith.addf %69, %8 : vector<8x128xf32>
    %cst_43 = arith.constant dense<0xFF800000> : vector<8xf32>
    %71 = vector.multi_reduction <maximumf>, %70, %cst_43 [1] : vector<8x128xf32> to vector<8xf32>
    %72 = vector.shape_cast %71 : vector<8xf32> to vector<8x1xf32>
    %73 = vector.broadcast %72 : vector<8x1xf32> to vector<8x128xf32>
    %74 = arith.subf %70, %73 : vector<8x128xf32>
    %75 = math.exp %74 : vector<8x128xf32>
    %cst_44 = arith.constant dense<0.000000e+00> : vector<8xf32>
    %76 = vector.multi_reduction <add>, %75, %cst_44 [1] : vector<8x128xf32> to vector<8xf32>
    %77 = vector.shape_cast %76 : vector<8xf32> to vector<8x1xf32>
    %78 = tpu.reciprocal %77 {approx = true} : vector<8x1xf32> -> vector<8x1xf32>
    %79 = vector.broadcast %78 : vector<8x1xf32> to vector<8x128xf32>
    %80 = arith.mulf %75, %79 : vector<8x128xf32>
    %c0_45 = arith.constant 0 : index
    %c0_46 = arith.constant 0 : index
    %81 = vector.load %arg11[%c0_45, %c0_46] : memref<8x256xf32, #tpu.memory_space<vmem>>, vector<8x128xf32>
    tpu.vector_store %arg11[%c0_45, %c0_46], %80 {strides = array<i32>} : memref<8x256xf32, #tpu.memory_space<vmem>>, vector<8x128xf32>,
    %c0_47 = arith.constant 0 : index
    %c128_48 = arith.constant 128 : index
    %82 = vector.load %arg11[%c0_47, %c128_48] : memref<8x256xf32, #tpu.memory_space<vmem>>, vector<8x128xf32>
    tpu.vector_store %arg11[%c0_47, %c128_48], %66 {strides = array<i32>} : memref<8x256xf32, #tpu.memory_space<vmem>>, vector<8x128xf32>,
    %83 = arith.index_cast %c2_i32 : i32 to index
    %c0_49 = arith.constant 0 : index
    %c0_50 = arith.constant 0 : index
    %84 = vector.load %arg8[%83, %c0_49, %c0_50] : memref<8x8x128xf32, #tpu.memory_space<vmem>>, vector<1x8x128xf32>
    %85 = vector.shape_cast %84 : vector<1x8x128xf32> to vector<8x128xf32>
    %86 = vector.shape_cast %80 : vector<8x128xf32> to vector<1x8x128xf32>
    tpu.vector_store %arg8[%83, %c0_49, %c0_50], %86 {strides = array<i32>} : memref<8x8x128xf32, #tpu.memory_space<vmem>>, vector<1x8x128xf32>,
    %c3_i32 = arith.constant 3 : i32
    %c0_51 = arith.constant 0 : index
    %c0_52 = arith.constant 0 : index
    %87 = vector.load %arg11[%c0_51, %c0_52] : memref<8x256xf32, #tpu.memory_space<vmem>>, vector<8x256xf32>
    %88 = arith.truncf %87 : vector<8x256xf32> to vector<8x256xbf16>
    %c0_53 = arith.constant 0 : index
    %c0_54 = arith.constant 0 : index
    %89 = vector.load %arg9[%c0_53, %c0_54] : memref<256x128xbf16, #tpu.memory_space<vmem>>, vector<256x128xbf16>
    %cst_55 = arith.constant dense<0.000000e+00> : vector<8x128xf32>
    %90 = tpu.matmul %88, %89, %cst_55 {dimension_numbers = #tpu.dot_dimension_numbers<[1], [0], [0], [1], [0, 0, 1, 1], [], []>} : vector<8x256xbf16>, vector<256x128xbf16>, vector<8x128xf32> -> vector<8x128xf32>
    %91 = arith.addf %90, %5 : vector<8x128xf32>
    %92 = math.tanh %91 : vector<8x128xf32>
    %93 = arith.truncf %92 : vector<8x128xf32> to vector<8x128xbf16>
    %c0_56 = arith.constant 0 : index
    %c0_57 = arith.constant 0 : index
    %94 = vector.load %arg10[%c0_56, %c0_57] : memref<128x128xbf16, #tpu.memory_space<vmem>>, vector<128x128xbf16>
    %cst_58 = arith.constant dense<0.000000e+00> : vector<8x128xf32>
    %95 = tpu.matmul %93, %94, %cst_58 {dimension_numbers = #tpu.dot_dimension_numbers<[1], [0], [0], [1], [0, 0, 1, 1], [], []>} : vector<8x128xbf16>, vector<128x128xbf16>, vector<8x128xf32> -> vector<8x128xf32>
    %96 = arith.addf %95, %8 : vector<8x128xf32>
    %cst_59 = arith.constant dense<0xFF800000> : vector<8xf32>
    %97 = vector.multi_reduction <maximumf>, %96, %cst_59 [1] : vector<8x128xf32> to vector<8xf32>
    %98 = vector.shape_cast %97 : vector<8xf32> to vector<8x1xf32>
    %99 = vector.broadcast %98 : vector<8x1xf32> to vector<8x128xf32>
    %100 = arith.subf %96, %99 : vector<8x128xf32>
    %101 = math.exp %100 : vector<8x128xf32>
    %cst_60 = arith.constant dense<0.000000e+00> : vector<8xf32>
    %102 = vector.multi_reduction <add>, %101, %cst_60 [1] : vector<8x128xf32> to vector<8xf32>
    %103 = vector.shape_cast %102 : vector<8xf32> to vector<8x1xf32>
    %104 = tpu.reciprocal %103 {approx = true} : vector<8x1xf32> -> vector<8x1xf32>
    %105 = vector.broadcast %104 : vector<8x1xf32> to vector<8x128xf32>
    %106 = arith.mulf %101, %105 : vector<8x128xf32>
    %c0_61 = arith.constant 0 : index
    %c0_62 = arith.constant 0 : index
    %107 = vector.load %arg11[%c0_61, %c0_62] : memref<8x256xf32, #tpu.memory_space<vmem>>, vector<8x128xf32>
    tpu.vector_store %arg11[%c0_61, %c0_62], %106 {strides = array<i32>} : memref<8x256xf32, #tpu.memory_space<vmem>>, vector<8x128xf32>,
    %c0_63 = arith.constant 0 : index
    %c128_64 = arith.constant 128 : index
    %108 = vector.load %arg11[%c0_63, %c128_64] : memref<8x256xf32, #tpu.memory_space<vmem>>, vector<8x128xf32>
    tpu.vector_store %arg11[%c0_63, %c128_64], %92 {strides = array<i32>} : memref<8x256xf32, #tpu.memory_space<vmem>>, vector<8x128xf32>,
    %109 = arith.index_cast %c3_i32 : i32 to index
    %c0_65 = arith.constant 0 : index
    %c0_66 = arith.constant 0 : index
    %110 = vector.load %arg8[%109, %c0_65, %c0_66] : memref<8x8x128xf32, #tpu.memory_space<vmem>>, vector<1x8x128xf32>
    %111 = vector.shape_cast %110 : vector<1x8x128xf32> to vector<8x128xf32>
    %112 = vector.shape_cast %106 : vector<8x128xf32> to vector<1x8x128xf32>
    tpu.vector_store %arg8[%109, %c0_65, %c0_66], %112 {strides = array<i32>} : memref<8x8x128xf32, #tpu.memory_space<vmem>>, vector<1x8x128xf32>,
    %c4_i32 = arith.constant 4 : i32
    %c0_67 = arith.constant 0 : index
    %c0_68 = arith.constant 0 : index
    %113 = vector.load %arg11[%c0_67, %c0_68] : memref<8x256xf32, #tpu.memory_space<vmem>>, vector<8x256xf32>
    %114 = arith.truncf %113 : vector<8x256xf32> to vector<8x256xbf16>
    %c0_69 = arith.constant 0 : index
    %c0_70 = arith.constant 0 : index
    %115 = vector.load %arg9[%c0_69, %c0_70] : memref<256x128xbf16, #tpu.memory_space<vmem>>, vector<256x128xbf16>
    %cst_71 = arith.constant dense<0.000000e+00> : vector<8x128xf32>
    %116 = tpu.matmul %114, %115, %cst_71 {dimension_numbers = #tpu.dot_dimension_numbers<[1], [0], [0], [1], [0, 0, 1, 1], [], []>} : vector<8x256xbf16>, vector<256x128xbf16>, vector<8x128xf32> -> vector<8x128xf32>
    %117 = arith.addf %116, %5 : vector<8x128xf32>
    %118 = math.tanh %117 : vector<8x128xf32>
    %119 = arith.truncf %118 : vector<8x128xf32> to vector<8x128xbf16>
    %c0_72 = arith.constant 0 : index
    %c0_73 = arith.constant 0 : index
    %120 = vector.load %arg10[%c0_72, %c0_73] : memref<128x128xbf16, #tpu.memory_space<vmem>>, vector<128x128xbf16>
    %cst_74 = arith.constant dense<0.000000e+00> : vector<8x128xf32>
    %121 = tpu.matmul %119, %120, %cst_74 {dimension_numbers = #tpu.dot_dimension_numbers<[1], [0], [0], [1], [0, 0, 1, 1], [], []>} : vector<8x128xbf16>, vector<128x128xbf16>, vector<8x128xf32> -> vector<8x128xf32>
    %122 = arith.addf %121, %8 : vector<8x128xf32>
    %cst_75 = arith.constant dense<0xFF800000> : vector<8xf32>
    %123 = vector.multi_reduction <maximumf>, %122, %cst_75 [1] : vector<8x128xf32> to vector<8xf32>
    %124 = vector.shape_cast %123 : vector<8xf32> to vector<8x1xf32>
    %125 = vector.broadcast %124 : vector<8x1xf32> to vector<8x128xf32>
    %126 = arith.subf %122, %125 : vector<8x128xf32>
    %127 = math.exp %126 : vector<8x128xf32>
    %cst_76 = arith.constant dense<0.000000e+00> : vector<8xf32>
    %128 = vector.multi_reduction <add>, %127, %cst_76 [1] : vector<8x128xf32> to vector<8xf32>
    %129 = vector.shape_cast %128 : vector<8xf32> to vector<8x1xf32>
    %130 = tpu.reciprocal %129 {approx = true} : vector<8x1xf32> -> vector<8x1xf32>
    %131 = vector.broadcast %130 : vector<8x1xf32> to vector<8x128xf32>
    %132 = arith.mulf %127, %131 : vector<8x128xf32>
    %c0_77 = arith.constant 0 : index
    %c0_78 = arith.constant 0 : index
    %133 = vector.load %arg11[%c0_77, %c0_78] : memref<8x256xf32, #tpu.memory_space<vmem>>, vector<8x128xf32>
    tpu.vector_store %arg11[%c0_77, %c0_78], %132 {strides = array<i32>} : memref<8x256xf32, #tpu.memory_space<vmem>>, vector<8x128xf32>,
    %c0_79 = arith.constant 0 : index
    %c128_80 = arith.constant 128 : index
    %134 = vector.load %arg11[%c0_79, %c128_80] : memref<8x256xf32, #tpu.memory_space<vmem>>, vector<8x128xf32>
    tpu.vector_store %arg11[%c0_79, %c128_80], %118 {strides = array<i32>} : memref<8x256xf32, #tpu.memory_space<vmem>>, vector<8x128xf32>,
    %135 = arith.index_cast %c4_i32 : i32 to index
    %c0_81 = arith.constant 0 : index
    %c0_82 = arith.constant 0 : index
    %136 = vector.load %arg8[%135, %c0_81, %c0_82] : memref<8x8x128xf32, #tpu.memory_space<vmem>>, vector<1x8x128xf32>
    %137 = vector.shape_cast %136 : vector<1x8x128xf32> to vector<8x128xf32>
    %138 = vector.shape_cast %132 : vector<8x128xf32> to vector<1x8x128xf32>
    tpu.vector_store %arg8[%135, %c0_81, %c0_82], %138 {strides = array<i32>} : memref<8x8x128xf32, #tpu.memory_space<vmem>>, vector<1x8x128xf32>,
    %c5_i32 = arith.constant 5 : i32
    %c0_83 = arith.constant 0 : index
    %c0_84 = arith.constant 0 : index
    %139 = vector.load %arg11[%c0_83, %c0_84] : memref<8x256xf32, #tpu.memory_space<vmem>>, vector<8x256xf32>
    %140 = arith.truncf %139 : vector<8x256xf32> to vector<8x256xbf16>
    %c0_85 = arith.constant 0 : index
    %c0_86 = arith.constant 0 : index
    %141 = vector.load %arg9[%c0_85, %c0_86] : memref<256x128xbf16, #tpu.memory_space<vmem>>, vector<256x128xbf16>
    %cst_87 = arith.constant dense<0.000000e+00> : vector<8x128xf32>
    %142 = tpu.matmul %140, %141, %cst_87 {dimension_numbers = #tpu.dot_dimension_numbers<[1], [0], [0], [1], [0, 0, 1, 1], [], []>} : vector<8x256xbf16>, vector<256x128xbf16>, vector<8x128xf32> -> vector<8x128xf32>
    %143 = arith.addf %142, %5 : vector<8x128xf32>
    %144 = math.tanh %143 : vector<8x128xf32>
    %145 = arith.truncf %144 : vector<8x128xf32> to vector<8x128xbf16>
    %c0_88 = arith.constant 0 : index
    %c0_89 = arith.constant 0 : index
    %146 = vector.load %arg10[%c0_88, %c0_89] : memref<128x128xbf16, #tpu.memory_space<vmem>>, vector<128x128xbf16>
    %cst_90 = arith.constant dense<0.000000e+00> : vector<8x128xf32>
    %147 = tpu.matmul %145, %146, %cst_90 {dimension_numbers = #tpu.dot_dimension_numbers<[1], [0], [0], [1], [0, 0, 1, 1], [], []>} : vector<8x128xbf16>, vector<128x128xbf16>, vector<8x128xf32> -> vector<8x128xf32>
    %148 = arith.addf %147, %8 : vector<8x128xf32>
    %cst_91 = arith.constant dense<0xFF800000> : vector<8xf32>
    %149 = vector.multi_reduction <maximumf>, %148, %cst_91 [1] : vector<8x128xf32> to vector<8xf32>
    %150 = vector.shape_cast %149 : vector<8xf32> to vector<8x1xf32>
    %151 = vector.broadcast %150 : vector<8x1xf32> to vector<8x128xf32>
    %152 = arith.subf %148, %151 : vector<8x128xf32>
    %153 = math.exp %152 : vector<8x128xf32>
    %cst_92 = arith.constant dense<0.000000e+00> : vector<8xf32>
    %154 = vector.multi_reduction <add>, %153, %cst_92 [1] : vector<8x128xf32> to vector<8xf32>
    %155 = vector.shape_cast %154 : vector<8xf32> to vector<8x1xf32>
    %156 = tpu.reciprocal %155 {approx = true} : vector<8x1xf32> -> vector<8x1xf32>
    %157 = vector.broadcast %156 : vector<8x1xf32> to vector<8x128xf32>
    %158 = arith.mulf %153, %157 : vector<8x128xf32>
    %c0_93 = arith.constant 0 : index
    %c0_94 = arith.constant 0 : index
    %159 = vector.load %arg11[%c0_93, %c0_94] : memref<8x256xf32, #tpu.memory_space<vmem>>, vector<8x128xf32>
    tpu.vector_store %arg11[%c0_93, %c0_94], %158 {strides = array<i32>} : memref<8x256xf32, #tpu.memory_space<vmem>>, vector<8x128xf32>,
    %c0_95 = arith.constant 0 : index
    %c128_96 = arith.constant 128 : index
    %160 = vector.load %arg11[%c0_95, %c128_96] : memref<8x256xf32, #tpu.memory_space<vmem>>, vector<8x128xf32>
    tpu.vector_store %arg11[%c0_95, %c128_96], %144 {strides = array<i32>} : memref<8x256xf32, #tpu.memory_space<vmem>>, vector<8x128xf32>,
    %161 = arith.index_cast %c5_i32 : i32 to index
    %c0_97 = arith.constant 0 : index
    %c0_98 = arith.constant 0 : index
    %162 = vector.load %arg8[%161, %c0_97, %c0_98] : memref<8x8x128xf32, #tpu.memory_space<vmem>>, vector<1x8x128xf32>
    %163 = vector.shape_cast %162 : vector<1x8x128xf32> to vector<8x128xf32>
    %164 = vector.shape_cast %158 : vector<8x128xf32> to vector<1x8x128xf32>
    tpu.vector_store %arg8[%161, %c0_97, %c0_98], %164 {strides = array<i32>} : memref<8x8x128xf32, #tpu.memory_space<vmem>>, vector<1x8x128xf32>,
    %c6_i32 = arith.constant 6 : i32
    %c0_99 = arith.constant 0 : index
    %c0_100 = arith.constant 0 : index
    %165 = vector.load %arg11[%c0_99, %c0_100] : memref<8x256xf32, #tpu.memory_space<vmem>>, vector<8x256xf32>
    %166 = arith.truncf %165 : vector<8x256xf32> to vector<8x256xbf16>
    %c0_101 = arith.constant 0 : index
    %c0_102 = arith.constant 0 : index
    %167 = vector.load %arg9[%c0_101, %c0_102] : memref<256x128xbf16, #tpu.memory_space<vmem>>, vector<256x128xbf16>
    %cst_103 = arith.constant dense<0.000000e+00> : vector<8x128xf32>
    %168 = tpu.matmul %166, %167, %cst_103 {dimension_numbers = #tpu.dot_dimension_numbers<[1], [0], [0], [1], [0, 0, 1, 1], [], []>} : vector<8x256xbf16>, vector<256x128xbf16>, vector<8x128xf32> -> vector<8x128xf32>
    %169 = arith.addf %168, %5 : vector<8x128xf32>
    %170 = math.tanh %169 : vector<8x128xf32>
    %171 = arith.truncf %170 : vector<8x128xf32> to vector<8x128xbf16>
    %c0_104 = arith.constant 0 : index
    %c0_105 = arith.constant 0 : index
    %172 = vector.load %arg10[%c0_104, %c0_105] : memref<128x128xbf16, #tpu.memory_space<vmem>>, vector<128x128xbf16>
    %cst_106 = arith.constant dense<0.000000e+00> : vector<8x128xf32>
    %173 = tpu.matmul %171, %172, %cst_106 {dimension_numbers = #tpu.dot_dimension_numbers<[1], [0], [0], [1], [0, 0, 1, 1], [], []>} : vector<8x128xbf16>, vector<128x128xbf16>, vector<8x128xf32> -> vector<8x128xf32>
    %174 = arith.addf %173, %8 : vector<8x128xf32>
    %cst_107 = arith.constant dense<0xFF800000> : vector<8xf32>
    %175 = vector.multi_reduction <maximumf>, %174, %cst_107 [1] : vector<8x128xf32> to vector<8xf32>
    %176 = vector.shape_cast %175 : vector<8xf32> to vector<8x1xf32>
    %177 = vector.broadcast %176 : vector<8x1xf32> to vector<8x128xf32>
    %178 = arith.subf %174, %177 : vector<8x128xf32>
    %179 = math.exp %178 : vector<8x128xf32>
    %cst_108 = arith.constant dense<0.000000e+00> : vector<8xf32>
    %180 = vector.multi_reduction <add>, %179, %cst_108 [1] : vector<8x128xf32> to vector<8xf32>
    %181 = vector.shape_cast %180 : vector<8xf32> to vector<8x1xf32>
    %182 = tpu.reciprocal %181 {approx = true} : vector<8x1xf32> -> vector<8x1xf32>
    %183 = vector.broadcast %182 : vector<8x1xf32> to vector<8x128xf32>
    %184 = arith.mulf %179, %183 : vector<8x128xf32>
    %c0_109 = arith.constant 0 : index
    %c0_110 = arith.constant 0 : index
    %185 = vector.load %arg11[%c0_109, %c0_110] : memref<8x256xf32, #tpu.memory_space<vmem>>, vector<8x128xf32>
    tpu.vector_store %arg11[%c0_109, %c0_110], %184 {strides = array<i32>} : memref<8x256xf32, #tpu.memory_space<vmem>>, vector<8x128xf32>,
    %c0_111 = arith.constant 0 : index
    %c128_112 = arith.constant 128 : index
    %186 = vector.load %arg11[%c0_111, %c128_112] : memref<8x256xf32, #tpu.memory_space<vmem>>, vector<8x128xf32>
    tpu.vector_store %arg11[%c0_111, %c128_112], %170 {strides = array<i32>} : memref<8x256xf32, #tpu.memory_space<vmem>>, vector<8x128xf32>,
    %187 = arith.index_cast %c6_i32 : i32 to index
    %c0_113 = arith.constant 0 : index
    %c0_114 = arith.constant 0 : index
    %188 = vector.load %arg8[%187, %c0_113, %c0_114] : memref<8x8x128xf32, #tpu.memory_space<vmem>>, vector<1x8x128xf32>
    %189 = vector.shape_cast %188 : vector<1x8x128xf32> to vector<8x128xf32>
    %190 = vector.shape_cast %184 : vector<8x128xf32> to vector<1x8x128xf32>
    tpu.vector_store %arg8[%187, %c0_113, %c0_114], %190 {strides = array<i32>} : memref<8x8x128xf32, #tpu.memory_space<vmem>>, vector<1x8x128xf32>,
    %c7_i32 = arith.constant 7 : i32
    %c0_115 = arith.constant 0 : index
    %c0_116 = arith.constant 0 : index
    %191 = vector.load %arg11[%c0_115, %c0_116] : memref<8x256xf32, #tpu.memory_space<vmem>>, vector<8x256xf32>
    %192 = arith.truncf %191 : vector<8x256xf32> to vector<8x256xbf16>
    %c0_117 = arith.constant 0 : index
    %c0_118 = arith.constant 0 : index
    %193 = vector.load %arg9[%c0_117, %c0_118] : memref<256x128xbf16, #tpu.memory_space<vmem>>, vector<256x128xbf16>
    %cst_119 = arith.constant dense<0.000000e+00> : vector<8x128xf32>
    %194 = tpu.matmul %192, %193, %cst_119 {dimension_numbers = #tpu.dot_dimension_numbers<[1], [0], [0], [1], [0, 0, 1, 1], [], []>} : vector<8x256xbf16>, vector<256x128xbf16>, vector<8x128xf32> -> vector<8x128xf32>
    %195 = arith.addf %194, %5 : vector<8x128xf32>
    %196 = math.tanh %195 : vector<8x128xf32>
    %197 = arith.truncf %196 : vector<8x128xf32> to vector<8x128xbf16>
    %c0_120 = arith.constant 0 : index
    %c0_121 = arith.constant 0 : index
    %198 = vector.load %arg10[%c0_120, %c0_121] : memref<128x128xbf16, #tpu.memory_space<vmem>>, vector<128x128xbf16>
    %cst_122 = arith.constant dense<0.000000e+00> : vector<8x128xf32>
    %199 = tpu.matmul %197, %198, %cst_122 {dimension_numbers = #tpu.dot_dimension_numbers<[1], [0], [0], [1], [0, 0, 1, 1], [], []>} : vector<8x128xbf16>, vector<128x128xbf16>, vector<8x128xf32> -> vector<8x128xf32>
    %200 = arith.addf %199, %8 : vector<8x128xf32>
    %cst_123 = arith.constant dense<0xFF800000> : vector<8xf32>
    %201 = vector.multi_reduction <maximumf>, %200, %cst_123 [1] : vector<8x128xf32> to vector<8xf32>
    %202 = vector.shape_cast %201 : vector<8xf32> to vector<8x1xf32>
    %203 = vector.broadcast %202 : vector<8x1xf32> to vector<8x128xf32>
    %204 = arith.subf %200, %203 : vector<8x128xf32>
    %205 = math.exp %204 : vector<8x128xf32>
    %cst_124 = arith.constant dense<0.000000e+00> : vector<8xf32>
    %206 = vector.multi_reduction <add>, %205, %cst_124 [1] : vector<8x128xf32> to vector<8xf32>
    %207 = vector.shape_cast %206 : vector<8xf32> to vector<8x1xf32>
    %208 = tpu.reciprocal %207 {approx = true} : vector<8x1xf32> -> vector<8x1xf32>
    %209 = vector.broadcast %208 : vector<8x1xf32> to vector<8x128xf32>
    %210 = arith.mulf %205, %209 : vector<8x128xf32>
    %c0_125 = arith.constant 0 : index
    %c0_126 = arith.constant 0 : index
    %211 = vector.load %arg11[%c0_125, %c0_126] : memref<8x256xf32, #tpu.memory_space<vmem>>, vector<8x128xf32>
    tpu.vector_store %arg11[%c0_125, %c0_126], %210 {strides = array<i32>} : memref<8x256xf32, #tpu.memory_space<vmem>>, vector<8x128xf32>,
    %c0_127 = arith.constant 0 : index
    %c128_128 = arith.constant 128 : index
    %212 = vector.load %arg11[%c0_127, %c128_128] : memref<8x256xf32, #tpu.memory_space<vmem>>, vector<8x128xf32>
    tpu.vector_store %arg11[%c0_127, %c128_128], %196 {strides = array<i32>} : memref<8x256xf32, #tpu.memory_space<vmem>>, vector<8x128xf32>,
    %213 = arith.index_cast %c7_i32 : i32 to index
    %c0_129 = arith.constant 0 : index
    %c0_130 = arith.constant 0 : index
    %214 = vector.load %arg8[%213, %c0_129, %c0_130] : memref<8x8x128xf32, #tpu.memory_space<vmem>>, vector<1x8x128xf32>
    %215 = vector.shape_cast %214 : vector<1x8x128xf32> to vector<8x128xf32>
    %216 = vector.shape_cast %210 : vector<8x128xf32> to vector<1x8x128xf32>
    tpu.vector_store %arg8[%213, %c0_129, %c0_130], %216 {strides = array<i32>} : memref<8x8x128xf32, #tpu.memory_space<vmem>>, vector<1x8x128xf32>,
    %c8_i32 = arith.constant 8 : i32
    return
  }
  func.func @transform_4(%arg0: i32) -> (i32, i32) {
    %c0_i32 = arith.constant 0 : i32
    %c0_i32_0 = arith.constant 0 : i32
    %c0_i32_1 = arith.constant 0 : i32
    return %c0_i32, %c0_i32_0 : i32, i32
  }
  func.func @transform_5(%arg0: i32) -> (i32, i32) {
    %c0_i32 = arith.constant 0 : i32
    %c0_i32_0 = arith.constant 0 : i32
    %c0_i32_1 = arith.constant 0 : i32
    return %c0_i32, %c0_i32_0 : i32, i32
  }
  func.func @transform_6(%arg0: i32) -> (i32, i32) {
    %c0_i32 = arith.constant 0 : i32
    %c0_i32_0 = arith.constant 0 : i32
    %c0_i32_1 = arith.constant 0 : i32
    return %c0_i32, %c0_i32_0 : i32, i32
  }
  func.func @transform_7(%arg0: i32) -> (i32, i32, i32) {
    %c0_i32 = arith.constant 0 : i32
    %c0_i32_0 = arith.constant 0 : i32
    %c0_i32_1 = arith.constant 0 : i32
    return %arg0, %c0_i32, %c0_i32_0 : i32, i32, i32
  }
}

</mosaic_0001>

<llo_original>
// kernel: tpu_custom_call.1
$region0: #{tpu_custom_call.1}
  #allocation0 [shape = 'u32[]', space=smem, size = 0x4, offset = 0x4, fixed_abs, tag = 'smem constant byte address 0x4 - core index']
  #allocation1 [shape = 'u32[144,128]{1,0:T(1,128)}', space=vmem, size = 0x12000, scoped, tag = 'internal scratch']
  #allocation2 [shape = 'bf16[256,128]{1,0:T(16,128)(2,1)}', space=vmem, size = 0x10000, scoped, tag = 'scratch operand']
  #allocation3 [shape = 'bf16[128,128]{1,0:T(16,128)(2,1)}', space=vmem, size = 0x8000, scoped, tag = 'scratch operand']
  #allocation4 [shape = 'f32[8,256]{1,0:T(8,128)}', space=vmem, size = 0x2000, scoped, tag = 'scratch operand']
  #allocation8 [shape = 's32[]', space=sflag, size = 0x4, offset = 0, fixed_abs, tag = 'sflag constant byte address 0x0 - dummy sync flag']
  #allocation9 [shape = 's32[]', space=sflag, size = 0x4, offset = 0, fixed_abs, tag = 'sflag constant byte address 0x0 - dummy sync flag']
  #allocation10 [shape = 'u32[]', space=smem, size = 0x4, offset = 0x44, fixed_abs, tag = 'smem constant byte address 0x44 - assertion arg 0']
  #allocation11 [shape = 'u32[]', space=smem, size = 0x4, offset = 0x48, fixed_abs, tag = 'smem constant byte address 0x48 - assertion arg 1']
  #allocation13 [shape = 's32[]', space=sflag, size = 0x4, offset = 0, fixed_abs, tag = 'sflag constant byte address 0x0 - dummy sync flag']
  #allocation14 [shape = 's32[]', space=sflag, size = 0x4, offset = 0, fixed_abs, tag = 'sflag constant byte address 0x0 - dummy sync flag']
  #allocation19 [shape = 's32[]', space=sflag, size = 0x4, offset = 0, fixed_abs, tag = 'sflag constant byte address 0x0 - dummy sync flag']
  #allocation20 [shape = 's32[]', space=sflag, size = 0x4, offset = 0, fixed_abs, tag = 'sflag constant byte address 0x0 - dummy sync flag']
  #allocation22 [shape = 's32[]', space=sflag, size = 0x4, offset = 0, fixed_abs, tag = 'sflag constant byte address 0x0 - dummy sync flag']
  #allocation23 [shape = 's32[]', space=sflag, size = 0x4, offset = 0, fixed_abs, tag = 'sflag constant byte address 0x0 - dummy sync flag']
  %s0 = inlined_call_operand.hbm [shape: f32[8,8,128], index: 0, kind: input, shape index: {}]
  %s1 = inlined_call_operand.hbm [shape: bf16[256,128], index: 1, kind: input, shape index: {}]
  %s2 = inlined_call_operand.hbm [shape: bf16[256,128], index: 2, kind: input, shape index: {}]
  %s3 = inlined_call_operand.hbm [shape: bf16[128,128], index: 3, kind: input, shape index: {}]
  %s4 = inlined_call_operand.vmem [shape: f32[1,128], index: 4, kind: input, shape index: {}]
  %s5 = inlined_call_operand.vmem [shape: f32[1,128], index: 5, kind: input, shape index: {}]
  %s6 = inlined_call_operand.vmem [shape: f32[1,128], index: 6, kind: input, shape index: {}]
  %s7 = inlined_call_operand.hbm [shape: f32[16,8,128], index: 7, kind: output, shape index: {}]
  %s8 = sld [smem:[#allocation0]]
  $region70: #{tpu_custom_call.1} parent=0
    _
  %s10 = ssub.s32 1, %s8
  %s11 = scalar_select 0, %s10, %s8
  $region1: #{tpu_custom_call.1} parent=0
    #allocation5 [shape = 'u8[65536]{0}', space=vmem, size = 0x10000, scoped, tag = 'output window, operand 0']
    #allocation6 [shape = 's32[2]{0}', space=sflag, size = 0x8, scoped, tag = 'scoped memory for tpu_custom_call.1']
    %12 = vsyncpa [#allocation6], 0
    %s13 = scalar_lea.sflag [#allocation6], 1
    %14 = vsyncpa %s13, 0
    loop: start=0, step=1, limit=4
    $region2: #{tpu_custom_call.1} parent=1 // loop_pre_header
      _
    $region3: #{tpu_custom_call.1} parent=1 // loop_header
      %s16 = sphi 0, %s20
      %p17 = scmp.ge.s32.totalorder %s16, 4
      %s24 = sphi 0, %s24
      %s26 = sphi 0, %s24
      %s27 = sphi 0, %s26
      %s41 = sphi 0, %s27
      %s45 = sphi 0, %s45
      %s47 = sphi 0, %s45
      %s48 = sphi 0, %s47
      %s62 = sphi 0, %s48
      %s66 = sphi 0, %s66
      %s68 = sphi 0, %s66
      %s69 = sphi 0, %s68
      %s83 = sphi 0, %s69
      %s89 = sphi 0, %s91
      %s92 = sphi 0, %s89
      %s93 = sphi 0, %s92
      %s109 = sphi 0, %s93
    $region4: #{tpu_custom_call.1} parent=1 // loop_header_branch
      %19 = sbr.rel (%p17) target = $region8
    $region5: #{tpu_custom_call.1} parent=1 // loop_body
      %s21 = ssub.s32 %s16, 1
      %s22 = ssub.s32 %s16, 2
      %s23 = sadd.s32 %s16, 1
      %s25 = sadd.s32 %s24, 1
      %p28 = scmp.eq.s32.totalorder %s16, 1
      %p29 = scmp.ne.s32.totalorder %s24, %s26
      %p30 = scmp.eq.s32.totalorder %s16, 0
      %p31 = por %p29, %p30
      %p32 = scmp.ne.s32.totalorder %s24, %s26
      %p33 = scmp.eq.s32.totalorder %s21, 1
      %p34 = por %p32, %p33
      %p35 = scmp.ne.s32.totalorder %s26, %s27
      %p36 = scmp.eq.s32.totalorder %s21, 0
      %p37 = por %p35, %p36
      %p38 = scmp.ne.s32.totalorder %s26, %s27
      %p39 = scmp.eq.s32.totalorder %s22, 1
      %p40 = por %p38, %p39
      %p42 = scmp.ne.s32.totalorder %s27, %s41
      %p43 = scmp.eq.s32.totalorder %s22, 0
      %p44 = por %p42, %p43
      %s46 = sadd.s32 %s45, 1
      %p49 = scmp.eq.s32.totalorder %s16, 1
      %p50 = scmp.ne.s32.totalorder %s45, %s47
      %p51 = scmp.eq.s32.totalorder %s16, 0
      %p52 = por %p50, %p51
      %p53 = scmp.ne.s32.totalorder %s45, %s47
      %p54 = scmp.eq.s32.totalorder %s21, 1
      %p55 = por %p53, %p54
      %p56 = scmp.ne.s32.totalorder %s47, %s48
      %p57 = scmp.eq.s32.totalorder %s21, 0
      %p58 = por %p56, %p57
      %p59 = scmp.ne.s32.totalorder %s47, %s48
      %p60 = scmp.eq.s32.totalorder %s22, 1
      %p61 = por %p59, %p60
      %p63 = scmp.ne.s32.totalorder %s48, %s62
      %p64 = scmp.eq.s32.totalorder %s22, 0
      %p65 = por %p63, %p64
      %s67 = sadd.s32 %s66, 1
      %p70 = scmp.eq.s32.totalorder %s16, 1
      %p71 = scmp.ne.s32.totalorder %s66, %s68
      %p72 = scmp.eq.s32.totalorder %s16, 0
      %p73 = por %p71, %p72
      %p74 = scmp.ne.s32.totalorder %s66, %s68
      %p75 = scmp.eq.s32.totalorder %s21, 1
      %p76 = por %p74, %p75
      %p77 = scmp.ne.s32.totalorder %s68, %s69
      %p78 = scmp.eq.s32.totalorder %s21, 0
      %p79 = por %p77, %p78
      %p80 = scmp.ne.s32.totalorder %s68, %s69
      %p81 = scmp.eq.s32.totalorder %s22, 1
      %p82 = por %p80, %p81
      %p84 = scmp.ne.s32.totalorder %s69, %s83
      %p85 = scmp.eq.s32.totalorder %s22, 0
      %p86 = por %p84, %p85
      %s87 = ssub.s32 %s16, %s23
      %p88 = scmp.eq.s32.totalorder %s87, 0
      %s90 = sadd.s32 %s89, 1
      %s91 = scalar_select %p88, %s89, %s90
      %p94 = pneg %p88
      %p95 = scmp.eq.s32.totalorder %s16, 1
      %p96 = por %p94, %p95
      %p97 = scmp.ne.s32.totalorder %s89, %s92
      %p98 = scmp.eq.s32.totalorder %s16, 0
      %p99 = por %p97, %p98
      %p100 = scmp.ne.s32.totalorder %s89, %s92
      %p101 = scmp.eq.s32.totalorder %s21, 1
      %p102 = por %p100, %p101
      %p103 = scmp.ne.s32.totalorder %s92, %s93
      %p104 = scmp.eq.s32.totalorder %s21, 0
      %p105 = por %p103, %p104
      %p106 = scmp.ne.s32.totalorder %s92, %s93
      %p107 = scmp.eq.s32.totalorder %s22, 1
      %p108 = por %p106, %p107
      %p110 = scmp.ne.s32.totalorder %s93, %s109
      %p111 = scmp.eq.s32.totalorder %s22, 0
      %p112 = por %p110, %p111
      %p113 = scmp.le.s32.totalorder 1, %s16
      %p114 = scmp.lt.s32.totalorder %s16, 3
      %p115 = pnand %p113, %p114
      %p116 = pneg %p115
      // Predicated region
      $region9: #{tpu_custom_call.1} parent=5 // pred_check
        _
      $region10: #{tpu_custom_call.1} parent=5 // pred_check_branch
        %118 = sbr.rel (%p115) target = $region12
      $region11: #{tpu_custom_call.1} parent=5 // pred_region
        %s119 = ssub.s32 %s16, 1
        // Predicated region
        $region13: #{tpu_custom_call.1} parent=11 // pred_check
          %p120 = pneg %p37
        $region14: #{tpu_custom_call.1} parent=11 // pred_check_branch
          %122 = sbr.rel (%p120) target = $region16
        $region15: #{tpu_custom_call.1} parent=11 // pred_region
          _
        $region16: #{tpu_custom_call.1} parent=11 // pred_fallthru
          _
        // Predicated region
        $region17: #{tpu_custom_call.1} parent=11 // pred_check
          %p123 = pneg %p58
        $region18: #{tpu_custom_call.1} parent=11 // pred_check_branch
          %125 = sbr.rel (%p123) target = $region20
        $region19: #{tpu_custom_call.1} parent=11 // pred_region
          _
        $region20: #{tpu_custom_call.1} parent=11 // pred_fallthru
          _
        // Predicated region
        $region21: #{tpu_custom_call.1} parent=11 // pred_check
          %p126 = pneg %p79
        $region22: #{tpu_custom_call.1} parent=11 // pred_check_branch
          %128 = sbr.rel (%p126) target = $region24
        $region23: #{tpu_custom_call.1} parent=11 // pred_region
          _
        $region24: #{tpu_custom_call.1} parent=11 // pred_fallthru
          _
      $region12: #{tpu_custom_call.1} parent=5 // pred_fallthru
        _
      %p129 = scmp.lt.s32.totalorder %s16, 2
      // Predicated region
      $region25: #{tpu_custom_call.1} parent=5 // pred_check
        %p130 = pneg %p129
      $region26: #{tpu_custom_call.1} parent=5 // pred_check_branch
        %132 = sbr.rel (%p130) target = $region28
      $region27: #{tpu_custom_call.1} parent=5 // pred_region
        _
      $region28: #{tpu_custom_call.1} parent=5 // pred_fallthru
        _
      %p133 = scmp.le.s32.totalorder 1, %s16
      %p134 = scmp.lt.s32.totalorder %s16, 3
      %p135 = pnand %p133, %p134
      %p136 = pneg %p135
      // Predicated region
      $region29: #{tpu_custom_call.1} parent=5 // pred_check
        _
      $region30: #{tpu_custom_call.1} parent=5 // pred_check_branch
        %138 = sbr.rel (%p135) target = $region32
      $region31: #{tpu_custom_call.1} parent=5 // pred_region
        %s139 = ssub.s32 %s16, 1
        %p140 = pneg %p37
        %p141 = pneg %p34
        %p142 = pneg %p58
        %p143 = pneg %p55
        %p144 = pneg %p79
        %p145 = pneg %p76
        %p146 = pneg %p105
        %p147 = pneg %p102
        %s148 = sand.u32 %s92, 1
        %s149 = scalar_lea.sflag [#allocation6], %s148
        %s150 = sand.u32 %s92, 1
        %s151 = smul.addr %s150, 64
        %s152 = scalar_lea.vmem [#allocation5], %s151
        %s153 = smul.u32 8, %s21
        %p155 = scmp.eq.s32.totalorder %s21, 0
        // Predicated region
        $region33: #{tpu_custom_call.1} parent=31 // pred_check
          %p156 = pneg %p155
        $region34: #{tpu_custom_call.1} parent=31 // pred_check_branch
          %158 = sbr.rel (%p156) target = $region36
        $region35: #{tpu_custom_call.1} parent=31 // pred_region
          $region37: #{tpu_custom_call.1} parent=35
            #allocation7 [shape = 's32[1]{0}', space=sflag, size = 0x4, scoped, tag = 'scoped memory for tpu_custom_call.1']
            // Predicated region
            $region38: #{tpu_custom_call.1} parent=37 // pred_check
              _
            $region39: #{tpu_custom_call.1} parent=37 // pred_check_branch
              %160 = sbr.rel target = $region41
            $region40: #{tpu_custom_call.1} parent=37 // pred_region
              %161 = sst [smem:[#allocation10]] [#allocation9]
              %162 = sst [smem:[#allocation11]] [#allocation8]
            $region41: #{tpu_custom_call.1} parent=37 // pred_fallthru
              _
            %164 = shalt.err (0)
            %s166 = sshll.u32 [#allocation2], 4
            %s167 = int_to_ptr.vmem [resolvable:$true] %s166
            %169 = dma.hbm_to_vmem [thread:$0]  %s2, 2048, %s167, [#allocation7]
            %s170 = smul.u32 4, 32
            %s171 = smul.u32 %s170, 1
            %s172 = sshll.u32 %s171, 4
            %173 = dma.done [#allocation7], %s172
          $region42: #{tpu_custom_call.1} parent=35
            #allocation12 [shape = 's32[1]{0}', space=sflag, size = 0x4, scoped, tag = 'scoped memory for tpu_custom_call.1']
            // Predicated region
            $region43: #{tpu_custom_call.1} parent=42 // pred_check
              _
            $region44: #{tpu_custom_call.1} parent=42 // pred_check_branch
              %175 = sbr.rel target = $region46
            $region45: #{tpu_custom_call.1} parent=42 // pred_region
              %176 = sst [smem:[#allocation10]] [#allocation14]
              %177 = sst [smem:[#allocation11]] [#allocation13]
            $region46: #{tpu_custom_call.1} parent=42 // pred_fallthru
              _
            %179 = shalt.err (0)
            %s181 = sshll.u32 [#allocation3], 4
            %s182 = int_to_ptr.vmem [resolvable:$true] %s181
            %184 = dma.hbm_to_vmem [thread:$0]  %s3, 1024, %s182, [#allocation12]
            %s185 = smul.u32 4, 16
            %s186 = smul.u32 %s185, 1
            %s187 = sshll.u32 %s186, 4
            %188 = dma.done [#allocation12], %s187
          $region47: #{tpu_custom_call.1} parent=35
            #allocation15 [shape = 'u8[32768]{0}', space=vmem, size = 0x8000, scoped, tag = 'scoped memory for tpu_custom_call.1']
            #allocation16 [shape = 'u8[65536]{0}', space=vmem, size = 0x10000, scoped, tag = 'scoped memory for tpu_custom_call.1']
            #allocation17 [shape = 'u8[8192]{0}', space=vmem, size = 0x2000, scoped, tag = 'scoped memory for tpu_custom_call.1']
            $region48: #{tpu_custom_call.1} parent=47
              #allocation18 [shape = 's32[1]{0}', space=sflag, size = 0x4, scoped, tag = 'scoped memory for tpu_custom_call.1']
              // Predicated region
              $region49: #{tpu_custom_call.1} parent=48 // pred_check
                _
              $region50: #{tpu_custom_call.1} parent=48 // pred_check_branch
                %190 = sbr.rel target = $region52
              $region51: #{tpu_custom_call.1} parent=48 // pred_region
                %191 = sst [smem:[#allocation10]] [#allocation20]
                %192 = sst [smem:[#allocation11]] [#allocation19]
              $region52: #{tpu_custom_call.1} parent=48 // pred_fallthru
                _
              %194 = shalt.err (0)
              %s196 = sshll.u32 [#allocation15], 4
              %s197 = int_to_ptr.vmem [resolvable:$true] %s196
              %199 = dma.hbm_to_vmem [thread:$0]  %s0, 1024, %s197, [#allocation18]
              %s200 = smul.u32 8, 8
              %s201 = smul.u32 %s200, 1
              %s202 = sshll.u32 %s201, 4
              %203 = dma.done [#allocation18], %s202
            $region53: #{tpu_custom_call.1} parent=47
              #allocation21 [shape = 's32[1]{0}', space=sflag, size = 0x4, scoped, tag = 'scoped memory for tpu_custom_call.1']
              // Predicated region
              $region54: #{tpu_custom_call.1} parent=53 // pred_check
                _
              $region55: #{tpu_custom_call.1} parent=53 // pred_check_branch
                %205 = sbr.rel target = $region57
              $region56: #{tpu_custom_call.1} parent=53 // pred_region
                %206 = sst [smem:[#allocation10]] [#allocation23]
                %207 = sst [smem:[#allocation11]] [#allocation22]
              $region57: #{tpu_custom_call.1} parent=53 // pred_fallthru
                _
              %209 = shalt.err (0)
              %s211 = sshll.u32 [#allocation16], 4
              %s212 = int_to_ptr.vmem [resolvable:$true] %s211
              %214 = dma.hbm_to_vmem [thread:$0]  %s1, 2048, %s212, [#allocation21]
              %s215 = smul.u32 4, 32
              %s216 = smul.u32 %s215, 1
              %s217 = sshll.u32 %s216, 4
              %218 = dma.done [#allocation21], %s217
            %219 = vst [vmem:[#allocation17] sm:$0xff] 0.0
            %220 = vst [vmem:[#allocation17 + $0x8] sm:$0xff] 0.0
            %v221 = vld [vmem:[%s4] sm:$0x1]
            %v223 = vlaneseq
            %v224 = vshrl.u32 %v223, 7
            %v225 = vsub.s32 0, %v224
            %v226 = vrot.slane %v221, %v225
            %v228 = vld [vmem:[#allocation15] sm:$0xff]
            %229 = vst [vmem:[#allocation17] sm:$0xff] %v228
            %v230 = vld [vmem:[#allocation17] sm:$0xff]
            %v231 = vld [vmem:[#allocation17 + $0x8] sm:$0xff]
            %v232 = vpack.c.bf16 %v230, %v230
            %v233 = vpack.c.bf16 %v231, %v231
            %v234 = vld [vmem:[#allocation16] sm:$0xff]
            %v235 = vld [vmem:[#allocation16 + $0x8] sm:$0xff]
            %v236 = vld [vmem:[#allocation16 + $0x10] sm:$0xff]
            %v237 = vld [vmem:[#allocation16 + $0x18] sm:$0xff]
            %v238 = vld [vmem:[#allocation16 + $0x20] sm:$0xff]
            %v239 = vld [vmem:[#allocation16 + $0x28] sm:$0xff]
            %v240 = vld [vmem:[#allocation16 + $0x30] sm:$0xff]
            %v241 = vld [vmem:[#allocation16 + $0x38] sm:$0xff]
            %v242 = vld [vmem:[#allocation16 + $0x40] sm:$0xff]
            %v243 = vld [vmem:[#allocation16 + $0x48] sm:$0xff]
            %v244 = vld [vmem:[#allocation16 + $0x50] sm:$0xff]
            %v245 = vld [vmem:[#allocation16 + $0x58] sm:$0xff]
            %v246 = vld [vmem:[#allocation16 + $0x60] sm:$0xff]
            %v247 = vld [vmem:[#allocation16 + $0x68] sm:$0xff]
            %v248 = vld [vmem:[#allocation16 + $0x70] sm:$0xff]
            %v249 = vld [vmem:[#allocation16 + $0x78] sm:$0xff]
            %250 = vmatprep.subr.bf16.mxu0 0
            %251 = vmatpush1.bf16.msra.mxu0 %v234
            %252 = vmatprep.subr.bf16.mxu0 0
            %253 = vmatpush1.bf16.msra.mxu0 %v235
            %254 = vmatprep.subr.bf16.mxu0 0
            %255 = vmatpush1.bf16.msra.mxu0 %v236
            %256 = vmatprep.subr.bf16.mxu0 0
            %257 = vmatpush1.bf16.msra.mxu0 %v237
            %258 = vmatprep.subr.bf16.mxu0 0
            %259 = vmatpush1.bf16.msra.mxu0 %v238
            %260 = vmatprep.subr.bf16.mxu0 0
            %261 = vmatpush1.bf16.msra.mxu0 %v239
            %262 = vmatprep.subr.bf16.mxu0 0
            %263 = vmatpush1.bf16.msra.mxu0 %v240
            %264 = vmatprep.subr.bf16.mxu0 0
            %265 = vmatpush1.bf16.msra.mxu0 %v241
            %266 = vmatprep.subr.bf16.mxu0 0
            %267 = vmatpush1.bf16.msra.mxu0 %v242
            %268 = vmatprep.subr.bf16.mxu0 0
            %269 = vmatpush1.bf16.msra.mxu0 %v243
            %270 = vmatprep.subr.bf16.mxu0 0
            %271 = vmatpush1.bf16.msra.mxu0 %v244
            %272 = vmatprep.subr.bf16.mxu0 0
            %273 = vmatpush1.bf16.msra.mxu0 %v245
            %274 = vmatprep.subr.bf16.mxu0 0
            %275 = vmatpush1.bf16.msra.mxu0 %v246
            %276 = vmatprep.subr.bf16.mxu0 0
            %277 = vmatpush1.bf16.msra.mxu0 %v247
            %278 = vmatprep.subr.bf16.mxu0 0
            %279 = vmatpush1.bf16.msra.mxu0 %v248
            %280 = vmatprep.subr.bf16.mxu0 0
            %281 = vmatpush1.bf16.msra.mxu0 %v249
            %282 = vmatprep.mubr.bf16.mxu0 %v233
            %283 = vmatmul.mubr.bf16.gmra.mrb[0].mxu0 %v232
            %v284 = vpop.f32.mrb[0].mxu0
            %v285 = vadd.f32 %v226, %v284
            %v286 = vpop.f32.mrb[0].mxu0
            %v287 = vpop.f32.mrb[0].mxu0
            %v288 = vpop.f32.mrb[0].mxu0
            %289 = vdwg.mxu0
            %v290 = vtanh.pop %v285
            %291 = vst [vmem:[#allocation17 + $0x8] sm:$0xff] %v290
            %s292 = scalar_lea.vmem [#allocation15], 8
            %v293 = vld [vmem:[%s292] sm:$0xff]
            %294 = vst [vmem:[#allocation17] sm:$0xff] %v293
            %v295 = vld [vmem:[#allocation17] sm:$0xff]
            %v296 = vld [vmem:[#allocation17 + $0x8] sm:$0xff]
            %v297 = vpack.c.bf16 %v295, %v295
            %v298 = vpack.c.bf16 %v296, %v296
            %v299 = vld [vmem:[#allocation16] sm:$0xff]
            %v300 = vld [vmem:[#allocation16 + $0x8] sm:$0xff]
            %v301 = vld [vmem:[#allocation16 + $0x10] sm:$0xff]
            %v302 = vld [vmem:[#allocation16 + $0x18] sm:$0xff]
            %v303 = vld [vmem:[#allocation16 + $0x20] sm:$0xff]
            %v304 = vld [vmem:[#allocation16 + $0x28] sm:$0xff]
            %v305 = vld [vmem:[#allocation16 + $0x30] sm:$0xff]
            %v306 = vld [vmem:[#allocation16 + $0x38] sm:$0xff]
            %v307 = vld [vmem:[#allocation16 + $0x40] sm:$0xff]
            %v308 = vld [vmem:[#allocation16 + $0x48] sm:$0xff]
            %v309 = vld [vmem:[#allocation16 + $0x50] sm:$0xff]
            %v310 = vld [vmem:[#allocation16 + $0x58] sm:$0xff]
            %v311 = vld [vmem:[#allocation16 + $0x60] sm:$0xff]
            %v312 = vld [vmem:[#allocation16 + $0x68] sm:$0xff]
            %v313 = vld [vmem:[#allocation16 + $0x70] sm:$0xff]
            %v314 = vld [vmem:[#allocation16 + $0x78] sm:$0xff]
            %315 = vmatprep.subr.bf16.mxu0 0
            %316 = vmatpush1.bf16.msra.mxu0 %v299
            %317 = vmatprep.subr.bf16.mxu0 0
            %318 = vmatpush1.bf16.msra.mxu0 %v300
            %319 = vmatprep.subr.bf16.mxu0 0
            %320 = vmatpush1.bf16.msra.mxu0 %v301
            %321 = vmatprep.subr.bf16.mxu0 0
            %322 = vmatpush1.bf16.msra.mxu0 %v302
            %323 = vmatprep.subr.bf16.mxu0 0
            %324 = vmatpush1.bf16.msra.mxu0 %v303
            %325 = vmatprep.subr.bf16.mxu0 0
            %326 = vmatpush1.bf16.msra.mxu0 %v304
            %327 = vmatprep.subr.bf16.mxu0 0
            %328 = vmatpush1.bf16.msra.mxu0 %v305
            %329 = vmatprep.subr.bf16.mxu0 0
            %330 = vmatpush1.bf16.msra.mxu0 %v306
            %331 = vmatprep.subr.bf16.mxu0 0
            %332 = vmatpush1.bf16.msra.mxu0 %v307
            %333 = vmatprep.subr.bf16.mxu0 0
            %334 = vmatpush1.bf16.msra.mxu0 %v308
            %335 = vmatprep.subr.bf16.mxu0 0
            %336 = vmatpush1.bf16.msra.mxu0 %v309
            %337 = vmatprep.subr.bf16.mxu0 0
            %338 = vmatpush1.bf16.msra.mxu0 %v310
            %339 = vmatprep.subr.bf16.mxu0 0
            %340 = vmatpush1.bf16.msra.mxu0 %v311
            %341 = vmatprep.subr.bf16.mxu0 0
            %342 = vmatpush1.bf16.msra.mxu0 %v312
            %343 = vmatprep.subr.bf16.mxu0 0
            %344 = vmatpush1.bf16.msra.mxu0 %v313
            %345 = vmatprep.subr.bf16.mxu0 0
            %346 = vmatpush1.bf16.msra.mxu0 %v314
            %347 = vmatprep.mubr.bf16.mxu0 %v298
            %348 = vmatmul.mubr.bf16.gmra.mrb[0].mxu0 %v297
            %v349 = vpop.f32.mrb[0].mxu0
            %v350 = vadd.f32 %v226, %v349
            %v351 = vpop.f32.mrb[0].mxu0
            %v352 = vpop.f32.mrb[0].mxu0
            %v353 = vpop.f32.mrb[0].mxu0
            %354 = vdwg.mxu0
            %v355 = vtanh.pop %v350
            %356 = vst [vmem:[#allocation17 + $0x8] sm:$0xff] %v355
            %s357 = scalar_lea.vmem [#allocation15], 16
            %v358 = vld [vmem:[%s357] sm:$0xff]
            %359 = vst [vmem:[#allocation17] sm:$0xff] %v358
            %v360 = vld [vmem:[#allocation17] sm:$0xff]
            %v361 = vld [vmem:[#allocation17 + $0x8] sm:$0xff]
            %v362 = vpack.c.bf16 %v360, %v360
            %v363 = vpack.c.bf16 %v361, %v361
            %v364 = vld [vmem:[#allocation16] sm:$0xff]
            %v365 = vld [vmem:[#allocation16 + $0x8] sm:$0xff]
            %v366 = vld [vmem:[#allocation16 + $0x10] sm:$0xff]
            %v367 = vld [vmem:[#allocation16 + $0x18] sm:$0xff]
            %v368 = vld [vmem:[#allocation16 + $0x20] sm:$0xff]
            %v369 = vld [vmem:[#allocation16 + $0x28] sm:$0xff]
            %v370 = vld [vmem:[#allocation16 + $0x30] sm:$0xff]
            %v371 = vld [vmem:[#allocation16 + $0x38] sm:$0xff]
            %v372 = vld [vmem:[#allocation16 + $0x40] sm:$0xff]
            %v373 = vld [vmem:[#allocation16 + $0x48] sm:$0xff]
            %v374 = vld [vmem:[#allocation16 + $0x50] sm:$0xff]
            %v375 = vld [vmem:[#allocation16 + $0x58] sm:$0xff]
            %v376 = vld [vmem:[#allocation16 + $0x60] sm:$0xff]
            %v377 = vld [vmem:[#allocation16 + $0x68] sm:$0xff]
            %v378 = vld [vmem:[#allocation16 + $0x70] sm:$0xff]
            %v379 = vld [vmem:[#allocation16 + $0x78] sm:$0xff]
            %380 = vmatprep.subr.bf16.mxu0 0
            %381 = vmatpush1.bf16.msra.mxu0 %v364
            %382 = vmatprep.subr.bf16.mxu0 0
            %383 = vmatpush1.bf16.msra.mxu0 %v365
            %384 = vmatprep.subr.bf16.mxu0 0
            %385 = vmatpush1.bf16.msra.mxu0 %v366
            %386 = vmatprep.subr.bf16.mxu0 0
            %387 = vmatpush1.bf16.msra.mxu0 %v367
            %388 = vmatprep.subr.bf16.mxu0 0
            %389 = vmatpush1.bf16.msra.mxu0 %v368
            %390 = vmatprep.subr.bf16.mxu0 0
            %391 = vmatpush1.bf16.msra.mxu0 %v369
            %392 = vmatprep.subr.bf16.mxu0 0
            %393 = vmatpush1.bf16.msra.mxu0 %v370
            %394 = vmatprep.subr.bf16.mxu0 0
            %395 = vmatpush1.bf16.msra.mxu0 %v371
            %396 = vmatprep.subr.bf16.mxu0 0
            %397 = vmatpush1.bf16.msra.mxu0 %v372
            %398 = vmatprep.subr.bf16.mxu0 0
            %399 = vmatpush1.bf16.msra.mxu0 %v373
            %400 = vmatprep.subr.bf16.mxu0 0
            %401 = vmatpush1.bf16.msra.mxu0 %v374
            %402 = vmatprep.subr.bf16.mxu0 0
            %403 = vmatpush1.bf16.msra.mxu0 %v375
            %404 = vmatprep.subr.bf16.mxu0 0
            %405 = vmatpush1.bf16.msra.mxu0 %v376
            %406 = vmatprep.subr.bf16.mxu0 0
            %407 = vmatpush1.bf16.msra.mxu0 %v377
            %408 = vmatprep.subr.bf16.mxu0 0
            %409 = vmatpush1.bf16.msra.mxu0 %v378
            %410 = vmatprep.subr.bf16.mxu0 0
            %411 = vmatpush1.bf16.msra.mxu0 %v379
            %412 = vmatprep.mubr.bf16.mxu0 %v363
            %413 = vmatmul.mubr.bf16.gmra.mrb[0].mxu0 %v362
            %v414 = vpop.f32.mrb[0].mxu0
            %v415 = vadd.f32 %v226, %v414
            %v416 = vpop.f32.mrb[0].mxu0
            %v417 = vpop.f32.mrb[0].mxu0
            %v418 = vpop.f32.mrb[0].mxu0
            %419 = vdwg.mxu0
            %v420 = vtanh.pop %v415
            %421 = vst [vmem:[#allocation17 + $0x8] sm:$0xff] %v420
            %s422 = scalar_lea.vmem [#allocation15], 24
            %v423 = vld [vmem:[%s422] sm:$0xff]
            %424 = vst [vmem:[#allocation17] sm:$0xff] %v423
            %v425 = vld [vmem:[#allocation17] sm:$0xff]
            %v426 = vld [vmem:[#allocation17 + $0x8] sm:$0xff]
            %v427 = vpack.c.bf16 %v425, %v425
            %v428 = vpack.c.bf16 %v426, %v426
            %v429 = vld [vmem:[#allocation16] sm:$0xff]
            %v430 = vld [vmem:[#allocation16 + $0x8] sm:$0xff]
            %v431 = vld [vmem:[#allocation16 + $0x10] sm:$0xff]
            %v432 = vld [vmem:[#allocation16 + $0x18] sm:$0xff]
            %v433 = vld [vmem:[#allocation16 + $0x20] sm:$0xff]
            %v434 = vld [vmem:[#allocation16 + $0x28] sm:$0xff]
            %v435 = vld [vmem:[#allocation16 + $0x30] sm:$0xff]
            %v436 = vld [vmem:[#allocation16 + $0x38] sm:$0xff]
            %v437 = vld [vmem:[#allocation16 + $0x40] sm:$0xff]
            %v438 = vld [vmem:[#allocation16 + $0x48] sm:$0xff]
            %v439 = vld [vmem:[#allocation16 + $0x50] sm:$0xff]
            %v440 = vld [vmem:[#allocation16 + $0x58] sm:$0xff]
            %v441 = vld [vmem:[#allocation16 + $0x60] sm:$0xff]
            %v442 = vld [vmem:[#allocation16 + $0x68] sm:$0xff]
            %v443 = vld [vmem:[#allocation16 + $0x70] sm:$0xff]
            %v444 = vld [vmem:[#allocation16 + $0x78] sm:$0xff]
            %445 = vmatprep.subr.bf16.mxu0 0
            %446 = vmatpush1.bf16.msra.mxu0 %v429
            %447 = vmatprep.subr.bf16.mxu0 0
            %448 = vmatpush1.bf16.msra.mxu0 %v430
            %449 = vmatprep.subr.bf16.mxu0 0
            %450 = vmatpush1.bf16.msra.mxu0 %v431
            %451 = vmatprep.subr.bf16.mxu0 0
            %452 = vmatpush1.bf16.msra.mxu0 %v432
            %453 = vmatprep.subr.bf16.mxu0 0
            %454 = vmatpush1.bf16.msra.mxu0 %v433
            %455 = vmatprep.subr.bf16.mxu0 0
            %456 = vmatpush1.bf16.msra.mxu0 %v434
            %457 = vmatprep.subr.bf16.mxu0 0
            %458 = vmatpush1.bf16.msra.mxu0 %v435
            %459 = vmatprep.subr.bf16.mxu0 0
            %460 = vmatpush1.bf16.msra.mxu0 %v436
            %461 = vmatprep.subr.bf16.mxu0 0
            %462 = vmatpush1.bf16.msra.mxu0 %v437
            %463 = vmatprep.subr.bf16.mxu0 0
            %464 = vmatpush1.bf16.msra.mxu0 %v438
            %465 = vmatprep.subr.bf16.mxu0 0
            %466 = vmatpush1.bf16.msra.mxu0 %v439
            %467 = vmatprep.subr.bf16.mxu0 0
            %468 = vmatpush1.bf16.msra.mxu0 %v440
            %469 = vmatprep.subr.bf16.mxu0 0
            %470 = vmatpush1.bf16.msra.mxu0 %v441
            %471 = vmatprep.subr.bf16.mxu0 0
            %472 = vmatpush1.bf16.msra.mxu0 %v442
            %473 = vmatprep.subr.bf16.mxu0 0
            %474 = vmatpush1.bf16.msra.mxu0 %v443
            %475 = vmatprep.subr.bf16.mxu0 0
            %476 = vmatpush1.bf16.msra.mxu0 %v444
            %477 = vmatprep.mubr.bf16.mxu0 %v428
            %478 = vmatmul.mubr.bf16.gmra.mrb[0].mxu0 %v427
            %v479 = vpop.f32.mrb[0].mxu0
            %v480 = vadd.f32 %v226, %v479
            %v481 = vpop.f32.mrb[0].mxu0
            %v482 = vpop.f32.mrb[0].mxu0
            %v483 = vpop.f32.mrb[0].mxu0
            %484 = vdwg.mxu0
            %v485 = vtanh.pop %v480
            %486 = vst [vmem:[#allocation17 + $0x8] sm:$0xff] %v485
            %s487 = scalar_lea.vmem [#allocation15], 32
            %v488 = vld [vmem:[%s487] sm:$0xff]
            %489 = vst [vmem:[#allocation17] sm:$0xff] %v488
            %v490 = vld [vmem:[#allocation17] sm:$0xff]
            %v491 = vld [vmem:[#allocation17 + $0x8] sm:$0xff]
            %v492 = vpack.c.bf16 %v490, %v490
            %v493 = vpack.c.bf16 %v491, %v491
            %v494 = vld [vmem:[#allocation16] sm:$0xff]
            %v495 = vld [vmem:[#allocation16 + $0x8] sm:$0xff]
            %v496 = vld [vmem:[#allocation16 + $0x10] sm:$0xff]
            %v497 = vld [vmem:[#allocation16 + $0x18] sm:$0xff]
            %v498 = vld [vmem:[#allocation16 + $0x20] sm:$0xff]
            %v499 = vld [vmem:[#allocation16 + $0x28] sm:$0xff]
            %v500 = vld [vmem:[#allocation16 + $0x30] sm:$0xff]
            %v501 = vld [vmem:[#allocation16 + $0x38] sm:$0xff]
            %v502 = vld [vmem:[#allocation16 + $0x40] sm:$0xff]
            %v503 = vld [vmem:[#allocation16 + $0x48] sm:$0xff]
            %v504 = vld [vmem:[#allocation16 + $0x50] sm:$0xff]
            %v505 = vld [vmem:[#allocation16 + $0x58] sm:$0xff]
            %v506 = vld [vmem:[#allocation16 + $0x60] sm:$0xff]
            %v507 = vld [vmem:[#allocation16 + $0x68] sm:$0xff]
            %v508 = vld [vmem:[#allocation16 + $0x70] sm:$0xff]
            %v509 = vld [vmem:[#allocation16 + $0x78] sm:$0xff]
            %510 = vmatprep.subr.bf16.mxu0 0
            %511 = vmatpush1.bf16.msra.mxu0 %v494
            %512 = vmatprep.subr.bf16.mxu0 0
            %513 = vmatpush1.bf16.msra.mxu0 %v495
            %514 = vmatprep.subr.bf16.mxu0 0
            %515 = vmatpush1.bf16.msra.mxu0 %v496
            %516 = vmatprep.subr.bf16.mxu0 0
            %517 = vmatpush1.bf16.msra.mxu0 %v497
            %518 = vmatprep.subr.bf16.mxu0 0
            %519 = vmatpush1.bf16.msra.mxu0 %v498
            %520 = vmatprep.subr.bf16.mxu0 0
            %521 = vmatpush1.bf16.msra.mxu0 %v499
            %522 = vmatprep.subr.bf16.mxu0 0
            %523 = vmatpush1.bf16.msra.mxu0 %v500
            %524 = vmatprep.subr.bf16.mxu0 0
            %525 = vmatpush1.bf16.msra.mxu0 %v501
            %526 = vmatprep.subr.bf16.mxu0 0
            %527 = vmatpush1.bf16.msra.mxu0 %v502
            %528 = vmatprep.subr.bf16.mxu0 0
            %529 = vmatpush1.bf16.msra.mxu0 %v503
            %530 = vmatprep.subr.bf16.mxu0 0
            %531 = vmatpush1.bf16.msra.mxu0 %v504
            %532 = vmatprep.subr.bf16.mxu0 0
            %533 = vmatpush1.bf16.msra.mxu0 %v505
            %534 = vmatprep.subr.bf16.mxu0 0
            %535 = vmatpush1.bf16.msra.mxu0 %v506
            %536 = vmatprep.subr.bf16.mxu0 0
            %537 = vmatpush1.bf16.msra.mxu0 %v507
            %538 = vmatprep.subr.bf16.mxu0 0
            %539 = vmatpush1.bf16.msra.mxu0 %v508
            %540 = vmatprep.subr.bf16.mxu0 0
            %541 = vmatpush1.bf16.msra.mxu0 %v509
            %542 = vmatprep.mubr.bf16.mxu0 %v493
            %543 = vmatmul.mubr.bf16.gmra.mrb[0].mxu0 %v492
            %v544 = vpop.f32.mrb[0].mxu0
            %v545 = vadd.f32 %v226, %v544
            %v546 = vpop.f32.mrb[0].mxu0
            %v547 = vpop.f32.mrb[0].mxu0
            %v548 = vpop.f32.mrb[0].mxu0
            %549 = vdwg.mxu0
            %v550 = vtanh.pop %v545
            %551 = vst [vmem:[#allocation17 + $0x8] sm:$0xff] %v550
            %s552 = scalar_lea.vmem [#allocation15], 40
            %v553 = vld [vmem:[%s552] sm:$0xff]
            %554 = vst [vmem:[#allocation17] sm:$0xff] %v553
            %v555 = vld [vmem:[#allocation17] sm:$0xff]
            %v556 = vld [vmem:[#allocation17 + $0x8] sm:$0xff]
            %v557 = vpack.c.bf16 %v555, %v555
            %v558 = vpack.c.bf16 %v556, %v556
            %v559 = vld [vmem:[#allocation16] sm:$0xff]
            %v560 = vld [vmem:[#allocation16 + $0x8] sm:$0xff]
            %v561 = vld [vmem:[#allocation16 + $0x10] sm:$0xff]
            %v562 = vld [vmem:[#allocation16 + $0x18] sm:$0xff]
            %v563 = vld [vmem:[#allocation16 + $0x20] sm:$0xff]
            %v564 = vld [vmem:[#allocation16 + $0x28] sm:$0xff]
            %v565 = vld [vmem:[#allocation16 + $0x30] sm:$0xff]
            %v566 = vld [vmem:[#allocation16 + $0x38] sm:$0xff]
            %v567 = vld [vmem:[#allocation16 + $0x40] sm:$0xff]
            %v568 = vld [vmem:[#allocation16 + $0x48] sm:$0xff]
            %v569 = vld [vmem:[#allocation16 + $0x50] sm:$0xff]
            %v570 = vld [vmem:[#allocation16 + $0x58] sm:$0xff]
            %v571 = vld [vmem:[#allocation16 + $0x60] sm:$0xff]
            %v572 = vld [vmem:[#allocation16 + $0x68] sm:$0xff]
            %v573 = vld [vmem:[#allocation16 + $0x70] sm:$0xff]
            %v574 = vld [vmem:[#allocation16 + $0x78] sm:$0xff]
            %575 = vmatprep.subr.bf16.mxu0 0
            %576 = vmatpush1.bf16.msra.mxu0 %v559
            %577 = vmatprep.subr.bf16.mxu0 0
            %578 = vmatpush1.bf16.msra.mxu0 %v560
            %579 = vmatprep.subr.bf16.mxu0 0
            %580 = vmatpush1.bf16.msra.mxu0 %v561
            %581 = vmatprep.subr.bf16.mxu0 0
            %582 = vmatpush1.bf16.msra.mxu0 %v562
            %583 = vmatprep.subr.bf16.mxu0 0
            %584 = vmatpush1.bf16.msra.mxu0 %v563
            %585 = vmatprep.subr.bf16.mxu0 0
            %586 = vmatpush1.bf16.msra.mxu0 %v564
            %587 = vmatprep.subr.bf16.mxu0 0
            %588 = vmatpush1.bf16.msra.mxu0 %v565
            %589 = vmatprep.subr.bf16.mxu0 0
            %590 = vmatpush1.bf16.msra.mxu0 %v566
            %591 = vmatprep.subr.bf16.mxu0 0
            %592 = vmatpush1.bf16.msra.mxu0 %v567
            %593 = vmatprep.subr.bf16.mxu0 0
            %594 = vmatpush1.bf16.msra.mxu0 %v568
            %595 = vmatprep.subr.bf16.mxu0 0
            %596 = vmatpush1.bf16.msra.mxu0 %v569
            %597 = vmatprep.subr.bf16.mxu0 0
            %598 = vmatpush1.bf16.msra.mxu0 %v570
            %599 = vmatprep.subr.bf16.mxu0 0
            %600 = vmatpush1.bf16.msra.mxu0 %v571
            %601 = vmatprep.subr.bf16.mxu0 0
            %602 = vmatpush1.bf16.msra.mxu0 %v572
            %603 = vmatprep.subr.bf16.mxu0 0
            %604 = vmatpush1.bf16.msra.mxu0 %v573
            %605 = vmatprep.subr.bf16.mxu0 0
            %606 = vmatpush1.bf16.msra.mxu0 %v574
            %607 = vmatprep.mubr.bf16.mxu0 %v558
            %608 = vmatmul.mubr.bf16.gmra.mrb[0].mxu0 %v557
            %v609 = vpop.f32.mrb[0].mxu0
            %v610 = vadd.f32 %v226, %v609
            %v611 = vpop.f32.mrb[0].mxu0
            %v612 = vpop.f32.mrb[0].mxu0
            %v613 = vpop.f32.mrb[0].mxu0
            %614 = vdwg.mxu0
            %v615 = vtanh.pop %v610
            %616 = vst [vmem:[#allocation17 + $0x8] sm:$0xff] %v615
            %s617 = scalar_lea.vmem [#allocation15], 48
            %v618 = vld [vmem:[%s617] sm:$0xff]
            %619 = vst [vmem:[#allocation17] sm:$0xff] %v618
            %v620 = vld [vmem:[#allocation17] sm:$0xff]
            %v621 = vld [vmem:[#allocation17 + $0x8] sm:$0xff]
            %v622 = vpack.c.bf16 %v620, %v620
            %v623 = vpack.c.bf16 %v621, %v621
            %v624 = vld [vmem:[#allocation16] sm:$0xff]
            %v625 = vld [vmem:[#allocation16 + $0x8] sm:$0xff]
            %v626 = vld [vmem:[#allocation16 + $0x10] sm:$0xff]
            %v627 = vld [vmem:[#allocation16 + $0x18] sm:$0xff]
            %v628 = vld [vmem:[#allocation16 + $0x20] sm:$0xff]
            %v629 = vld [vmem:[#allocation16 + $0x28] sm:$0xff]
            %v630 = vld [vmem:[#allocation16 + $0x30] sm:$0xff]
            %v631 = vld [vmem:[#allocation16 + $0x38] sm:$0xff]
            %v632 = vld [vmem:[#allocation16 + $0x40] sm:$0xff]
            %v633 = vld [vmem:[#allocation16 + $0x48] sm:$0xff]
            %v634 = vld [vmem:[#allocation16 + $0x50] sm:$0xff]
            %v635 = vld [vmem:[#allocation16 + $0x58] sm:$0xff]
            %v636 = vld [vmem:[#allocation16 + $0x60] sm:$0xff]
            %v637 = vld [vmem:[#allocation16 + $0x68] sm:$0xff]
            %v638 = vld [vmem:[#allocation16 + $0x70] sm:$0xff]
            %v639 = vld [vmem:[#allocation16 + $0x78] sm:$0xff]
            %640 = vmatprep.subr.bf16.mxu0 0
            %641 = vmatpush1.bf16.msra.mxu0 %v624
            %642 = vmatprep.subr.bf16.mxu0 0
            %643 = vmatpush1.bf16.msra.mxu0 %v625
            %644 = vmatprep.subr.bf16.mxu0 0
            %645 = vmatpush1.bf16.msra.mxu0 %v626
            %646 = vmatprep.subr.bf16.mxu0 0
            %647 = vmatpush1.bf16.msra.mxu0 %v627
            %648 = vmatprep.subr.bf16.mxu0 0
            %649 = vmatpush1.bf16.msra.mxu0 %v628
            %650 = vmatprep.subr.bf16.mxu0 0
            %651 = vmatpush1.bf16.msra.mxu0 %v629
            %652 = vmatprep.subr.bf16.mxu0 0
            %653 = vmatpush1.bf16.msra.mxu0 %v630
            %654 = vmatprep.subr.bf16.mxu0 0
            %655 = vmatpush1.bf16.msra.mxu0 %v631
            %656 = vmatprep.subr.bf16.mxu0 0
            %657 = vmatpush1.bf16.msra.mxu0 %v632
            %658 = vmatprep.subr.bf16.mxu0 0
            %659 = vmatpush1.bf16.msra.mxu0 %v633
            %660 = vmatprep.subr.bf16.mxu0 0
            %661 = vmatpush1.bf16.msra.mxu0 %v634
            %662 = vmatprep.subr.bf16.mxu0 0
            %663 = vmatpush1.bf16.msra.mxu0 %v635
            %664 = vmatprep.subr.bf16.mxu0 0
            %665 = vmatpush1.bf16.msra.mxu0 %v636
            %666 = vmatprep.subr.bf16.mxu0 0
            %667 = vmatpush1.bf16.msra.mxu0 %v637
            %668 = vmatprep.subr.bf16.mxu0 0
            %669 = vmatpush1.bf16.msra.mxu0 %v638
            %670 = vmatprep.subr.bf16.mxu0 0
            %671 = vmatpush1.bf16.msra.mxu0 %v639
            %672 = vmatprep.mubr.bf16.mxu0 %v623
            %673 = vmatmul.mubr.bf16.gmra.mrb[0].mxu0 %v622
            %v674 = vpop.f32.mrb[0].mxu0
            %v675 = vadd.f32 %v226, %v674
            %v676 = vpop.f32.mrb[0].mxu0
            %v677 = vpop.f32.mrb[0].mxu0
            %v678 = vpop.f32.mrb[0].mxu0
            %679 = vdwg.mxu0
            %v680 = vtanh.pop %v675
            %681 = vst [vmem:[#allocation17 + $0x8] sm:$0xff] %v680
            %s682 = scalar_lea.vmem [#allocation15], 56
            %v683 = vld [vmem:[%s682] sm:$0xff]
            %684 = vst [vmem:[#allocation17] sm:$0xff] %v683
            %v685 = vld [vmem:[#allocation17] sm:$0xff]
            %v686 = vld [vmem:[#allocation17 + $0x8] sm:$0xff]
            %v687 = vpack.c.bf16 %v685, %v685
            %v688 = vpack.c.bf16 %v686, %v686
            %v689 = vld [vmem:[#allocation16] sm:$0xff]
            %v690 = vld [vmem:[#allocation16 + $0x8] sm:$0xff]
            %v691 = vld [vmem:[#allocation16 + $0x10] sm:$0xff]
            %v692 = vld [vmem:[#allocation16 + $0x18] sm:$0xff]
            %v693 = vld [vmem:[#allocation16 + $0x20] sm:$0xff]
            %v694 = vld [vmem:[#allocation16 + $0x28] sm:$0xff]
            %v695 = vld [vmem:[#allocation16 + $0x30] sm:$0xff]
            %v696 = vld [vmem:[#allocation16 + $0x38] sm:$0xff]
            %v697 = vld [vmem:[#allocation16 + $0x40] sm:$0xff]
            %v698 = vld [vmem:[#allocation16 + $0x48] sm:$0xff]
            %v699 = vld [vmem:[#allocation16 + $0x50] sm:$0xff]
            %v700 = vld [vmem:[#allocation16 + $0x58] sm:$0xff]
            %v701 = vld [vmem:[#allocation16 + $0x60] sm:$0xff]
            %v702 = vld [vmem:[#allocation16 + $0x68] sm:$0xff]
            %v703 = vld [vmem:[#allocation16 + $0x70] sm:$0xff]
            %v704 = vld [vmem:[#allocation16 + $0x78] sm:$0xff]
            %705 = vmatprep.subr.bf16.mxu0 0
            %706 = vmatpush1.bf16.msra.mxu0 %v689
            %707 = vmatprep.subr.bf16.mxu0 0
            %708 = vmatpush1.bf16.msra.mxu0 %v690
            %709 = vmatprep.subr.bf16.mxu0 0
            %710 = vmatpush1.bf16.msra.mxu0 %v691
            %711 = vmatprep.subr.bf16.mxu0 0
            %712 = vmatpush1.bf16.msra.mxu0 %v692
            %713 = vmatprep.subr.bf16.mxu0 0
            %714 = vmatpush1.bf16.msra.mxu0 %v693
            %715 = vmatprep.subr.bf16.mxu0 0
            %716 = vmatpush1.bf16.msra.mxu0 %v694
            %717 = vmatprep.subr.bf16.mxu0 0
            %718 = vmatpush1.bf16.msra.mxu0 %v695
            %719 = vmatprep.subr.bf16.mxu0 0
            %720 = vmatpush1.bf16.msra.mxu0 %v696
            %721 = vmatprep.subr.bf16.mxu0 0
            %722 = vmatpush1.bf16.msra.mxu0 %v697
            %723 = vmatprep.subr.bf16.mxu0 0
            %724 = vmatpush1.bf16.msra.mxu0 %v698
            %725 = vmatprep.subr.bf16.mxu0 0
            %726 = vmatpush1.bf16.msra.mxu0 %v699
            %727 = vmatprep.subr.bf16.mxu0 0
            %728 = vmatpush1.bf16.msra.mxu0 %v700
            %729 = vmatprep.subr.bf16.mxu0 0
            %730 = vmatpush1.bf16.msra.mxu0 %v701
            %731 = vmatprep.subr.bf16.mxu0 0
            %732 = vmatpush1.bf16.msra.mxu0 %v702
            %733 = vmatprep.subr.bf16.mxu0 0
            %734 = vmatpush1.bf16.msra.mxu0 %v703
            %735 = vmatprep.subr.bf16.mxu0 0
            %736 = vmatpush1.bf16.msra.mxu0 %v704
            %737 = vmatprep.mubr.bf16.mxu0 %v688
            %738 = vmatmul.mubr.bf16.gmra.mrb[0].mxu0 %v687
            %v739 = vpop.f32.mrb[0].mxu0
            %v740 = vadd.f32 %v226, %v739
            %v741 = vpop.f32.mrb[0].mxu0
            %v742 = vpop.f32.mrb[0].mxu0
            %v743 = vpop.f32.mrb[0].mxu0
            %744 = vdwg.mxu0
            %v745 = vtanh.pop %v740
            %746 = vst [vmem:[#allocation17 + $0x8] sm:$0xff] %v745
            %747 = vst [vmem:[#allocation4] sm:$0xff] 0.0
            %v748 = vld [vmem:[#allocation17 + $0x8] sm:$0xff]
            %749 = vst [vmem:[#allocation4 + $0x8] sm:$0xff] %v748
        $region36: #{tpu_custom_call.1} parent=31 // pred_fallthru
          _
        %v750 = vld [vmem:[%s5] sm:$0x1]
        %v752 = vlaneseq
        %v753 = vshrl.u32 %v752, 7
        %v754 = vsub.s32 0, %v753
        %v755 = vrot.slane %v750, %v754
        %v757 = vld [vmem:[%s6] sm:$0x1]
        %v759 = vlaneseq
        %v760 = vshrl.u32 %v759, 7
        %v761 = vsub.s32 0, %v760
        %v762 = vrot.slane %v757, %v761
        %v764 = vld [vmem:[#allocation4] sm:$0xff]
        %v765 = vld [vmem:[#allocation4 + $0x8] sm:$0xff]
        %v766 = vpack.c.bf16 %v764, %v764
        %v767 = vpack.c.bf16 %v765, %v765
        %v768 = vld [vmem:[#allocation2] sm:$0xff]
        %v769 = vld [vmem:[#allocation2 + $0x8] sm:$0xff]
        %v770 = vld [vmem:[#allocation2 + $0x10] sm:$0xff]
        %v771 = vld [vmem:[#allocation2 + $0x18] sm:$0xff]
        %v772 = vld [vmem:[#allocation2 + $0x20] sm:$0xff]
        %v773 = vld [vmem:[#allocation2 + $0x28] sm:$0xff]
        %v774 = vld [vmem:[#allocation2 + $0x30] sm:$0xff]
        %v775 = vld [vmem:[#allocation2 + $0x38] sm:$0xff]
        %v776 = vld [vmem:[#allocation2 + $0x40] sm:$0xff]
        %v777 = vld [vmem:[#allocation2 + $0x48] sm:$0xff]
        %v778 = vld [vmem:[#allocation2 + $0x50] sm:$0xff]
        %v779 = vld [vmem:[#allocation2 + $0x58] sm:$0xff]
        %v780 = vld [vmem:[#allocation2 + $0x60] sm:$0xff]
        %v781 = vld [vmem:[#allocation2 + $0x68] sm:$0xff]
        %v782 = vld [vmem:[#allocation2 + $0x70] sm:$0xff]
        %v783 = vld [vmem:[#allocation2 + $0x78] sm:$0xff]
        %784 = vmatprep.subr.bf16.mxu0 0
        %785 = vmatpush1.bf16.msra.mxu0 %v768
        %786 = vmatprep.subr.bf16.mxu0 0
        %787 = vmatpush1.bf16.msra.mxu0 %v769
        %788 = vmatprep.subr.bf16.mxu0 0
        %789 = vmatpush1.bf16.msra.mxu0 %v770
        %790 = vmatprep.subr.bf16.mxu0 0
        %791 = vmatpush1.bf16.msra.mxu0 %v771
        %792 = vmatprep.subr.bf16.mxu0 0
        %793 = vmatpush1.bf16.msra.mxu0 %v772
        %794 = vmatprep.subr.bf16.mxu0 0
        %795 = vmatpush1.bf16.msra.mxu0 %v773
        %796 = vmatprep.subr.bf16.mxu0 0
        %797 = vmatpush1.bf16.msra.mxu0 %v774
        %798 = vmatprep.subr.bf16.mxu0 0
        %799 = vmatpush1.bf16.msra.mxu0 %v775
        %800 = vmatprep.subr.bf16.mxu0 0
        %801 = vmatpush1.bf16.msra.mxu0 %v776
        %802 = vmatprep.subr.bf16.mxu0 0
        %803 = vmatpush1.bf16.msra.mxu0 %v777
        %804 = vmatprep.subr.bf16.mxu0 0
        %805 = vmatpush1.bf16.msra.mxu0 %v778
        %806 = vmatprep.subr.bf16.mxu0 0
        %807 = vmatpush1.bf16.msra.mxu0 %v779
        %808 = vmatprep.subr.bf16.mxu0 0
        %809 = vmatpush1.bf16.msra.mxu0 %v780
        %810 = vmatprep.subr.bf16.mxu0 0
        %811 = vmatpush1.bf16.msra.mxu0 %v781
        %812 = vmatprep.subr.bf16.mxu0 0
        %813 = vmatpush1.bf16.msra.mxu0 %v782
        %814 = vmatprep.subr.bf16.mxu0 0
        %815 = vmatpush1.bf16.msra.mxu0 %v783
        %816 = vmatprep.mubr.bf16.mxu0 %v767
        %817 = vmatmul.mubr.bf16.gmra.mrb[0].mxu0 %v766
        %v818 = vpop.f32.mrb[0].mxu0
        %v819 = vadd.f32 %v755, %v818
        %v820 = vpop.f32.mrb[0].mxu0
        %v821 = vpop.f32.mrb[0].mxu0
        %v822 = vpop.f32.mrb[0].mxu0
        %823 = vdwg.mxu0
        %v824 = vtanh.pop %v819
        %v825 = vpack.c.bf16 %v824, %v824
        %v826 = vld [vmem:[#allocation3] sm:$0xff]
        %v827 = vld [vmem:[#allocation3 + $0x8] sm:$0xff]
        %v828 = vld [vmem:[#allocation3 + $0x10] sm:$0xff]
        %v829 = vld [vmem:[#allocation3 + $0x18] sm:$0xff]
        %v830 = vld [vmem:[#allocation3 + $0x20] sm:$0xff]
        %v831 = vld [vmem:[#allocation3 + $0x28] sm:$0xff]
        %v832 = vld [vmem:[#allocation3 + $0x30] sm:$0xff]
        %v833 = vld [vmem:[#allocation3 + $0x38] sm:$0xff]
        %834 = vmatprep.subr.bf16.mxu0 0
        %835 = vmatpush1.bf16.msra.mxu0 %v826
        %836 = vmatprep.subr.bf16.mxu0 0
        %837 = vmatpush1.bf16.msra.mxu0 %v827
        %838 = vmatprep.subr.bf16.mxu0 0
        %839 = vmatpush1.bf16.msra.mxu0 %v828
        %840 = vmatprep.subr.bf16.mxu0 0
        %841 = vmatpush1.bf16.msra.mxu0 %v829
        %842 = vmatprep.subr.bf16.mxu0 0
        %843 = vmatpush1.bf16.msra.mxu0 %v830
        %844 = vmatprep.subr.bf16.mxu0 0
        %845 = vmatpush1.bf16.msra.mxu0 %v831
        %846 = vmatprep.subr.bf16.mxu0 0
        %847 = vmatpush1.bf16.msra.mxu0 %v832
        %848 = vmatprep.subr.bf16.mxu0 0
        %849 = vmatpush1.bf16.msra.mxu0 %v833
        %850 = vmatprep.subr.bf16.mxu0 0
        %851 = vmatpush1.bf16.msra.mxu0 0
        %852 = vmatprep.subr.bf16.mxu0 0
        %853 = vmatpush1.bf16.msra.mxu0 0
        %854 = vmatprep.subr.bf16.mxu0 0
        %855 = vmatpush1.bf16.msra.mxu0 0
        %856 = vmatprep.subr.bf16.mxu0 0
        %857 = vmatpush1.bf16.msra.mxu0 0
        %858 = vmatprep.subr.bf16.mxu0 0
        %859 = vmatpush1.bf16.msra.mxu0 0
        %860 = vmatprep.subr.bf16.mxu0 0
        %861 = vmatpush1.bf16.msra.mxu0 0
        %862 = vmatprep.subr.bf16.mxu0 0
        %863 = vmatpush1.bf16.msra.mxu0 0
        %864 = vmatprep.subr.bf16.mxu0 0
        %865 = vmatpush1.bf16.msra.mxu0 0
        %866 = vmatprep.mubr.bf16.mxu0 0
        %867 = vmatmul.mubr.bf16.gmra.mrb[0].mxu0 %v825
        %v868 = vpop.f32.mrb[0].mxu0
        %v869 = vadd.f32 %v762, %v868
        %v870 = vpop.f32.mrb[0].mxu0
        %v871 = vpop.f32.mrb[0].mxu0
        %v872 = vpop.f32.mrb[0].mxu0
        %873 = vdwg.mxu0
        %874 = vmax.xlane.f32.xlu0 %v869
        %v875 = vpop.xlane.xlu0 %874
        %v876 = vsub.f32 %v869, %v875
        %v877 = vmul.f32 %v876, 1.442695
        %v878 = vpow.pop %v877
        %879 = vadd.xlane.f32.xlu0 %v878
        %v880 = vpop.xlane.xlu0 %879
        %v881 = vrcp.pop %v880
        %v882 = vmul.f32 %v878, %v881
        %883 = vst [vmem:[#allocation4] sm:$0xff] %v882
        %884 = vst [vmem:[#allocation4 + $0x8] sm:$0xff] %v824
        %885 = vst [vmem:[%s152] sm:$0xff] %v882
        %v886 = vld [vmem:[#allocation4] sm:$0xff]
        %v887 = vld [vmem:[#allocation4 + $0x8] sm:$0xff]
        %v888 = vpack.c.bf16 %v886, %v886
        %v889 = vpack.c.bf16 %v887, %v887
        %v890 = vld [vmem:[#allocation2] sm:$0xff]
        %v891 = vld [vmem:[#allocation2 + $0x8] sm:$0xff]
        %v892 = vld [vmem:[#allocation2 + $0x10] sm:$0xff]
        %v893 = vld [vmem:[#allocation2 + $0x18] sm:$0xff]
        %v894 = vld [vmem:[#allocation2 + $0x20] sm:$0xff]
        %v895 = vld [vmem:[#allocation2 + $0x28] sm:$0xff]
        %v896 = vld [vmem:[#allocation2 + $0x30] sm:$0xff]
        %v897 = vld [vmem:[#allocation2 + $0x38] sm:$0xff]
        %v898 = vld [vmem:[#allocation2 + $0x40] sm:$0xff]
        %v899 = vld [vmem:[#allocation2 + $0x48] sm:$0xff]
        %v900 = vld [vmem:[#allocation2 + $0x50] sm:$0xff]
        %v901 = vld [vmem:[#allocation2 + $0x58] sm:$0xff]
        %v902 = vld [vmem:[#allocation2 + $0x60] sm:$0xff]
        %v903 = vld [vmem:[#allocation2 + $0x68] sm:$0xff]
        %v904 = vld [vmem:[#allocation2 + $0x70] sm:$0xff]
        %v905 = vld [vmem:[#allocation2 + $0x78] sm:$0xff]
        %906 = vmatprep.subr.bf16.mxu0 0
        %907 = vmatpush1.bf16.msra.mxu0 %v890
        %908 = vmatprep.subr.bf16.mxu0 0
        %909 = vmatpush1.bf16.msra.mxu0 %v891
        %910 = vmatprep.subr.bf16.mxu0 0
        %911 = vmatpush1.bf16.msra.mxu0 %v892
        %912 = vmatprep.subr.bf16.mxu0 0
        %913 = vmatpush1.bf16.msra.mxu0 %v893
        %914 = vmatprep.subr.bf16.mxu0 0
        %915 = vmatpush1.bf16.msra.mxu0 %v894
        %916 = vmatprep.subr.bf16.mxu0 0
        %917 = vmatpush1.bf16.msra.mxu0 %v895
        %918 = vmatprep.subr.bf16.mxu0 0
        %919 = vmatpush1.bf16.msra.mxu0 %v896
        %920 = vmatprep.subr.bf16.mxu0 0
        %921 = vmatpush1.bf16.msra.mxu0 %v897
        %922 = vmatprep.subr.bf16.mxu0 0
        %923 = vmatpush1.bf16.msra.mxu0 %v898
        %924 = vmatprep.subr.bf16.mxu0 0
        %925 = vmatpush1.bf16.msra.mxu0 %v899
        %926 = vmatprep.subr.bf16.mxu0 0
        %927 = vmatpush1.bf16.msra.mxu0 %v900
        %928 = vmatprep.subr.bf16.mxu0 0
        %929 = vmatpush1.bf16.msra.mxu0 %v901
        %930 = vmatprep.subr.bf16.mxu0 0
        %931 = vmatpush1.bf16.msra.mxu0 %v902
        %932 = vmatprep.subr.bf16.mxu0 0
        %933 = vmatpush1.bf16.msra.mxu0 %v903
        %934 = vmatprep.subr.bf16.mxu0 0
        %935 = vmatpush1.bf16.msra.mxu0 %v904
        %936 = vmatprep.subr.bf16.mxu0 0
        %937 = vmatpush1.bf16.msra.mxu0 %v905
        %938 = vmatprep.mubr.bf16.mxu0 %v889
        %939 = vmatmul.mubr.bf16.gmra.mrb[0].mxu0 %v888
        %v940 = vpop.f32.mrb[0].mxu0
        %v941 = vadd.f32 %v755, %v940
        %v942 = vpop.f32.mrb[0].mxu0
        %v943 = vpop.f32.mrb[0].mxu0
        %v944 = vpop.f32.mrb[0].mxu0
        %945 = vdwg.mxu0
        %v946 = vtanh.pop %v941
        %v947 = vpack.c.bf16 %v946, %v946
        %v948 = vld [vmem:[#allocation3] sm:$0xff]
        %v949 = vld [vmem:[#allocation3 + $0x8] sm:$0xff]
        %v950 = vld [vmem:[#allocation3 + $0x10] sm:$0xff]
        %v951 = vld [vmem:[#allocation3 + $0x18] sm:$0xff]
        %v952 = vld [vmem:[#allocation3 + $0x20] sm:$0xff]
        %v953 = vld [vmem:[#allocation3 + $0x28] sm:$0xff]
        %v954 = vld [vmem:[#allocation3 + $0x30] sm:$0xff]
        %v955 = vld [vmem:[#allocation3 + $0x38] sm:$0xff]
        %956 = vmatprep.subr.bf16.mxu0 0
        %957 = vmatpush1.bf16.msra.mxu0 %v948
        %958 = vmatprep.subr.bf16.mxu0 0
        %959 = vmatpush1.bf16.msra.mxu0 %v949
        %960 = vmatprep.subr.bf16.mxu0 0
        %961 = vmatpush1.bf16.msra.mxu0 %v950
        %962 = vmatprep.subr.bf16.mxu0 0
        %963 = vmatpush1.bf16.msra.mxu0 %v951
        %964 = vmatprep.subr.bf16.mxu0 0
        %965 = vmatpush1.bf16.msra.mxu0 %v952
        %966 = vmatprep.subr.bf16.mxu0 0
        %967 = vmatpush1.bf16.msra.mxu0 %v953
        %968 = vmatprep.subr.bf16.mxu0 0
        %969 = vmatpush1.bf16.msra.mxu0 %v954
        %970 = vmatprep.subr.bf16.mxu0 0
        %971 = vmatpush1.bf16.msra.mxu0 %v955
        %972 = vmatprep.subr.bf16.mxu0 0
        %973 = vmatpush1.bf16.msra.mxu0 0
        %974 = vmatprep.subr.bf16.mxu0 0
        %975 = vmatpush1.bf16.msra.mxu0 0
        %976 = vmatprep.subr.bf16.mxu0 0
        %977 = vmatpush1.bf16.msra.mxu0 0
        %978 = vmatprep.subr.bf16.mxu0 0
        %979 = vmatpush1.bf16.msra.mxu0 0
        %980 = vmatprep.subr.bf16.mxu0 0
        %981 = vmatpush1.bf16.msra.mxu0 0
        %982 = vmatprep.subr.bf16.mxu0 0
        %983 = vmatpush1.bf16.msra.mxu0 0
        %984 = vmatprep.subr.bf16.mxu0 0
        %985 = vmatpush1.bf16.msra.mxu0 0
        %986 = vmatprep.subr.bf16.mxu0 0
        %987 = vmatpush1.bf16.msra.mxu0 0
        %988 = vmatprep.mubr.bf16.mxu0 0
        %989 = vmatmul.mubr.bf16.gmra.mrb[0].mxu0 %v947
        %v990 = vpop.f32.mrb[0].mxu0
        %v991 = vadd.f32 %v762, %v990
        %v992 = vpop.f32.mrb[0].mxu0
        %v993 = vpop.f32.mrb[0].mxu0
        %v994 = vpop.f32.mrb[0].mxu0
        %995 = vdwg.mxu0
        %996 = vmax.xlane.f32.xlu0 %v991
        %v997 = vpop.xlane.xlu0 %996
        %v998 = vsub.f32 %v991, %v997
        %v999 = vmul.f32 %v998, 1.442695
        %v1000 = vpow.pop %v999
        %1001 = vadd.xlane.f32.xlu0 %v1000
        %v1002 = vpop.xlane.xlu0 %1001
        %v1003 = vrcp.pop %v1002
        %v1004 = vmul.f32 %v1000, %v1003
        %1005 = vst [vmem:[#allocation4] sm:$0xff] %v1004
        %1006 = vst [vmem:[#allocation4 + $0x8] sm:$0xff] %v946
        %s1007 = scalar_lea.vmem %s152, 8 [#allocation5]
        %1008 = vst [vmem:[%s1007] sm:$0xff] %v1004
        %v1009 = vld [vmem:[#allocation4] sm:$0xff]
        %v1010 = vld [vmem:[#allocation4 + $0x8] sm:$0xff]
        %v1011 = vpack.c.bf16 %v1009, %v1009
        %v1012 = vpack.c.bf16 %v1010, %v1010
        %v1013 = vld [vmem:[#allocation2] sm:$0xff]
        %v1014 = vld [vmem:[#allocation2 + $0x8] sm:$0xff]
        %v1015 = vld [vmem:[#allocation2 + $0x10] sm:$0xff]
        %v1016 = vld [vmem:[#allocation2 + $0x18] sm:$0xff]
        %v1017 = vld [vmem:[#allocation2 + $0x20] sm:$0xff]
        %v1018 = vld [vmem:[#allocation2 + $0x28] sm:$0xff]
        %v1019 = vld [vmem:[#allocation2 + $0x30] sm:$0xff]
        %v1020 = vld [vmem:[#allocation2 + $0x38] sm:$0xff]
        %v1021 = vld [vmem:[#allocation2 + $0x40] sm:$0xff]
        %v1022 = vld [vmem:[#allocation2 + $0x48] sm:$0xff]
        %v1023 = vld [vmem:[#allocation2 + $0x50] sm:$0xff]
        %v1024 = vld [vmem:[#allocation2 + $0x58] sm:$0xff]
        %v1025 = vld [vmem:[#allocation2 + $0x60] sm:$0xff]
        %v1026 = vld [vmem:[#allocation2 + $0x68] sm:$0xff]
        %v1027 = vld [vmem:[#allocation2 + $0x70] sm:$0xff]
        %v1028 = vld [vmem:[#allocation2 + $0x78] sm:$0xff]
        %1029 = vmatprep.subr.bf16.mxu0 0
        %1030 = vmatpush1.bf16.msra.mxu0 %v1013
        %1031 = vmatprep.subr.bf16.mxu0 0
        %1032 = vmatpush1.bf16.msra.mxu0 %v1014
        %1033 = vmatprep.subr.bf16.mxu0 0
        %1034 = vmatpush1.bf16.msra.mxu0 %v1015
        %1035 = vmatprep.subr.bf16.mxu0 0
        %1036 = vmatpush1.bf16.msra.mxu0 %v1016
        %1037 = vmatprep.subr.bf16.mxu0 0
        %1038 = vmatpush1.bf16.msra.mxu0 %v1017
        %1039 = vmatprep.subr.bf16.mxu0 0
        %1040 = vmatpush1.bf16.msra.mxu0 %v1018
        %1041 = vmatprep.subr.bf16.mxu0 0
        %1042 = vmatpush1.bf16.msra.mxu0 %v1019
        %1043 = vmatprep.subr.bf16.mxu0 0
        %1044 = vmatpush1.bf16.msra.mxu0 %v1020
        %1045 = vmatprep.subr.bf16.mxu0 0
        %1046 = vmatpush1.bf16.msra.mxu0 %v1021
        %1047 = vmatprep.subr.bf16.mxu0 0
        %1048 = vmatpush1.bf16.msra.mxu0 %v1022
        %1049 = vmatprep.subr.bf16.mxu0 0
        %1050 = vmatpush1.bf16.msra.mxu0 %v1023
        %1051 = vmatprep.subr.bf16.mxu0 0
        %1052 = vmatpush1.bf16.msra.mxu0 %v1024
        %1053 = vmatprep.subr.bf16.mxu0 0
        %1054 = vmatpush1.bf16.msra.mxu0 %v1025
        %1055 = vmatprep.subr.bf16.mxu0 0
        %1056 = vmatpush1.bf16.msra.mxu0 %v1026
        %1057 = vmatprep.subr.bf16.mxu0 0
        %1058 = vmatpush1.bf16.msra.mxu0 %v1027
        %1059 = vmatprep.subr.bf16.mxu0 0
        %1060 = vmatpush1.bf16.msra.mxu0 %v1028
        %1061 = vmatprep.mubr.bf16.mxu0 %v1012
        %1062 = vmatmul.mubr.bf16.gmra.mrb[0].mxu0 %v1011
        %v1063 = vpop.f32.mrb[0].mxu0
        %v1064 = vadd.f32 %v755, %v1063
        %v1065 = vpop.f32.mrb[0].mxu0
        %v1066 = vpop.f32.mrb[0].mxu0
        %v1067 = vpop.f32.mrb[0].mxu0
        %1068 = vdwg.mxu0
        %v1069 = vtanh.pop %v1064
        %v1070 = vpack.c.bf16 %v1069, %v1069
        %v1071 = vld [vmem:[#allocation3] sm:$0xff]
        %v1072 = vld [vmem:[#allocation3 + $0x8] sm:$0xff]
        %v1073 = vld [vmem:[#allocation3 + $0x10] sm:$0xff]
        %v1074 = vld [vmem:[#allocation3 + $0x18] sm:$0xff]
        %v1075 = vld [vmem:[#allocation3 + $0x20] sm:$0xff]
        %v1076 = vld [vmem:[#allocation3 + $0x28] sm:$0xff]
        %v1077 = vld [vmem:[#allocation3 + $0x30] sm:$0xff]
        %v1078 = vld [vmem:[#allocation3 + $0x38] sm:$0xff]
        %1079 = vmatprep.subr.bf16.mxu0 0
        %1080 = vmatpush1.bf16.msra.mxu0 %v1071
        %1081 = vmatprep.subr.bf16.mxu0 0
        %1082 = vmatpush1.bf16.msra.mxu0 %v1072
        %1083 = vmatprep.subr.bf16.mxu0 0
        %1084 = vmatpush1.bf16.msra.mxu0 %v1073
        %1085 = vmatprep.subr.bf16.mxu0 0
        %1086 = vmatpush1.bf16.msra.mxu0 %v1074
        %1087 = vmatprep.subr.bf16.mxu0 0
        %1088 = vmatpush1.bf16.msra.mxu0 %v1075
        %1089 = vmatprep.subr.bf16.mxu0 0
        %1090 = vmatpush1.bf16.msra.mxu0 %v1076
        %1091 = vmatprep.subr.bf16.mxu0 0
        %1092 = vmatpush1.bf16.msra.mxu0 %v1077
        %1093 = vmatprep.subr.bf16.mxu0 0
        %1094 = vmatpush1.bf16.msra.mxu0 %v1078
        %1095 = vmatprep.subr.bf16.mxu0 0
        %1096 = vmatpush1.bf16.msra.mxu0 0
        %1097 = vmatprep.subr.bf16.mxu0 0
        %1098 = vmatpush1.bf16.msra.mxu0 0
        %1099 = vmatprep.subr.bf16.mxu0 0
        %1100 = vmatpush1.bf16.msra.mxu0 0
        %1101 = vmatprep.subr.bf16.mxu0 0
        %1102 = vmatpush1.bf16.msra.mxu0 0
        %1103 = vmatprep.subr.bf16.mxu0 0
        %1104 = vmatpush1.bf16.msra.mxu0 0
        %1105 = vmatprep.subr.bf16.mxu0 0
        %1106 = vmatpush1.bf16.msra.mxu0 0
        %1107 = vmatprep.subr.bf16.mxu0 0
        %1108 = vmatpush1.bf16.msra.mxu0 0
        %1109 = vmatprep.subr.bf16.mxu0 0
        %1110 = vmatpush1.bf16.msra.mxu0 0
        %1111 = vmatprep.mubr.bf16.mxu0 0
        %1112 = vmatmul.mubr.bf16.gmra.mrb[0].mxu0 %v1070
        %v1113 = vpop.f32.mrb[0].mxu0
        %v1114 = vadd.f32 %v762, %v1113
        %v1115 = vpop.f32.mrb[0].mxu0
        %v1116 = vpop.f32.mrb[0].mxu0
        %v1117 = vpop.f32.mrb[0].mxu0
        %1118 = vdwg.mxu0
        %1119 = vmax.xlane.f32.xlu0 %v1114
        %v1120 = vpop.xlane.xlu0 %1119
        %v1121 = vsub.f32 %v1114, %v1120
        %v1122 = vmul.f32 %v1121, 1.442695
        %v1123 = vpow.pop %v1122
        %1124 = vadd.xlane.f32.xlu0 %v1123
        %v1125 = vpop.xlane.xlu0 %1124
        %v1126 = vrcp.pop %v1125
        %v1127 = vmul.f32 %v1123, %v1126
        %1128 = vst [vmem:[#allocation4] sm:$0xff] %v1127
        %1129 = vst [vmem:[#allocation4 + $0x8] sm:$0xff] %v1069
        %s1130 = scalar_lea.vmem %s152, 16 [#allocation5]
        %1131 = vst [vmem:[%s1130] sm:$0xff] %v1127
        %v1132 = vld [vmem:[#allocation4] sm:$0xff]
        %v1133 = vld [vmem:[#allocation4 + $0x8] sm:$0xff]
        %v1134 = vpack.c.bf16 %v1132, %v1132
        %v1135 = vpack.c.bf16 %v1133, %v1133
        %v1136 = vld [vmem:[#allocation2] sm:$0xff]
        %v1137 = vld [vmem:[#allocation2 + $0x8] sm:$0xff]
        %v1138 = vld [vmem:[#allocation2 + $0x10] sm:$0xff]
        %v1139 = vld [vmem:[#allocation2 + $0x18] sm:$0xff]
        %v1140 = vld [vmem:[#allocation2 + $0x20] sm:$0xff]
        %v1141 = vld [vmem:[#allocation2 + $0x28] sm:$0xff]
        %v1142 = vld [vmem:[#allocation2 + $0x30] sm:$0xff]
        %v1143 = vld [vmem:[#allocation2 + $0x38] sm:$0xff]
        %v1144 = vld [vmem:[#allocation2 + $0x40] sm:$0xff]
        %v1145 = vld [vmem:[#allocation2 + $0x48] sm:$0xff]
        %v1146 = vld [vmem:[#allocation2 + $0x50] sm:$0xff]
        %v1147 = vld [vmem:[#allocation2 + $0x58] sm:$0xff]
        %v1148 = vld [vmem:[#allocation2 + $0x60] sm:$0xff]
        %v1149 = vld [vmem:[#allocation2 + $0x68] sm:$0xff]
        %v1150 = vld [vmem:[#allocation2 + $0x70] sm:$0xff]
        %v1151 = vld [vmem:[#allocation2 + $0x78] sm:$0xff]
        %1152 = vmatprep.subr.bf16.mxu0 0
        %1153 = vmatpush1.bf16.msra.mxu0 %v1136
        %1154 = vmatprep.subr.bf16.mxu0 0
        %1155 = vmatpush1.bf16.msra.mxu0 %v1137
        %1156 = vmatprep.subr.bf16.mxu0 0
        %1157 = vmatpush1.bf16.msra.mxu0 %v1138
        %1158 = vmatprep.subr.bf16.mxu0 0
        %1159 = vmatpush1.bf16.msra.mxu0 %v1139
        %1160 = vmatprep.subr.bf16.mxu0 0
        %1161 = vmatpush1.bf16.msra.mxu0 %v1140
        %1162 = vmatprep.subr.bf16.mxu0 0
        %1163 = vmatpush1.bf16.msra.mxu0 %v1141
        %1164 = vmatprep.subr.bf16.mxu0 0
        %1165 = vmatpush1.bf16.msra.mxu0 %v1142
        %1166 = vmatprep.subr.bf16.mxu0 0
        %1167 = vmatpush1.bf16.msra.mxu0 %v1143
        %1168 = vmatprep.subr.bf16.mxu0 0
        %1169 = vmatpush1.bf16.msra.mxu0 %v1144
        %1170 = vmatprep.subr.bf16.mxu0 0
        %1171 = vmatpush1.bf16.msra.mxu0 %v1145
        %1172 = vmatprep.subr.bf16.mxu0 0
        %1173 = vmatpush1.bf16.msra.mxu0 %v1146
        %1174 = vmatprep.subr.bf16.mxu0 0
        %1175 = vmatpush1.bf16.msra.mxu0 %v1147
        %1176 = vmatprep.subr.bf16.mxu0 0
        %1177 = vmatpush1.bf16.msra.mxu0 %v1148
        %1178 = vmatprep.subr.bf16.mxu0 0
        %1179 = vmatpush1.bf16.msra.mxu0 %v1149
        %1180 = vmatprep.subr.bf16.mxu0 0
        %1181 = vmatpush1.bf16.msra.mxu0 %v1150
        %1182 = vmatprep.subr.bf16.mxu0 0
        %1183 = vmatpush1.bf16.msra.mxu0 %v1151
        %1184 = vmatprep.mubr.bf16.mxu0 %v1135
        %1185 = vmatmul.mubr.bf16.gmra.mrb[0].mxu0 %v1134
        %v1186 = vpop.f32.mrb[0].mxu0
        %v1187 = vadd.f32 %v755, %v1186
        %v1188 = vpop.f32.mrb[0].mxu0
        %v1189 = vpop.f32.mrb[0].mxu0
        %v1190 = vpop.f32.mrb[0].mxu0
        %1191 = vdwg.mxu0
        %v1192 = vtanh.pop %v1187
        %v1193 = vpack.c.bf16 %v1192, %v1192
        %v1194 = vld [vmem:[#allocation3] sm:$0xff]
        %v1195 = vld [vmem:[#allocation3 + $0x8] sm:$0xff]
        %v1196 = vld [vmem:[#allocation3 + $0x10] sm:$0xff]
        %v1197 = vld [vmem:[#allocation3 + $0x18] sm:$0xff]
        %v1198 = vld [vmem:[#allocation3 + $0x20] sm:$0xff]
        %v1199 = vld [vmem:[#allocation3 + $0x28] sm:$0xff]
        %v1200 = vld [vmem:[#allocation3 + $0x30] sm:$0xff]
        %v1201 = vld [vmem:[#allocation3 + $0x38] sm:$0xff]
        %1202 = vmatprep.subr.bf16.mxu0 0
        %1203 = vmatpush1.bf16.msra.mxu0 %v1194
        %1204 = vmatprep.subr.bf16.mxu0 0
        %1205 = vmatpush1.bf16.msra.mxu0 %v1195
        %1206 = vmatprep.subr.bf16.mxu0 0
        %1207 = vmatpush1.bf16.msra.mxu0 %v1196
        %1208 = vmatprep.subr.bf16.mxu0 0
        %1209 = vmatpush1.bf16.msra.mxu0 %v1197
        %1210 = vmatprep.subr.bf16.mxu0 0
        %1211 = vmatpush1.bf16.msra.mxu0 %v1198
        %1212 = vmatprep.subr.bf16.mxu0 0
        %1213 = vmatpush1.bf16.msra.mxu0 %v1199
        %1214 = vmatprep.subr.bf16.mxu0 0
        %1215 = vmatpush1.bf16.msra.mxu0 %v1200
        %1216 = vmatprep.subr.bf16.mxu0 0
        %1217 = vmatpush1.bf16.msra.mxu0 %v1201
        %1218 = vmatprep.subr.bf16.mxu0 0
        %1219 = vmatpush1.bf16.msra.mxu0 0
        %1220 = vmatprep.subr.bf16.mxu0 0
        %1221 = vmatpush1.bf16.msra.mxu0 0
        %1222 = vmatprep.subr.bf16.mxu0 0
        %1223 = vmatpush1.bf16.msra.mxu0 0
        %1224 = vmatprep.subr.bf16.mxu0 0
        %1225 = vmatpush1.bf16.msra.mxu0 0
        %1226 = vmatprep.subr.bf16.mxu0 0
        %1227 = vmatpush1.bf16.msra.mxu0 0
        %1228 = vmatprep.subr.bf16.mxu0 0
        %1229 = vmatpush1.bf16.msra.mxu0 0
        %1230 = vmatprep.subr.bf16.mxu0 0
        %1231 = vmatpush1.bf16.msra.mxu0 0
        %1232 = vmatprep.subr.bf16.mxu0 0
        %1233 = vmatpush1.bf16.msra.mxu0 0
        %1234 = vmatprep.mubr.bf16.mxu0 0
        %1235 = vmatmul.mubr.bf16.gmra.mrb[0].mxu0 %v1193
        %v1236 = vpop.f32.mrb[0].mxu0
        %v1237 = vadd.f32 %v762, %v1236
        %v1238 = vpop.f32.mrb[0].mxu0
        %v1239 = vpop.f32.mrb[0].mxu0
        %v1240 = vpop.f32.mrb[0].mxu0
        %1241 = vdwg.mxu0
        %1242 = vmax.xlane.f32.xlu0 %v1237
        %v1243 = vpop.xlane.xlu0 %1242
        %v1244 = vsub.f32 %v1237, %v1243
        %v1245 = vmul.f32 %v1244, 1.442695
        %v1246 = vpow.pop %v1245
        %1247 = vadd.xlane.f32.xlu0 %v1246
        %v1248 = vpop.xlane.xlu0 %1247
        %v1249 = vrcp.pop %v1248
        %v1250 = vmul.f32 %v1246, %v1249
        %1251 = vst [vmem:[#allocation4] sm:$0xff] %v1250
        %1252 = vst [vmem:[#allocation4 + $0x8] sm:$0xff] %v1192
        %s1253 = scalar_lea.vmem %s152, 24 [#allocation5]
        %1254 = vst [vmem:[%s1253] sm:$0xff] %v1250
        %v1255 = vld [vmem:[#allocation4] sm:$0xff]
        %v1256 = vld [vmem:[#allocation4 + $0x8] sm:$0xff]
        %v1257 = vpack.c.bf16 %v1255, %v1255
        %v1258 = vpack.c.bf16 %v1256, %v1256
        %v1259 = vld [vmem:[#allocation2] sm:$0xff]
        %v1260 = vld [vmem:[#allocation2 + $0x8] sm:$0xff]
        %v1261 = vld [vmem:[#allocation2 + $0x10] sm:$0xff]
        %v1262 = vld [vmem:[#allocation2 + $0x18] sm:$0xff]
        %v1263 = vld [vmem:[#allocation2 + $0x20] sm:$0xff]
        %v1264 = vld [vmem:[#allocation2 + $0x28] sm:$0xff]
        %v1265 = vld [vmem:[#allocation2 + $0x30] sm:$0xff]
        %v1266 = vld [vmem:[#allocation2 + $0x38] sm:$0xff]
        %v1267 = vld [vmem:[#allocation2 + $0x40] sm:$0xff]
        %v1268 = vld [vmem:[#allocation2 + $0x48] sm:$0xff]
        %v1269 = vld [vmem:[#allocation2 + $0x50] sm:$0xff]
        %v1270 = vld [vmem:[#allocation2 + $0x58] sm:$0xff]
        %v1271 = vld [vmem:[#allocation2 + $0x60] sm:$0xff]
        %v1272 = vld [vmem:[#allocation2 + $0x68] sm:$0xff]
        %v1273 = vld [vmem:[#allocation2 + $0x70] sm:$0xff]
        %v1274 = vld [vmem:[#allocation2 + $0x78] sm:$0xff]
        %1275 = vmatprep.subr.bf16.mxu0 0
        %1276 = vmatpush1.bf16.msra.mxu0 %v1259
        %1277 = vmatprep.subr.bf16.mxu0 0
        %1278 = vmatpush1.bf16.msra.mxu0 %v1260
        %1279 = vmatprep.subr.bf16.mxu0 0
        %1280 = vmatpush1.bf16.msra.mxu0 %v1261
        %1281 = vmatprep.subr.bf16.mxu0 0
        %1282 = vmatpush1.bf16.msra.mxu0 %v1262
        %1283 = vmatprep.subr.bf16.mxu0 0
        %1284 = vmatpush1.bf16.msra.mxu0 %v1263
        %1285 = vmatprep.subr.bf16.mxu0 0
        %1286 = vmatpush1.bf16.msra.mxu0 %v1264
        %1287 = vmatprep.subr.bf16.mxu0 0
        %1288 = vmatpush1.bf16.msra.mxu0 %v1265
        %1289 = vmatprep.subr.bf16.mxu0 0
        %1290 = vmatpush1.bf16.msra.mxu0 %v1266
        %1291 = vmatprep.subr.bf16.mxu0 0
        %1292 = vmatpush1.bf16.msra.mxu0 %v1267
        %1293 = vmatprep.subr.bf16.mxu0 0
        %1294 = vmatpush1.bf16.msra.mxu0 %v1268
        %1295 = vmatprep.subr.bf16.mxu0 0
        %1296 = vmatpush1.bf16.msra.mxu0 %v1269
        %1297 = vmatprep.subr.bf16.mxu0 0
        %1298 = vmatpush1.bf16.msra.mxu0 %v1270
        %1299 = vmatprep.subr.bf16.mxu0 0
        %1300 = vmatpush1.bf16.msra.mxu0 %v1271
        %1301 = vmatprep.subr.bf16.mxu0 0
        %1302 = vmatpush1.bf16.msra.mxu0 %v1272
        %1303 = vmatprep.subr.bf16.mxu0 0
        %1304 = vmatpush1.bf16.msra.mxu0 %v1273
        %1305 = vmatprep.subr.bf16.mxu0 0
        %1306 = vmatpush1.bf16.msra.mxu0 %v1274
        %1307 = vmatprep.mubr.bf16.mxu0 %v1258
        %1308 = vmatmul.mubr.bf16.gmra.mrb[0].mxu0 %v1257
        %v1309 = vpop.f32.mrb[0].mxu0
        %v1310 = vadd.f32 %v755, %v1309
        %v1311 = vpop.f32.mrb[0].mxu0
        %v1312 = vpop.f32.mrb[0].mxu0
        %v1313 = vpop.f32.mrb[0].mxu0
        %1314 = vdwg.mxu0
        %v1315 = vtanh.pop %v1310
        %v1316 = vpack.c.bf16 %v1315, %v1315
        %v1317 = vld [vmem:[#allocation3] sm:$0xff]
        %v1318 = vld [vmem:[#allocation3 + $0x8] sm:$0xff]
        %v1319 = vld [vmem:[#allocation3 + $0x10] sm:$0xff]
        %v1320 = vld [vmem:[#allocation3 + $0x18] sm:$0xff]
        %v1321 = vld [vmem:[#allocation3 + $0x20] sm:$0xff]
        %v1322 = vld [vmem:[#allocation3 + $0x28] sm:$0xff]
        %v1323 = vld [vmem:[#allocation3 + $0x30] sm:$0xff]
        %v1324 = vld [vmem:[#allocation3 + $0x38] sm:$0xff]
        %1325 = vmatprep.subr.bf16.mxu0 0
        %1326 = vmatpush1.bf16.msra.mxu0 %v1317
        %1327 = vmatprep.subr.bf16.mxu0 0
        %1328 = vmatpush1.bf16.msra.mxu0 %v1318
        %1329 = vmatprep.subr.bf16.mxu0 0
        %1330 = vmatpush1.bf16.msra.mxu0 %v1319
        %1331 = vmatprep.subr.bf16.mxu0 0
        %1332 = vmatpush1.bf16.msra.mxu0 %v1320
        %1333 = vmatprep.subr.bf16.mxu0 0
        %1334 = vmatpush1.bf16.msra.mxu0 %v1321
        %1335 = vmatprep.subr.bf16.mxu0 0
        %1336 = vmatpush1.bf16.msra.mxu0 %v1322
        %1337 = vmatprep.subr.bf16.mxu0 0
        %1338 = vmatpush1.bf16.msra.mxu0 %v1323
        %1339 = vmatprep.subr.bf16.mxu0 0
        %1340 = vmatpush1.bf16.msra.mxu0 %v1324
        %1341 = vmatprep.subr.bf16.mxu0 0
        %1342 = vmatpush1.bf16.msra.mxu0 0
        %1343 = vmatprep.subr.bf16.mxu0 0
        %1344 = vmatpush1.bf16.msra.mxu0 0
        %1345 = vmatprep.subr.bf16.mxu0 0
        %1346 = vmatpush1.bf16.msra.mxu0 0
        %1347 = vmatprep.subr.bf16.mxu0 0
        %1348 = vmatpush1.bf16.msra.mxu0 0
        %1349 = vmatprep.subr.bf16.mxu0 0
        %1350 = vmatpush1.bf16.msra.mxu0 0
        %1351 = vmatprep.subr.bf16.mxu0 0
        %1352 = vmatpush1.bf16.msra.mxu0 0
        %1353 = vmatprep.subr.bf16.mxu0 0
        %1354 = vmatpush1.bf16.msra.mxu0 0
        %1355 = vmatprep.subr.bf16.mxu0 0
        %1356 = vmatpush1.bf16.msra.mxu0 0
        %1357 = vmatprep.mubr.bf16.mxu0 0
        %1358 = vmatmul.mubr.bf16.gmra.mrb[0].mxu0 %v1316
        %v1359 = vpop.f32.mrb[0].mxu0
        %v1360 = vadd.f32 %v762, %v1359
        %v1361 = vpop.f32.mrb[0].mxu0
        %v1362 = vpop.f32.mrb[0].mxu0
        %v1363 = vpop.f32.mrb[0].mxu0
        %1364 = vdwg.mxu0
        %1365 = vmax.xlane.f32.xlu0 %v1360
        %v1366 = vpop.xlane.xlu0 %1365
        %v1367 = vsub.f32 %v1360, %v1366
        %v1368 = vmul.f32 %v1367, 1.442695
        %v1369 = vpow.pop %v1368
        %1370 = vadd.xlane.f32.xlu0 %v1369
        %v1371 = vpop.xlane.xlu0 %1370
        %v1372 = vrcp.pop %v1371
        %v1373 = vmul.f32 %v1369, %v1372
        %1374 = vst [vmem:[#allocation4] sm:$0xff] %v1373
        %1375 = vst [vmem:[#allocation4 + $0x8] sm:$0xff] %v1315
        %s1376 = scalar_lea.vmem %s152, 32 [#allocation5]
        %1377 = vst [vmem:[%s1376] sm:$0xff] %v1373
        %v1378 = vld [vmem:[#allocation4] sm:$0xff]
        %v1379 = vld [vmem:[#allocation4 + $0x8] sm:$0xff]
        %v1380 = vpack.c.bf16 %v1378, %v1378
        %v1381 = vpack.c.bf16 %v1379, %v1379
        %v1382 = vld [vmem:[#allocation2] sm:$0xff]
        %v1383 = vld [vmem:[#allocation2 + $0x8] sm:$0xff]
        %v1384 = vld [vmem:[#allocation2 + $0x10] sm:$0xff]
        %v1385 = vld [vmem:[#allocation2 + $0x18] sm:$0xff]
        %v1386 = vld [vmem:[#allocation2 + $0x20] sm:$0xff]
        %v1387 = vld [vmem:[#allocation2 + $0x28] sm:$0xff]
        %v1388 = vld [vmem:[#allocation2 + $0x30] sm:$0xff]
        %v1389 = vld [vmem:[#allocation2 + $0x38] sm:$0xff]
        %v1390 = vld [vmem:[#allocation2 + $0x40] sm:$0xff]
        %v1391 = vld [vmem:[#allocation2 + $0x48] sm:$0xff]
        %v1392 = vld [vmem:[#allocation2 + $0x50] sm:$0xff]
        %v1393 = vld [vmem:[#allocation2 + $0x58] sm:$0xff]
        %v1394 = vld [vmem:[#allocation2 + $0x60] sm:$0xff]
        %v1395 = vld [vmem:[#allocation2 + $0x68] sm:$0xff]
        %v1396 = vld [vmem:[#allocation2 + $0x70] sm:$0xff]
        %v1397 = vld [vmem:[#allocation2 + $0x78] sm:$0xff]
        %1398 = vmatprep.subr.bf16.mxu0 0
        %1399 = vmatpush1.bf16.msra.mxu0 %v1382
        %1400 = vmatprep.subr.bf16.mxu0 0
        %1401 = vmatpush1.bf16.msra.mxu0 %v1383
        %1402 = vmatprep.subr.bf16.mxu0 0
        %1403 = vmatpush1.bf16.msra.mxu0 %v1384
        %1404 = vmatprep.subr.bf16.mxu0 0
        %1405 = vmatpush1.bf16.msra.mxu0 %v1385
        %1406 = vmatprep.subr.bf16.mxu0 0
        %1407 = vmatpush1.bf16.msra.mxu0 %v1386
        %1408 = vmatprep.subr.bf16.mxu0 0
        %1409 = vmatpush1.bf16.msra.mxu0 %v1387
        %1410 = vmatprep.subr.bf16.mxu0 0
        %1411 = vmatpush1.bf16.msra.mxu0 %v1388
        %1412 = vmatprep.subr.bf16.mxu0 0
        %1413 = vmatpush1.bf16.msra.mxu0 %v1389
        %1414 = vmatprep.subr.bf16.mxu0 0
        %1415 = vmatpush1.bf16.msra.mxu0 %v1390
        %1416 = vmatprep.subr.bf16.mxu0 0
        %1417 = vmatpush1.bf16.msra.mxu0 %v1391
        %1418 = vmatprep.subr.bf16.mxu0 0
        %1419 = vmatpush1.bf16.msra.mxu0 %v1392
        %1420 = vmatprep.subr.bf16.mxu0 0
        %1421 = vmatpush1.bf16.msra.mxu0 %v1393
        %1422 = vmatprep.subr.bf16.mxu0 0
        %1423 = vmatpush1.bf16.msra.mxu0 %v1394
        %1424 = vmatprep.subr.bf16.mxu0 0
        %1425 = vmatpush1.bf16.msra.mxu0 %v1395
        %1426 = vmatprep.subr.bf16.mxu0 0
        %1427 = vmatpush1.bf16.msra.mxu0 %v1396
        %1428 = vmatprep.subr.bf16.mxu0 0
        %1429 = vmatpush1.bf16.msra.mxu0 %v1397
        %1430 = vmatprep.mubr.bf16.mxu0 %v1381
        %1431 = vmatmul.mubr.bf16.gmra.mrb[0].mxu0 %v1380
        %v1432 = vpop.f32.mrb[0].mxu0
        %v1433 = vadd.f32 %v755, %v1432
        %v1434 = vpop.f32.mrb[0].mxu0
        %v1435 = vpop.f32.mrb[0].mxu0
        %v1436 = vpop.f32.mrb[0].mxu0
        %1437 = vdwg.mxu0
        %v1438 = vtanh.pop %v1433
        %v1439 = vpack.c.bf16 %v1438, %v1438
        %v1440 = vld [vmem:[#allocation3] sm:$0xff]
        %v1441 = vld [vmem:[#allocation3 + $0x8] sm:$0xff]
        %v1442 = vld [vmem:[#allocation3 + $0x10] sm:$0xff]
        %v1443 = vld [vmem:[#allocation3 + $0x18] sm:$0xff]
        %v1444 = vld [vmem:[#allocation3 + $0x20] sm:$0xff]
        %v1445 = vld [vmem:[#allocation3 + $0x28] sm:$0xff]
        %v1446 = vld [vmem:[#allocation3 + $0x30] sm:$0xff]
        %v1447 = vld [vmem:[#allocation3 + $0x38] sm:$0xff]
        %1448 = vmatprep.subr.bf16.mxu0 0
        %1449 = vmatpush1.bf16.msra.mxu0 %v1440
        %1450 = vmatprep.subr.bf16.mxu0 0
        %1451 = vmatpush1.bf16.msra.mxu0 %v1441
        %1452 = vmatprep.subr.bf16.mxu0 0
        %1453 = vmatpush1.bf16.msra.mxu0 %v1442
        %1454 = vmatprep.subr.bf16.mxu0 0
        %1455 = vmatpush1.bf16.msra.mxu0 %v1443
        %1456 = vmatprep.subr.bf16.mxu0 0
        %1457 = vmatpush1.bf16.msra.mxu0 %v1444
        %1458 = vmatprep.subr.bf16.mxu0 0
        %1459 = vmatpush1.bf16.msra.mxu0 %v1445
        %1460 = vmatprep.subr.bf16.mxu0 0
        %1461 = vmatpush1.bf16.msra.mxu0 %v1446
        %1462 = vmatprep.subr.bf16.mxu0 0
        %1463 = vmatpush1.bf16.msra.mxu0 %v1447
        %1464 = vmatprep.subr.bf16.mxu0 0
        %1465 = vmatpush1.bf16.msra.mxu0 0
        %1466 = vmatprep.subr.bf16.mxu0 0
        %1467 = vmatpush1.bf16.msra.mxu0 0
        %1468 = vmatprep.subr.bf16.mxu0 0
        %1469 = vmatpush1.bf16.msra.mxu0 0
        %1470 = vmatprep.subr.bf16.mxu0 0
        %1471 = vmatpush1.bf16.msra.mxu0 0
        %1472 = vmatprep.subr.bf16.mxu0 0
        %1473 = vmatpush1.bf16.msra.mxu0 0
        %1474 = vmatprep.subr.bf16.mxu0 0
        %1475 = vmatpush1.bf16.msra.mxu0 0
        %1476 = vmatprep.subr.bf16.mxu0 0
        %1477 = vmatpush1.bf16.msra.mxu0 0
        %1478 = vmatprep.subr.bf16.mxu0 0
        %1479 = vmatpush1.bf16.msra.mxu0 0
        %1480 = vmatprep.mubr.bf16.mxu0 0
        %1481 = vmatmul.mubr.bf16.gmra.mrb[0].mxu0 %v1439
        %v1482 = vpop.f32.mrb[0].mxu0
        %v1483 = vadd.f32 %v762, %v1482
        %v1484 = vpop.f32.mrb[0].mxu0
        %v1485 = vpop.f32.mrb[0].mxu0
        %v1486 = vpop.f32.mrb[0].mxu0
        %1487 = vdwg.mxu0
        %1488 = vmax.xlane.f32.xlu0 %v1483
        %v1489 = vpop.xlane.xlu0 %1488
        %v1490 = vsub.f32 %v1483, %v1489
        %v1491 = vmul.f32 %v1490, 1.442695
        %v1492 = vpow.pop %v1491
        %1493 = vadd.xlane.f32.xlu0 %v1492
        %v1494 = vpop.xlane.xlu0 %1493
        %v1495 = vrcp.pop %v1494
        %v1496 = vmul.f32 %v1492, %v1495
        %1497 = vst [vmem:[#allocation4] sm:$0xff] %v1496
        %1498 = vst [vmem:[#allocation4 + $0x8] sm:$0xff] %v1438
        %s1499 = scalar_lea.vmem %s152, 40 [#allocation5]
        %1500 = vst [vmem:[%s1499] sm:$0xff] %v1496
        %v1501 = vld [vmem:[#allocation4] sm:$0xff]
        %v1502 = vld [vmem:[#allocation4 + $0x8] sm:$0xff]
        %v1503 = vpack.c.bf16 %v1501, %v1501
        %v1504 = vpack.c.bf16 %v1502, %v1502
        %v1505 = vld [vmem:[#allocation2] sm:$0xff]
        %v1506 = vld [vmem:[#allocation2 + $0x8] sm:$0xff]
        %v1507 = vld [vmem:[#allocation2 + $0x10] sm:$0xff]
        %v1508 = vld [vmem:[#allocation2 + $0x18] sm:$0xff]
        %v1509 = vld [vmem:[#allocation2 + $0x20] sm:$0xff]
        %v1510 = vld [vmem:[#allocation2 + $0x28] sm:$0xff]
        %v1511 = vld [vmem:[#allocation2 + $0x30] sm:$0xff]
        %v1512 = vld [vmem:[#allocation2 + $0x38] sm:$0xff]
        %v1513 = vld [vmem:[#allocation2 + $0x40] sm:$0xff]
        %v1514 = vld [vmem:[#allocation2 + $0x48] sm:$0xff]
        %v1515 = vld [vmem:[#allocation2 + $0x50] sm:$0xff]
        %v1516 = vld [vmem:[#allocation2 + $0x58] sm:$0xff]
        %v1517 = vld [vmem:[#allocation2 + $0x60] sm:$0xff]
        %v1518 = vld [vmem:[#allocation2 + $0x68] sm:$0xff]
        %v1519 = vld [vmem:[#allocation2 + $0x70] sm:$0xff]
        %v1520 = vld [vmem:[#allocation2 + $0x78] sm:$0xff]
        %1521 = vmatprep.subr.bf16.mxu0 0
        %1522 = vmatpush1.bf16.msra.mxu0 %v1505
        %1523 = vmatprep.subr.bf16.mxu0 0
        %1524 = vmatpush1.bf16.msra.mxu0 %v1506
        %1525 = vmatprep.subr.bf16.mxu0 0
        %1526 = vmatpush1.bf16.msra.mxu0 %v1507
        %1527 = vmatprep.subr.bf16.mxu0 0
        %1528 = vmatpush1.bf16.msra.mxu0 %v1508
        %1529 = vmatprep.subr.bf16.mxu0 0
        %1530 = vmatpush1.bf16.msra.mxu0 %v1509
        %1531 = vmatprep.subr.bf16.mxu0 0
        %1532 = vmatpush1.bf16.msra.mxu0 %v1510
        %1533 = vmatprep.subr.bf16.mxu0 0
        %1534 = vmatpush1.bf16.msra.mxu0 %v1511
        %1535 = vmatprep.subr.bf16.mxu0 0
        %1536 = vmatpush1.bf16.msra.mxu0 %v1512
        %1537 = vmatprep.subr.bf16.mxu0 0
        %1538 = vmatpush1.bf16.msra.mxu0 %v1513
        %1539 = vmatprep.subr.bf16.mxu0 0
        %1540 = vmatpush1.bf16.msra.mxu0 %v1514
        %1541 = vmatprep.subr.bf16.mxu0 0
        %1542 = vmatpush1.bf16.msra.mxu0 %v1515
        %1543 = vmatprep.subr.bf16.mxu0 0
        %1544 = vmatpush1.bf16.msra.mxu0 %v1516
        %1545 = vmatprep.subr.bf16.mxu0 0
        %1546 = vmatpush1.bf16.msra.mxu0 %v1517
        %1547 = vmatprep.subr.bf16.mxu0 0
        %1548 = vmatpush1.bf16.msra.mxu0 %v1518
        %1549 = vmatprep.subr.bf16.mxu0 0
        %1550 = vmatpush1.bf16.msra.mxu0 %v1519
        %1551 = vmatprep.subr.bf16.mxu0 0
        %1552 = vmatpush1.bf16.msra.mxu0 %v1520
        %1553 = vmatprep.mubr.bf16.mxu0 %v1504
        %1554 = vmatmul.mubr.bf16.gmra.mrb[0].mxu0 %v1503
        %v1555 = vpop.f32.mrb[0].mxu0
        %v1556 = vadd.f32 %v755, %v1555
        %v1557 = vpop.f32.mrb[0].mxu0
        %v1558 = vpop.f32.mrb[0].mxu0
        %v1559 = vpop.f32.mrb[0].mxu0
        %1560 = vdwg.mxu0
        %v1561 = vtanh.pop %v1556
        %v1562 = vpack.c.bf16 %v1561, %v1561
        %v1563 = vld [vmem:[#allocation3] sm:$0xff]
        %v1564 = vld [vmem:[#allocation3 + $0x8] sm:$0xff]
        %v1565 = vld [vmem:[#allocation3 + $0x10] sm:$0xff]
        %v1566 = vld [vmem:[#allocation3 + $0x18] sm:$0xff]
        %v1567 = vld [vmem:[#allocation3 + $0x20] sm:$0xff]
        %v1568 = vld [vmem:[#allocation3 + $0x28] sm:$0xff]
        %v1569 = vld [vmem:[#allocation3 + $0x30] sm:$0xff]
        %v1570 = vld [vmem:[#allocation3 + $0x38] sm:$0xff]
        %1571 = vmatprep.subr.bf16.mxu0 0
        %1572 = vmatpush1.bf16.msra.mxu0 %v1563
        %1573 = vmatprep.subr.bf16.mxu0 0
        %1574 = vmatpush1.bf16.msra.mxu0 %v1564
        %1575 = vmatprep.subr.bf16.mxu0 0
        %1576 = vmatpush1.bf16.msra.mxu0 %v1565
        %1577 = vmatprep.subr.bf16.mxu0 0
        %1578 = vmatpush1.bf16.msra.mxu0 %v1566
        %1579 = vmatprep.subr.bf16.mxu0 0
        %1580 = vmatpush1.bf16.msra.mxu0 %v1567
        %1581 = vmatprep.subr.bf16.mxu0 0
        %1582 = vmatpush1.bf16.msra.mxu0 %v1568
        %1583 = vmatprep.subr.bf16.mxu0 0
        %1584 = vmatpush1.bf16.msra.mxu0 %v1569
        %1585 = vmatprep.subr.bf16.mxu0 0
        %1586 = vmatpush1.bf16.msra.mxu0 %v1570
        %1587 = vmatprep.subr.bf16.mxu0 0
        %1588 = vmatpush1.bf16.msra.mxu0 0
        %1589 = vmatprep.subr.bf16.mxu0 0
        %1590 = vmatpush1.bf16.msra.mxu0 0
        %1591 = vmatprep.subr.bf16.mxu0 0
        %1592 = vmatpush1.bf16.msra.mxu0 0
        %1593 = vmatprep.subr.bf16.mxu0 0
        %1594 = vmatpush1.bf16.msra.mxu0 0
        %1595 = vmatprep.subr.bf16.mxu0 0
        %1596 = vmatpush1.bf16.msra.mxu0 0
        %1597 = vmatprep.subr.bf16.mxu0 0
        %1598 = vmatpush1.bf16.msra.mxu0 0
        %1599 = vmatprep.subr.bf16.mxu0 0
        %1600 = vmatpush1.bf16.msra.mxu0 0
        %1601 = vmatprep.subr.bf16.mxu0 0
        %1602 = vmatpush1.bf16.msra.mxu0 0
        %1603 = vmatprep.mubr.bf16.mxu0 0
        %1604 = vmatmul.mubr.bf16.gmra.mrb[0].mxu0 %v1562
        %v1605 = vpop.f32.mrb[0].mxu0
        %v1606 = vadd.f32 %v762, %v1605
        %v1607 = vpop.f32.mrb[0].mxu0
        %v1608 = vpop.f32.mrb[0].mxu0
        %v1609 = vpop.f32.mrb[0].mxu0
        %1610 = vdwg.mxu0
        %1611 = vmax.xlane.f32.xlu0 %v1606
        %v1612 = vpop.xlane.xlu0 %1611
        %v1613 = vsub.f32 %v1606, %v1612
        %v1614 = vmul.f32 %v1613, 1.442695
        %v1615 = vpow.pop %v1614
        %1616 = vadd.xlane.f32.xlu0 %v1615
        %v1617 = vpop.xlane.xlu0 %1616
        %v1618 = vrcp.pop %v1617
        %v1619 = vmul.f32 %v1615, %v1618
        %1620 = vst [vmem:[#allocation4] sm:$0xff] %v1619
        %1621 = vst [vmem:[#allocation4 + $0x8] sm:$0xff] %v1561
        %s1622 = scalar_lea.vmem %s152, 48 [#allocation5]
        %1623 = vst [vmem:[%s1622] sm:$0xff] %v1619
        %v1624 = vld [vmem:[#allocation4] sm:$0xff]
        %v1625 = vld [vmem:[#allocation4 + $0x8] sm:$0xff]
        %v1626 = vpack.c.bf16 %v1624, %v1624
        %v1627 = vpack.c.bf16 %v1625, %v1625
        %v1628 = vld [vmem:[#allocation2] sm:$0xff]
        %v1629 = vld [vmem:[#allocation2 + $0x8] sm:$0xff]
        %v1630 = vld [vmem:[#allocation2 + $0x10] sm:$0xff]
        %v1631 = vld [vmem:[#allocation2 + $0x18] sm:$0xff]
        %v1632 = vld [vmem:[#allocation2 + $0x20] sm:$0xff]
        %v1633 = vld [vmem:[#allocation2 + $0x28] sm:$0xff]
        %v1634 = vld [vmem:[#allocation2 + $0x30] sm:$0xff]
        %v1635 = vld [vmem:[#allocation2 + $0x38] sm:$0xff]
        %v1636 = vld [vmem:[#allocation2 + $0x40] sm:$0xff]
        %v1637 = vld [vmem:[#allocation2 + $0x48] sm:$0xff]
        %v1638 = vld [vmem:[#allocation2 + $0x50] sm:$0xff]
        %v1639 = vld [vmem:[#allocation2 + $0x58] sm:$0xff]
        %v1640 = vld [vmem:[#allocation2 + $0x60] sm:$0xff]
        %v1641 = vld [vmem:[#allocation2 + $0x68] sm:$0xff]
        %v1642 = vld [vmem:[#allocation2 + $0x70] sm:$0xff]
        %v1643 = vld [vmem:[#allocation2 + $0x78] sm:$0xff]
        %1644 = vmatprep.subr.bf16.mxu0 0
        %1645 = vmatpush1.bf16.msra.mxu0 %v1628
        %1646 = vmatprep.subr.bf16.mxu0 0
        %1647 = vmatpush1.bf16.msra.mxu0 %v1629
        %1648 = vmatprep.subr.bf16.mxu0 0
        %1649 = vmatpush1.bf16.msra.mxu0 %v1630
        %1650 = vmatprep.subr.bf16.mxu0 0
        %1651 = vmatpush1.bf16.msra.mxu0 %v1631
        %1652 = vmatprep.subr.bf16.mxu0 0
        %1653 = vmatpush1.bf16.msra.mxu0 %v1632
        %1654 = vmatprep.subr.bf16.mxu0 0
        %1655 = vmatpush1.bf16.msra.mxu0 %v1633
        %1656 = vmatprep.subr.bf16.mxu0 0
        %1657 = vmatpush1.bf16.msra.mxu0 %v1634
        %1658 = vmatprep.subr.bf16.mxu0 0
        %1659 = vmatpush1.bf16.msra.mxu0 %v1635
        %1660 = vmatprep.subr.bf16.mxu0 0
        %1661 = vmatpush1.bf16.msra.mxu0 %v1636
        %1662 = vmatprep.subr.bf16.mxu0 0
        %1663 = vmatpush1.bf16.msra.mxu0 %v1637
        %1664 = vmatprep.subr.bf16.mxu0 0
        %1665 = vmatpush1.bf16.msra.mxu0 %v1638
        %1666 = vmatprep.subr.bf16.mxu0 0
        %1667 = vmatpush1.bf16.msra.mxu0 %v1639
        %1668 = vmatprep.subr.bf16.mxu0 0
        %1669 = vmatpush1.bf16.msra.mxu0 %v1640
        %1670 = vmatprep.subr.bf16.mxu0 0
        %1671 = vmatpush1.bf16.msra.mxu0 %v1641
        %1672 = vmatprep.subr.bf16.mxu0 0
        %1673 = vmatpush1.bf16.msra.mxu0 %v1642
        %1674 = vmatprep.subr.bf16.mxu0 0
        %1675 = vmatpush1.bf16.msra.mxu0 %v1643
        %1676 = vmatprep.mubr.bf16.mxu0 %v1627
        %1677 = vmatmul.mubr.bf16.gmra.mrb[0].mxu0 %v1626
        %v1678 = vpop.f32.mrb[0].mxu0
        %v1679 = vadd.f32 %v755, %v1678
        %v1680 = vpop.f32.mrb[0].mxu0
        %v1681 = vpop.f32.mrb[0].mxu0
        %v1682 = vpop.f32.mrb[0].mxu0
        %1683 = vdwg.mxu0
        %v1684 = vtanh.pop %v1679
        %v1685 = vpack.c.bf16 %v1684, %v1684
        %v1686 = vld [vmem:[#allocation3] sm:$0xff]
        %v1687 = vld [vmem:[#allocation3 + $0x8] sm:$0xff]
        %v1688 = vld [vmem:[#allocation3 + $0x10] sm:$0xff]
        %v1689 = vld [vmem:[#allocation3 + $0x18] sm:$0xff]
        %v1690 = vld [vmem:[#allocation3 + $0x20] sm:$0xff]
        %v1691 = vld [vmem:[#allocation3 + $0x28] sm:$0xff]
        %v1692 = vld [vmem:[#allocation3 + $0x30] sm:$0xff]
        %v1693 = vld [vmem:[#allocation3 + $0x38] sm:$0xff]
        %1694 = vmatprep.subr.bf16.mxu0 0
        %1695 = vmatpush1.bf16.msra.mxu0 %v1686
        %1696 = vmatprep.subr.bf16.mxu0 0
        %1697 = vmatpush1.bf16.msra.mxu0 %v1687
        %1698 = vmatprep.subr.bf16.mxu0 0
        %1699 = vmatpush1.bf16.msra.mxu0 %v1688
        %1700 = vmatprep.subr.bf16.mxu0 0
        %1701 = vmatpush1.bf16.msra.mxu0 %v1689
        %1702 = vmatprep.subr.bf16.mxu0 0
        %1703 = vmatpush1.bf16.msra.mxu0 %v1690
        %1704 = vmatprep.subr.bf16.mxu0 0
        %1705 = vmatpush1.bf16.msra.mxu0 %v1691
        %1706 = vmatprep.subr.bf16.mxu0 0
        %1707 = vmatpush1.bf16.msra.mxu0 %v1692
        %1708 = vmatprep.subr.bf16.mxu0 0
        %1709 = vmatpush1.bf16.msra.mxu0 %v1693
        %1710 = vmatprep.subr.bf16.mxu0 0
        %1711 = vmatpush1.bf16.msra.mxu0 0
        %1712 = vmatprep.subr.bf16.mxu0 0
        %1713 = vmatpush1.bf16.msra.mxu0 0
        %1714 = vmatprep.subr.bf16.mxu0 0
        %1715 = vmatpush1.bf16.msra.mxu0 0
        %1716 = vmatprep.subr.bf16.mxu0 0
        %1717 = vmatpush1.bf16.msra.mxu0 0
        %1718 = vmatprep.subr.bf16.mxu0 0
        %1719 = vmatpush1.bf16.msra.mxu0 0
        %1720 = vmatprep.subr.bf16.mxu0 0
        %1721 = vmatpush1.bf16.msra.mxu0 0
        %1722 = vmatprep.subr.bf16.mxu0 0
        %1723 = vmatpush1.bf16.msra.mxu0 0
        %1724 = vmatprep.subr.bf16.mxu0 0
        %1725 = vmatpush1.bf16.msra.mxu0 0
        %1726 = vmatprep.mubr.bf16.mxu0 0
        %1727 = vmatmul.mubr.bf16.gmra.mrb[0].mxu0 %v1685
        %v1728 = vpop.f32.mrb[0].mxu0
        %v1729 = vadd.f32 %v762, %v1728
        %v1730 = vpop.f32.mrb[0].mxu0
        %v1731 = vpop.f32.mrb[0].mxu0
        %v1732 = vpop.f32.mrb[0].mxu0
        %1733 = vdwg.mxu0
        %1734 = vmax.xlane.f32.xlu0 %v1729
        %v1735 = vpop.xlane.xlu0 %1734
        %v1736 = vsub.f32 %v1729, %v1735
        %v1737 = vmul.f32 %v1736, 1.442695
        %v1738 = vpow.pop %v1737
        %1739 = vadd.xlane.f32.xlu0 %v1738
        %v1740 = vpop.xlane.xlu0 %1739
        %v1741 = vrcp.pop %v1740
        %v1742 = vmul.f32 %v1738, %v1741
        %1743 = vst [vmem:[#allocation4] sm:$0xff] %v1742
        %1744 = vst [vmem:[#allocation4 + $0x8] sm:$0xff] %v1684
        %s1745 = scalar_lea.vmem %s152, 56 [#allocation5]
        %1746 = vst [vmem:[%s1745] sm:$0xff] %v1742
        %s1747 = sand.u32 %s92, 1
        %s1748 = scalar_lea.sflag [#allocation6], %s1747
        %s1749 = sand.u32 %s92, 1
        %s1750 = smul.addr %s1749, 64
        %s1751 = scalar_lea.vmem [#allocation5], %s1750
        // Predicated region
        $region58: #{tpu_custom_call.1} parent=31 // pred_check
          %p1752 = pneg %p102
        $region59: #{tpu_custom_call.1} parent=31 // pred_check_branch
          %1754 = sbr.rel (%p1752) target = $region61
        $region60: #{tpu_custom_call.1} parent=31 // pred_region
          %s1755 = smul.u32 8, %s21
          %s1757 = ssub.s32 1024, 1024
          %1758 = vsyncadd %s1748, %s1757
          %s1759 = smul.addr %s1755, 128
          %s1760 = scalar_lea.hbm %s7, %s1759
          %s1761 = sshll.u32 %s1751, 4
          %s1762 = int_to_ptr.vmem [resolvable:$true] %s1761
          %1767 = dma.vmem_to_hbm [thread:$0]  %s1762, 1024, %s1760, %s1748, 128, 128, 8
        $region61: #{tpu_custom_call.1} parent=31 // pred_fallthru
          _
      $region32: #{tpu_custom_call.1} parent=5 // pred_fallthru
        _
      %p1768 = scmp.le.s32.totalorder 2, %s16
      // Predicated region
      $region62: #{tpu_custom_call.1} parent=5 // pred_check
        %p1769 = pneg %p1768
      $region63: #{tpu_custom_call.1} parent=5 // pred_check_branch
        %1771 = sbr.rel (%p1769) target = $region65
      $region64: #{tpu_custom_call.1} parent=5 // pred_region
        %s1772 = ssub.s32 %s16, 2
        // Predicated region
        $region66: #{tpu_custom_call.1} parent=64 // pred_check
          %p1773 = pneg %p108
        $region67: #{tpu_custom_call.1} parent=64 // pred_check_branch
          %1775 = sbr.rel (%p1773) target = $region69
        $region68: #{tpu_custom_call.1} parent=64 // pred_region
          %s1776 = sand.u32 %s93, 1
          %s1777 = scalar_lea.sflag [#allocation6], %s1776
          %s1778 = sand.u32 %s93, 1
          %s1779 = smul.addr %s1778, 64
          %s1780 = scalar_lea.vmem [#allocation5], %s1779
          %1781 = dma.done %s1777, 1024
        $region69: #{tpu_custom_call.1} parent=64 // pred_fallthru
          _
      $region65: #{tpu_custom_call.1} parent=5 // pred_fallthru
        _
    $region6: #{tpu_custom_call.1} parent=1 // loop_footer
      %s20 = sadd.s32 1, %s16
    $region7: #{tpu_custom_call.1} parent=1 // loop_footer_branch
      %15 = sbr.rel target = $region3
    $region8: #{tpu_custom_call.1} parent=1 // loop_exit
      _
    %1782 = vsyncpa [#allocation6], 1
    %s1783 = scalar_lea.sflag [#allocation6], 1
    %1784 = vsyncpa %s1783, 1

</llo_original>
